<compile_context>
chip_gen: v7x
topology: tpu7x:2x2x1
jax: 0.10.0
libtpu: 0.0.40
codegen_flags: <defaults>
</compile_context>

<pallas_src>
import functools
import math

import jax
import jax.numpy as jnp
from jax.experimental import pallas as pl
from jax.experimental.pallas import tpu as pltpu


def _round_up(x, m):
    return ((x + m - 1) // m) * m


# --------------------------------------------------------------------------
# Kernel 1: projection GEMM.  One activation read, one dot per packed weight,
# multiple lane-dense outputs (bf16 operands, f32 accumulation, K kept whole).
# --------------------------------------------------------------------------
def _proj_kernel(*refs, n_w):
    x = refs[0][...]                                    # (tm, K) bf16, read once
    w_refs = refs[1:1 + n_w]
    o_refs = refs[1 + n_w:]
    for w_ref, o_ref in zip(w_refs, o_refs):
        o_ref[...] = jnp.dot(x, w_ref[...],
                             preferred_element_type=jnp.float32).astype(o_ref.dtype)


def fused_projection(x, weights, out_dtype=jnp.bfloat16):
    """x: (M, K); weights: list of (K, N_i) bf16.  Returns tuple of (M, N_i)."""
    M, K = x.shape
    assert K % 128 == 0, "d_model must be a multiple of 128"
    weights = [w.astype(jnp.bfloat16) for w in weights]
    for w in weights:
        assert w.shape[0] == K and w.shape[1] % 128 == 0
    x = x.astype(jnp.bfloat16)

    # Row tile: pad M up to a tile multiple (never fall back to one huge block).
    tm = 256 if M >= 256 else _round_up(M, 8)
    Mp = _round_up(M, tm)
    if Mp != M:
        x = jnp.pad(x, ((0, Mp - M), (0, 0)))

    n_w = len(weights)
    total_n = sum(w.shape[1] for w in weights)
    out_shape = tuple(jax.ShapeDtypeStruct((Mp, w.shape[1]), out_dtype)
                      for w in weights)
    in_specs = [pl.BlockSpec((tm, K), lambda i: (i, 0))]
    in_specs += [pl.BlockSpec((K, w.shape[1]), lambda i: (0, 0)) for w in weights]
    out_specs = tuple(pl.BlockSpec((tm, w.shape[1]), lambda i: (i, 0))
                      for w in weights)

    outs = pl.pallas_call(
        functools.partial(_proj_kernel, n_w=n_w),
        out_shape=out_shape,
        grid=(Mp // tm,),
        in_specs=in_specs,
        out_specs=out_specs,
        compiler_params=pltpu.CompilerParams(dimension_semantics=("parallel",)),
        cost_estimate=pl.CostEstimate(
            flops=2 * Mp * total_n * K,
            transcendentals=0,
            bytes_accessed=2 * (Mp * K + K * total_n + Mp * total_n)),
    )(x, *weights)
    return tuple(o[:M] for o in outs)


# --------------------------------------------------------------------------
# Kernel 2: fused attention + output projection + residual + LayerNorm.
# Per grid step: one query tile (tq rows) of one batch, whole K/V resident.
# --------------------------------------------------------------------------
def _attn_fc_ln_kernel(q_ref, kv_ref, wfc_ref, res_ref, g_ref, b_ref, o_ref,
                       ctx_ref, *, n_heads, d_k, d_v, scale, eps):
    h_k = n_heads * d_k
    for h in range(n_heads):                            # static unrolled head loop
        # Ref-level static slices: only the lanes this head needs are loaded.
        qh = q_ref[:, pl.ds(h * d_k, d_k)] * scale      # scale folded into q (bf16)
        kh = kv_ref[:, pl.ds(h * d_k, d_k)]
        vh = kv_ref[:, pl.ds(h_k + h * d_v, d_v)]
        s = jax.lax.dot_general(qh, kh, (((1,), (1,)), ((), ())),
                                preferred_element_type=jnp.float32)   # (tq, Lk)
        m = jnp.max(s, axis=-1, keepdims=True)
        p = jnp.exp(s - m)                              # un-normalized probs
        denom = jnp.sum(p, axis=-1, keepdims=True)
        ctx_h = jnp.dot(p.astype(vh.dtype), vh,
                        preferred_element_type=jnp.float32)           # (tq, d_v)
        # Normalize AFTER PV (L*d_v work) with an EUP-slot reciprocal.
        ctx_h = ctx_h * pl.reciprocal(denom, approx=True)
        ctx_ref[:, pl.ds(h * d_v, d_v)] = ctx_h.astype(ctx_ref.dtype)

    # fc GEMM + residual + LayerNorm epilogue (all in VMEM, no ctx HBM trip).
    y = jnp.dot(ctx_ref[...], wfc_ref[...], preferred_element_type=jnp.float32)
    xr = y + res_ref[...]
    mu = jnp.mean(xr, axis=-1, keepdims=True)
    var = jnp.mean(jnp.square(xr - mu), axis=-1, keepdims=True)
    xn = (xr - mu) * jax.lax.rsqrt(var + eps)
    o_ref[...] = (xn * g_ref[...] + b_ref[...]).astype(o_ref.dtype)


def fused_attention_fc_ln(q, kv, w_fc, residual, gamma, beta, *,
                          n_heads, d_k, d_v, eps=1e-5):
    """q: (B, Lq, H*d_k) bf16; kv: (B, Lk, H*(d_k+d_v)) bf16 packed [K | V];
    w_fc: (H*d_v, d_model) bf16; residual: (B, Lq, d_model).
    Returns LayerNorm(ctx @ w_fc + residual): (B, Lq, d_model) f32."""
    B, Lq, Cq = q.shape
    _, Lk, Ckv = kv.shape
    d_model = w_fc.shape[1]
    assert Cq == n_heads * d_k and Ckv == n_heads * (d_k + d_v)
    assert w_fc.shape[0] == n_heads * d_v
    assert d_model % 128 == 0
    scale = 1.0 / math.sqrt(d_k)

    # Query-row tiling: caps VMEM at O(tq*Lk) and feeds both v7x TCs.
    if Lq >= 256 and Lq % 128 == 0:
        tq = 128
    else:
        tq = Lq
    grid = (B, Lq // tq)

    # Raise scoped-VMEM only when the estimated live set needs it.
    vmem_est = (2 * (tq * Cq * 2 + Lk * Ckv * 2 + n_heads * d_v * d_model * 2
                     + 2 * tq * d_model * 4 + 2 * d_model * 4)
                + tq * n_heads * d_v * 2 + 3 * tq * Lk * 4 + (1 << 20))
    cp = dict(dimension_semantics=("parallel", "parallel"))
    if vmem_est > 32 * 1024 * 1024:
        cp["vmem_limit_bytes"] = min(vmem_est, 64 * 1024 * 1024)

    flops = B * (2 * Lq * Lk * n_heads * (d_k + d_v)
                 + 2 * Lq * n_heads * d_v * d_model)
    out = pl.pallas_call(
        functools.partial(_attn_fc_ln_kernel, n_heads=n_heads, d_k=d_k,
                          d_v=d_v, scale=scale, eps=eps),
        out_shape=jax.ShapeDtypeStruct((B, Lq, d_model), jnp.float32),
        grid=grid,
        in_specs=[
            pl.BlockSpec((None, tq, Cq), lambda b, i: (b, i, 0)),
            pl.BlockSpec((None, Lk, Ckv), lambda b, i: (b, 0, 0)),
            pl.BlockSpec((n_heads * d_v, d_model), lambda b, i: (0, 0)),
            pl.BlockSpec((None, tq, d_model), lambda b, i: (b, i, 0)),
            pl.BlockSpec((1, d_model), lambda b, i: (0, 0)),
            pl.BlockSpec((1, d_model), lambda b, i: (0, 0)),
        ],
        out_specs=pl.BlockSpec((None, tq, d_model), lambda b, i: (b, i, 0)),
        scratch_shapes=[pltpu.VMEM((tq, n_heads * d_v), jnp.bfloat16)],
        compiler_params=pltpu.CompilerParams(**cp),
        cost_estimate=pl.CostEstimate(
            flops=flops,
            transcendentals=B * n_heads * Lq * Lk,
            bytes_accessed=(B * Lq * Cq * 2 + B * (Lq // tq) * Lk * Ckv * 2
                            + n_heads * d_v * d_model * 2
                            + 2 * B * Lq * d_model * 4)),
    )(q.astype(jnp.bfloat16), kv.astype(jnp.bfloat16),
      w_fc.astype(jnp.bfloat16), residual.astype(jnp.float32), gamma, beta)
    return out


# --------------------------------------------------------------------------
# Parameter prep (done once, outside jit) + forward pass
# --------------------------------------------------------------------------
def prepare_params(raw):
    """Pre-pack K|V weight and pre-cast GEMM weights to bf16 at init time."""
    d_model = raw['W_Q'].shape[0]
    return dict(
        w_q=raw['W_Q'].astype(jnp.bfloat16),
        w_k=raw['W_K'].astype(jnp.bfloat16),
        w_v=raw['W_V'].astype(jnp.bfloat16),
        w_kv=jnp.concatenate([raw['W_K'], raw['W_V']], axis=1).astype(jnp.bfloat16),
        w_fc=raw['fc'].astype(jnp.bfloat16),
        ln_g=raw['ln_g'].astype(jnp.float32).reshape(1, d_model),
        ln_b=raw['ln_b'].astype(jnp.float32).reshape(1, d_model),
    )


def multi_head_attention(params, input_Q, input_K=None, input_V=None,
                         n_heads=8, d_k=64, d_v=64, eps=1e-5):
    """Mirrors MultiHeadAttention.forward.  Weights stored (in, out): y = x @ W.
    input_K / input_V = None -> self-attention (single fused QKV projection)."""
    if input_K is None:
        input_K = input_Q
    if input_V is None:
        input_V = input_K
    B, Lq, d_model = input_Q.shape
    Lk = input_K.shape[1]
    xq = input_Q.reshape(B * Lq, d_model)

    if input_K is input_Q and input_V is input_Q:
        # Self-attention: one GEMM pass over x produces both packed outputs.
        q_flat, kv_flat = fused_projection(xq, [params['w_q'], params['w_kv']])
    elif input_K is input_V:
        (q_flat,) = fused_projection(xq, [params['w_q']])
        (kv_flat,) = fused_projection(input_K.reshape(B * Lk, d_model),
                                      [params['w_kv']])
    else:
        (q_flat,) = fused_projection(xq, [params['w_q']])
        (k_flat,) = fused_projection(input_K.reshape(B * Lk, d_model),
                                     [params['w_k']])
        (v_flat,) = fused_projection(input_V.reshape(B * Lk, d_model),
                                     [params['w_v']])
        # TODO(synk): this concat is one extra HBM pass over K/V; avoidable by
        # emitting K and V into one packed output when they share a source.
        kv_flat = jnp.concatenate([k_flat, v_flat], axis=-1)

    q = q_flat.reshape(B, Lq, n_heads * d_k)
    kv = kv_flat.reshape(B, Lk, n_heads * (d_k + d_v))
    out = fused_attention_fc_ln(q, kv, params['w_fc'], input_Q,
                                params['ln_g'], params['ln_b'],
                                n_heads=n_heads, d_k=d_k, d_v=d_v, eps=eps)
    return out


# --------------------------------------------------------------------------
# Pure-JAX reference (mirrors the PyTorch forward exactly, f32)
# --------------------------------------------------------------------------
def multi_head_attention_ref(raw, x, n_heads=8, d_k=64, d_v=64, eps=1e-5):
    B, L, d_model = x.shape
    Q = (x @ raw['W_Q']).reshape(B, L, n_heads, d_k).transpose(0, 2, 1, 3)
    K = (x @ raw['W_K']).reshape(B, L, n_heads, d_k).transpose(0, 2, 1, 3)
    V = (x @ raw['W_V']).reshape(B, L, n_heads, d_v).transpose(0, 2, 1, 3)
    s = jnp.einsum('bhqd,bhkd->bhqk', Q, K) / math.sqrt(d_k)
    attn = jax.nn.softmax(s, axis=-1)
    ctx = jnp.einsum('bhqk,bhkd->bhqd', attn, V)
    ctx = ctx.transpose(0, 2, 1, 3).reshape(B, L, n_heads * d_v)
    out = ctx @ raw['fc'] + x
    mu = out.mean(-1, keepdims=True)
    var = ((out - mu) ** 2).mean(-1, keepdims=True)
    return (out - mu) / jnp.sqrt(var + eps) * raw['ln_g'] + raw['ln_b']


if __name__ == "__main__":
    key = jax.random.PRNGKey(0)
    d_model, n_heads, d_k, d_v = 512, 8, 64, 64
    B, L = 2, 16

    kx, kq, kk, kv, kf, kg, kb = jax.random.split(key, 7)
    raw = dict(
        W_Q=jax.random.normal(kq, (d_model, n_heads * d_k), jnp.float32)
        / math.sqrt(d_model),
        W_K=jax.random.normal(kk, (d_model, n_heads * d_k), jnp.float32)
        / math.sqrt(d_model),
        W_V=jax.random.normal(kv, (d_model, n_heads * d_v), jnp.float32)
        / math.sqrt(d_model),
        fc=jax.random.normal(kf, (n_heads * d_v, d_model), jnp.float32)
        / math.sqrt(n_heads * d_v),
        ln_g=1.0 + 0.1 * jax.random.normal(kg, (d_model,), jnp.float32),
        ln_b=0.1 * jax.random.normal(kb, (d_model,), jnp.float32),
    )
    params = prepare_params(raw)          # packing/casting happens once, here
    x = jax.random.normal(kx, (B, L, d_model), jnp.float32)

    fwd = jax.jit(functools.partial(multi_head_attention,
                                    n_heads=n_heads, d_k=d_k, d_v=d_v))
    out = fwd(params, x)                  # self-attention (fused QKV path)
    out = jax.block_until_ready(out)

    assert out.shape == (B, L, d_model)
    assert bool(jnp.all(jnp.isfinite(out)))

    ref = multi_head_attention_ref(raw, x, n_heads, d_k, d_v)
    err = float(jnp.max(jnp.abs(out - ref)))
    assert err < 0.2, f"max |err| vs f32 reference = {err}"   # bf16 operand tolerance
    print("KERNEL_OK")
</pallas_src>

<mosaic_0001>
module attributes {stable_mosaic.version = 11 : i64} {
  func.func @_proj_kernel(%arg0: i32, %arg1: memref<32x512xbf16, #tpu.memory_space<vmem>>, %arg2: memref<512x512xbf16, #tpu.memory_space<vmem>>, %arg3: memref<512x1024xbf16, #tpu.memory_space<vmem>>, %arg4: memref<32x512xbf16, #tpu.memory_space<vmem>>, %arg5: memref<32x1024xbf16, #tpu.memory_space<vmem>>) attributes {dimension_semantics = [#tpu.dimension_semantics<parallel>], iteration_bounds = array<i64: 1>, scalar_prefetch = 0 : i64, scratch_operands = 0 : i64, tpu.core_type = #tpu.core_type<tc>, window_params = [{transform_indices = @transform_0, window_bounds = array<i64: 32, 512>}, {pipeline_mode = #tpu.pipeline_mode<synchronous>, transform_indices = @transform_1, window_bounds = array<i64: 512, 512>}, {pipeline_mode = #tpu.pipeline_mode<synchronous>, transform_indices = @transform_2, window_bounds = array<i64: 512, 1024>}, {transform_indices = @transform_3, window_bounds = array<i64: 32, 512>}, {transform_indices = @transform_4, window_bounds = array<i64: 32, 1024>}]} {
    %c0 = arith.constant 0 : index
    %c0_0 = arith.constant 0 : index
    %0 = vector.load %arg1[%c0, %c0_0] : memref<32x512xbf16, #tpu.memory_space<vmem>>, vector<32x512xbf16>
    %c0_1 = arith.constant 0 : index
    %c0_2 = arith.constant 0 : index
    %1 = vector.load %arg2[%c0_1, %c0_2] : memref<512x512xbf16, #tpu.memory_space<vmem>>, vector<512x512xbf16>
    %cst = arith.constant dense<0.000000e+00> : vector<32x512xf32>
    %2 = tpu.matmul %0, %1, %cst {dimension_numbers = #tpu.dot_dimension_numbers<[1], [0], [0], [1], [0, 0, 1, 1], [], []>} : vector<32x512xbf16>, vector<512x512xbf16>, vector<32x512xf32> -> vector<32x512xf32>
    %3 = arith.truncf %2 : vector<32x512xf32> to vector<32x512xbf16>
    %c0_3 = arith.constant 0 : index
    %c0_4 = arith.constant 0 : index
    %4 = vector.load %arg4[%c0_3, %c0_4] : memref<32x512xbf16, #tpu.memory_space<vmem>>, vector<32x512xbf16>
    tpu.vector_store %arg4[%c0_3, %c0_4], %3 {strides = array<i32>} : memref<32x512xbf16, #tpu.memory_space<vmem>>, vector<32x512xbf16>,
    %c0_5 = arith.constant 0 : index
    %c0_6 = arith.constant 0 : index
    %5 = vector.load %arg3[%c0_5, %c0_6] : memref<512x1024xbf16, #tpu.memory_space<vmem>>, vector<512x1024xbf16>
    %cst_7 = arith.constant dense<0.000000e+00> : vector<32x1024xf32>
    %6 = tpu.matmul %0, %5, %cst_7 {dimension_numbers = #tpu.dot_dimension_numbers<[1], [0], [0], [1], [0, 0, 1, 1], [], []>} : vector<32x512xbf16>, vector<512x1024xbf16>, vector<32x1024xf32> -> vector<32x1024xf32>
    %7 = arith.truncf %6 : vector<32x1024xf32> to vector<32x1024xbf16>
    %c0_8 = arith.constant 0 : index
    %c0_9 = arith.constant 0 : index
    %8 = vector.load %arg5[%c0_8, %c0_9] : memref<32x1024xbf16, #tpu.memory_space<vmem>>, vector<32x1024xbf16>
    tpu.vector_store %arg5[%c0_8, %c0_9], %7 {strides = array<i32>} : memref<32x1024xbf16, #tpu.memory_space<vmem>>, vector<32x1024xbf16>,
    return
  }
  func.func @transform_0(%arg0: i32) -> (i32, i32) {
    %c0_i32 = arith.constant 0 : i32
    %c0_i32_0 = arith.constant 0 : i32
    return %arg0, %c0_i32 : i32, i32
  }
  func.func @transform_1(%arg0: i32) -> (i32, i32) {
    %c0_i32 = arith.constant 0 : i32
    %c0_i32_0 = arith.constant 0 : i32
    %c0_i32_1 = arith.constant 0 : i32
    return %c0_i32, %c0_i32_0 : i32, i32
  }
  func.func @transform_2(%arg0: i32) -> (i32, i32) {
    %c0_i32 = arith.constant 0 : i32
    %c0_i32_0 = arith.constant 0 : i32
    %c0_i32_1 = arith.constant 0 : i32
    return %c0_i32, %c0_i32_0 : i32, i32
  }
  func.func @transform_3(%arg0: i32) -> (i32, i32) {
    %c0_i32 = arith.constant 0 : i32
    %c0_i32_0 = arith.constant 0 : i32
    return %arg0, %c0_i32 : i32, i32
  }
  func.func @transform_4(%arg0: i32) -> (i32, i32) {
    %c0_i32 = arith.constant 0 : i32
    %c0_i32_0 = arith.constant 0 : i32
    return %arg0, %c0_i32 : i32, i32
  }
}

module attributes {stable_mosaic.version = 11 : i64} {
  func.func @_attn_fc_ln_kernel(%arg0: i32, %arg1: i32, %arg2: memref<1x16x512xbf16, #tpu.memory_space<vmem>>, %arg3: memref<1x16x1024xbf16, #tpu.memory_space<vmem>>, %arg4: memref<512x512xbf16, #tpu.memory_space<vmem>>, %arg5: memref<1x16x512xf32, #tpu.memory_space<vmem>>, %arg6: memref<1x512xf32, #tpu.memory_space<vmem>>, %arg7: memref<1x512xf32, #tpu.memory_space<vmem>>, %arg8: memref<1x16x512xf32, #tpu.memory_space<vmem>>, %arg9: memref<16x512xbf16, #tpu.memory_space<vmem>>) attributes {dimension_semantics = [#tpu.dimension_semantics<parallel>, #tpu.dimension_semantics<parallel>], iteration_bounds = array<i64: 2, 1>, scalar_prefetch = 0 : i64, scratch_operands = 1 : i64, tpu.core_type = #tpu.core_type<tc>, window_params = [{transform_indices = @transform_0, window_bounds = array<i64: 1, 16, 512>}, {transform_indices = @transform_1, window_bounds = array<i64: 1, 16, 1024>}, {pipeline_mode = #tpu.pipeline_mode<synchronous>, transform_indices = @transform_2, window_bounds = array<i64: 512, 512>}, {transform_indices = @transform_3, window_bounds = array<i64: 1, 16, 512>}, {pipeline_mode = #tpu.pipeline_mode<synchronous>, transform_indices = @transform_4, window_bounds = array<i64: 1, 512>}, {pipeline_mode = #tpu.pipeline_mode<synchronous>, transform_indices = @transform_5, window_bounds = array<i64: 1, 512>}, {transform_indices = @transform_6, window_bounds = array<i64: 1, 16, 512>}]} {
    %c0 = arith.constant 0 : index
    %c0_0 = arith.constant 0 : index
    %c0_1 = arith.constant 0 : index
    %0 = vector.load %arg2[%c0, %c0_0, %c0_1] : memref<1x16x512xbf16, #tpu.memory_space<vmem>>, vector<1x16x64xbf16>
    %1 = vector.shape_cast %0 : vector<1x16x64xbf16> to vector<16x64xbf16>
    %cst = arith.constant 1.250000e-01 : bf16
    %2 = vector.broadcast %cst : bf16 to vector<16x64xbf16>
    %3 = arith.mulf %1, %2 : vector<16x64xbf16>
    %c0_2 = arith.constant 0 : index
    %c0_3 = arith.constant 0 : index
    %c0_4 = arith.constant 0 : index
    %4 = vector.load %arg3[%c0_2, %c0_3, %c0_4] : memref<1x16x1024xbf16, #tpu.memory_space<vmem>>, vector<1x16x64xbf16>
    %5 = vector.shape_cast %4 : vector<1x16x64xbf16> to vector<16x64xbf16>
    %c0_5 = arith.constant 0 : index
    %c0_6 = arith.constant 0 : index
    %c512 = arith.constant 512 : index
    %6 = vector.load %arg3[%c0_5, %c0_6, %c512] : memref<1x16x1024xbf16, #tpu.memory_space<vmem>>, vector<1x16x64xbf16>
    %7 = vector.shape_cast %6 : vector<1x16x64xbf16> to vector<16x64xbf16>
    %cst_7 = arith.constant dense<0.000000e+00> : vector<16x16xf32>
    %8 = tpu.matmul %3, %5, %cst_7 {dimension_numbers = #tpu.dot_dimension_numbers<[1], [1], [0], [0], [0, 0, 1, 0], [], []>} : vector<16x64xbf16>, vector<16x64xbf16>, vector<16x16xf32> -> vector<16x16xf32>
    %cst_8 = arith.constant dense<0xFF800000> : vector<16xf32>
    %9 = vector.multi_reduction <maximumf>, %8, %cst_8 [1] : vector<16x16xf32> to vector<16xf32>
    %10 = vector.shape_cast %9 : vector<16xf32> to vector<16x1xf32>
    %11 = vector.broadcast %10 : vector<16x1xf32> to vector<16x16xf32>
    %12 = arith.subf %8, %11 : vector<16x16xf32>
    %13 = math.exp %12 : vector<16x16xf32>
    %cst_9 = arith.constant dense<0.000000e+00> : vector<16xf32>
    %14 = vector.multi_reduction <add>, %13, %cst_9 [1] : vector<16x16xf32> to vector<16xf32>
    %15 = vector.shape_cast %14 : vector<16xf32> to vector<16x1xf32>
    %16 = arith.truncf %13 : vector<16x16xf32> to vector<16x16xbf16>
    %cst_10 = arith.constant dense<0.000000e+00> : vector<16x64xf32>
    %17 = tpu.matmul %16, %7, %cst_10 {dimension_numbers = #tpu.dot_dimension_numbers<[1], [0], [0], [1], [0, 0, 1, 1], [], []>} : vector<16x16xbf16>, vector<16x64xbf16>, vector<16x64xf32> -> vector<16x64xf32>
    %18 = tpu.reciprocal %15 {approx = true} : vector<16x1xf32> -> vector<16x1xf32>
    %19 = vector.broadcast %18 : vector<16x1xf32> to vector<16x64xf32>
    %20 = arith.mulf %17, %19 : vector<16x64xf32>
    %21 = arith.truncf %20 : vector<16x64xf32> to vector<16x64xbf16>
    %c0_11 = arith.constant 0 : index
    %c0_12 = arith.constant 0 : index
    %22 = vector.load %arg9[%c0_11, %c0_12] : memref<16x512xbf16, #tpu.memory_space<vmem>>, vector<16x64xbf16>
    tpu.vector_store %arg9[%c0_11, %c0_12], %21 {strides = array<i32>} : memref<16x512xbf16, #tpu.memory_space<vmem>>, vector<16x64xbf16>,
    %c0_13 = arith.constant 0 : index
    %c0_14 = arith.constant 0 : index
    %c64 = arith.constant 64 : index
    %23 = vector.load %arg2[%c0_13, %c0_14, %c64] : memref<1x16x512xbf16, #tpu.memory_space<vmem>>, vector<1x16x64xbf16>
    %24 = vector.shape_cast %23 : vector<1x16x64xbf16> to vector<16x64xbf16>
    %cst_15 = arith.constant 1.250000e-01 : bf16
    %25 = vector.broadcast %cst_15 : bf16 to vector<16x64xbf16>
    %26 = arith.mulf %24, %25 : vector<16x64xbf16>
    %c0_16 = arith.constant 0 : index
    %c0_17 = arith.constant 0 : index
    %c64_18 = arith.constant 64 : index
    %27 = vector.load %arg3[%c0_16, %c0_17, %c64_18] : memref<1x16x1024xbf16, #tpu.memory_space<vmem>>, vector<1x16x64xbf16>
    %28 = vector.shape_cast %27 : vector<1x16x64xbf16> to vector<16x64xbf16>
    %c0_19 = arith.constant 0 : index
    %c0_20 = arith.constant 0 : index
    %c576 = arith.constant 576 : index
    %29 = vector.load %arg3[%c0_19, %c0_20, %c576] : memref<1x16x1024xbf16, #tpu.memory_space<vmem>>, vector<1x16x64xbf16>
    %30 = vector.shape_cast %29 : vector<1x16x64xbf16> to vector<16x64xbf16>
    %cst_21 = arith.constant dense<0.000000e+00> : vector<16x16xf32>
    %31 = tpu.matmul %26, %28, %cst_21 {dimension_numbers = #tpu.dot_dimension_numbers<[1], [1], [0], [0], [0, 0, 1, 0], [], []>} : vector<16x64xbf16>, vector<16x64xbf16>, vector<16x16xf32> -> vector<16x16xf32>
    %cst_22 = arith.constant dense<0xFF800000> : vector<16xf32>
    %32 = vector.multi_reduction <maximumf>, %31, %cst_22 [1] : vector<16x16xf32> to vector<16xf32>
    %33 = vector.shape_cast %32 : vector<16xf32> to vector<16x1xf32>
    %34 = vector.broadcast %33 : vector<16x1xf32> to vector<16x16xf32>
    %35 = arith.subf %31, %34 : vector<16x16xf32>
    %36 = math.exp %35 : vector<16x16xf32>
    %cst_23 = arith.constant dense<0.000000e+00> : vector<16xf32>
    %37 = vector.multi_reduction <add>, %36, %cst_23 [1] : vector<16x16xf32> to vector<16xf32>
    %38 = vector.shape_cast %37 : vector<16xf32> to vector<16x1xf32>
    %39 = arith.truncf %36 : vector<16x16xf32> to vector<16x16xbf16>
    %cst_24 = arith.constant dense<0.000000e+00> : vector<16x64xf32>
    %40 = tpu.matmul %39, %30, %cst_24 {dimension_numbers = #tpu.dot_dimension_numbers<[1], [0], [0], [1], [0, 0, 1, 1], [], []>} : vector<16x16xbf16>, vector<16x64xbf16>, vector<16x64xf32> -> vector<16x64xf32>
    %41 = tpu.reciprocal %38 {approx = true} : vector<16x1xf32> -> vector<16x1xf32>
    %42 = vector.broadcast %41 : vector<16x1xf32> to vector<16x64xf32>
    %43 = arith.mulf %40, %42 : vector<16x64xf32>
    %44 = arith.truncf %43 : vector<16x64xf32> to vector<16x64xbf16>
    %c0_25 = arith.constant 0 : index
    %c64_26 = arith.constant 64 : index
    %45 = vector.load %arg9[%c0_25, %c64_26] : memref<16x512xbf16, #tpu.memory_space<vmem>>, vector<16x64xbf16>
    tpu.vector_store %arg9[%c0_25, %c64_26], %44 {strides = array<i32>} : memref<16x512xbf16, #tpu.memory_space<vmem>>, vector<16x64xbf16>,
    %c0_27 = arith.constant 0 : index
    %c0_28 = arith.constant 0 : index
    %c128 = arith.constant 128 : index
    %46 = vector.load %arg2[%c0_27, %c0_28, %c128] : memref<1x16x512xbf16, #tpu.memory_space<vmem>>, vector<1x16x64xbf16>
    %47 = vector.shape_cast %46 : vector<1x16x64xbf16> to vector<16x64xbf16>
    %cst_29 = arith.constant 1.250000e-01 : bf16
    %48 = vector.broadcast %cst_29 : bf16 to vector<16x64xbf16>
    %49 = arith.mulf %47, %48 : vector<16x64xbf16>
    %c0_30 = arith.constant 0 : index
    %c0_31 = arith.constant 0 : index
    %c128_32 = arith.constant 128 : index
    %50 = vector.load %arg3[%c0_30, %c0_31, %c128_32] : memref<1x16x1024xbf16, #tpu.memory_space<vmem>>, vector<1x16x64xbf16>
    %51 = vector.shape_cast %50 : vector<1x16x64xbf16> to vector<16x64xbf16>
    %c0_33 = arith.constant 0 : index
    %c0_34 = arith.constant 0 : index
    %c640 = arith.constant 640 : index
    %52 = vector.load %arg3[%c0_33, %c0_34, %c640] : memref<1x16x1024xbf16, #tpu.memory_space<vmem>>, vector<1x16x64xbf16>
    %53 = vector.shape_cast %52 : vector<1x16x64xbf16> to vector<16x64xbf16>
    %cst_35 = arith.constant dense<0.000000e+00> : vector<16x16xf32>
    %54 = tpu.matmul %49, %51, %cst_35 {dimension_numbers = #tpu.dot_dimension_numbers<[1], [1], [0], [0], [0, 0, 1, 0], [], []>} : vector<16x64xbf16>, vector<16x64xbf16>, vector<16x16xf32> -> vector<16x16xf32>
    %cst_36 = arith.constant dense<0xFF800000> : vector<16xf32>
    %55 = vector.multi_reduction <maximumf>, %54, %cst_36 [1] : vector<16x16xf32> to vector<16xf32>
    %56 = vector.shape_cast %55 : vector<16xf32> to vector<16x1xf32>
    %57 = vector.broadcast %56 : vector<16x1xf32> to vector<16x16xf32>
    %58 = arith.subf %54, %57 : vector<16x16xf32>
    %59 = math.exp %58 : vector<16x16xf32>
    %cst_37 = arith.constant dense<0.000000e+00> : vector<16xf32>
    %60 = vector.multi_reduction <add>, %59, %cst_37 [1] : vector<16x16xf32> to vector<16xf32>
    %61 = vector.shape_cast %60 : vector<16xf32> to vector<16x1xf32>
    %62 = arith.truncf %59 : vector<16x16xf32> to vector<16x16xbf16>
    %cst_38 = arith.constant dense<0.000000e+00> : vector<16x64xf32>
    %63 = tpu.matmul %62, %53, %cst_38 {dimension_numbers = #tpu.dot_dimension_numbers<[1], [0], [0], [1], [0, 0, 1, 1], [], []>} : vector<16x16xbf16>, vector<16x64xbf16>, vector<16x64xf32> -> vector<16x64xf32>
    %64 = tpu.reciprocal %61 {approx = true} : vector<16x1xf32> -> vector<16x1xf32>
    %65 = vector.broadcast %64 : vector<16x1xf32> to vector<16x64xf32>
    %66 = arith.mulf %63, %65 : vector<16x64xf32>
    %67 = arith.truncf %66 : vector<16x64xf32> to vector<16x64xbf16>
    %c0_39 = arith.constant 0 : index
    %c128_40 = arith.constant 128 : index
    %68 = vector.load %arg9[%c0_39, %c128_40] : memref<16x512xbf16, #tpu.memory_space<vmem>>, vector<16x64xbf16>
    tpu.vector_store %arg9[%c0_39, %c128_40], %67 {strides = array<i32>} : memref<16x512xbf16, #tpu.memory_space<vmem>>, vector<16x64xbf16>,
    %c0_41 = arith.constant 0 : index
    %c0_42 = arith.constant 0 : index
    %c192 = arith.constant 192 : index
    %69 = vector.load %arg2[%c0_41, %c0_42, %c192] : memref<1x16x512xbf16, #tpu.memory_space<vmem>>, vector<1x16x64xbf16>
    %70 = vector.shape_cast %69 : vector<1x16x64xbf16> to vector<16x64xbf16>
    %cst_43 = arith.constant 1.250000e-01 : bf16
    %71 = vector.broadcast %cst_43 : bf16 to vector<16x64xbf16>
    %72 = arith.mulf %70, %71 : vector<16x64xbf16>
    %c0_44 = arith.constant 0 : index
    %c0_45 = arith.constant 0 : index
    %c192_46 = arith.constant 192 : index
    %73 = vector.load %arg3[%c0_44, %c0_45, %c192_46] : memref<1x16x1024xbf16, #tpu.memory_space<vmem>>, vector<1x16x64xbf16>
    %74 = vector.shape_cast %73 : vector<1x16x64xbf16> to vector<16x64xbf16>
    %c0_47 = arith.constant 0 : index
    %c0_48 = arith.constant 0 : index
    %c704 = arith.constant 704 : index
    %75 = vector.load %arg3[%c0_47, %c0_48, %c704] : memref<1x16x1024xbf16, #tpu.memory_space<vmem>>, vector<1x16x64xbf16>
    %76 = vector.shape_cast %75 : vector<1x16x64xbf16> to vector<16x64xbf16>
    %cst_49 = arith.constant dense<0.000000e+00> : vector<16x16xf32>
    %77 = tpu.matmul %72, %74, %cst_49 {dimension_numbers = #tpu.dot_dimension_numbers<[1], [1], [0], [0], [0, 0, 1, 0], [], []>} : vector<16x64xbf16>, vector<16x64xbf16>, vector<16x16xf32> -> vector<16x16xf32>
    %cst_50 = arith.constant dense<0xFF800000> : vector<16xf32>
    %78 = vector.multi_reduction <maximumf>, %77, %cst_50 [1] : vector<16x16xf32> to vector<16xf32>
    %79 = vector.shape_cast %78 : vector<16xf32> to vector<16x1xf32>
    %80 = vector.broadcast %79 : vector<16x1xf32> to vector<16x16xf32>
    %81 = arith.subf %77, %80 : vector<16x16xf32>
    %82 = math.exp %81 : vector<16x16xf32>
    %cst_51 = arith.constant dense<0.000000e+00> : vector<16xf32>
    %83 = vector.multi_reduction <add>, %82, %cst_51 [1] : vector<16x16xf32> to vector<16xf32>
    %84 = vector.shape_cast %83 : vector<16xf32> to vector<16x1xf32>
    %85 = arith.truncf %82 : vector<16x16xf32> to vector<16x16xbf16>
    %cst_52 = arith.constant dense<0.000000e+00> : vector<16x64xf32>
    %86 = tpu.matmul %85, %76, %cst_52 {dimension_numbers = #tpu.dot_dimension_numbers<[1], [0], [0], [1], [0, 0, 1, 1], [], []>} : vector<16x16xbf16>, vector<16x64xbf16>, vector<16x64xf32> -> vector<16x64xf32>
    %87 = tpu.reciprocal %84 {approx = true} : vector<16x1xf32> -> vector<16x1xf32>
    %88 = vector.broadcast %87 : vector<16x1xf32> to vector<16x64xf32>
    %89 = arith.mulf %86, %88 : vector<16x64xf32>
    %90 = arith.truncf %89 : vector<16x64xf32> to vector<16x64xbf16>
    %c0_53 = arith.constant 0 : index
    %c192_54 = arith.constant 192 : index
    %91 = vector.load %arg9[%c0_53, %c192_54] : memref<16x512xbf16, #tpu.memory_space<vmem>>, vector<16x64xbf16>
    tpu.vector_store %arg9[%c0_53, %c192_54], %90 {strides = array<i32>} : memref<16x512xbf16, #tpu.memory_space<vmem>>, vector<16x64xbf16>,
    %c0_55 = arith.constant 0 : index
    %c0_56 = arith.constant 0 : index
    %c256 = arith.constant 256 : index
    %92 = vector.load %arg2[%c0_55, %c0_56, %c256] : memref<1x16x512xbf16, #tpu.memory_space<vmem>>, vector<1x16x64xbf16>
    %93 = vector.shape_cast %92 : vector<1x16x64xbf16> to vector<16x64xbf16>
    %cst_57 = arith.constant 1.250000e-01 : bf16
    %94 = vector.broadcast %cst_57 : bf16 to vector<16x64xbf16>
    %95 = arith.mulf %93, %94 : vector<16x64xbf16>
    %c0_58 = arith.constant 0 : index
    %c0_59 = arith.constant 0 : index
    %c256_60 = arith.constant 256 : index
    %96 = vector.load %arg3[%c0_58, %c0_59, %c256_60] : memref<1x16x1024xbf16, #tpu.memory_space<vmem>>, vector<1x16x64xbf16>
    %97 = vector.shape_cast %96 : vector<1x16x64xbf16> to vector<16x64xbf16>
    %c0_61 = arith.constant 0 : index
    %c0_62 = arith.constant 0 : index
    %c768 = arith.constant 768 : index
    %98 = vector.load %arg3[%c0_61, %c0_62, %c768] : memref<1x16x1024xbf16, #tpu.memory_space<vmem>>, vector<1x16x64xbf16>
    %99 = vector.shape_cast %98 : vector<1x16x64xbf16> to vector<16x64xbf16>
    %cst_63 = arith.constant dense<0.000000e+00> : vector<16x16xf32>
    %100 = tpu.matmul %95, %97, %cst_63 {dimension_numbers = #tpu.dot_dimension_numbers<[1], [1], [0], [0], [0, 0, 1, 0], [], []>} : vector<16x64xbf16>, vector<16x64xbf16>, vector<16x16xf32> -> vector<16x16xf32>
    %cst_64 = arith.constant dense<0xFF800000> : vector<16xf32>
    %101 = vector.multi_reduction <maximumf>, %100, %cst_64 [1] : vector<16x16xf32> to vector<16xf32>
    %102 = vector.shape_cast %101 : vector<16xf32> to vector<16x1xf32>
    %103 = vector.broadcast %102 : vector<16x1xf32> to vector<16x16xf32>
    %104 = arith.subf %100, %103 : vector<16x16xf32>
    %105 = math.exp %104 : vector<16x16xf32>
    %cst_65 = arith.constant dense<0.000000e+00> : vector<16xf32>
    %106 = vector.multi_reduction <add>, %105, %cst_65 [1] : vector<16x16xf32> to vector<16xf32>
    %107 = vector.shape_cast %106 : vector<16xf32> to vector<16x1xf32>
    %108 = arith.truncf %105 : vector<16x16xf32> to vector<16x16xbf16>
    %cst_66 = arith.constant dense<0.000000e+00> : vector<16x64xf32>
    %109 = tpu.matmul %108, %99, %cst_66 {dimension_numbers = #tpu.dot_dimension_numbers<[1], [0], [0], [1], [0, 0, 1, 1], [], []>} : vector<16x16xbf16>, vector<16x64xbf16>, vector<16x64xf32> -> vector<16x64xf32>
    %110 = tpu.reciprocal %107 {approx = true} : vector<16x1xf32> -> vector<16x1xf32>
    %111 = vector.broadcast %110 : vector<16x1xf32> to vector<16x64xf32>
    %112 = arith.mulf %109, %111 : vector<16x64xf32>
    %113 = arith.truncf %112 : vector<16x64xf32> to vector<16x64xbf16>
    %c0_67 = arith.constant 0 : index
    %c256_68 = arith.constant 256 : index
    %114 = vector.load %arg9[%c0_67, %c256_68] : memref<16x512xbf16, #tpu.memory_space<vmem>>, vector<16x64xbf16>
    tpu.vector_store %arg9[%c0_67, %c256_68], %113 {strides = array<i32>} : memref<16x512xbf16, #tpu.memory_space<vmem>>, vector<16x64xbf16>,
    %c0_69 = arith.constant 0 : index
    %c0_70 = arith.constant 0 : index
    %c320 = arith.constant 320 : index
    %115 = vector.load %arg2[%c0_69, %c0_70, %c320] : memref<1x16x512xbf16, #tpu.memory_space<vmem>>, vector<1x16x64xbf16>
    %116 = vector.shape_cast %115 : vector<1x16x64xbf16> to vector<16x64xbf16>
    %cst_71 = arith.constant 1.250000e-01 : bf16
    %117 = vector.broadcast %cst_71 : bf16 to vector<16x64xbf16>
    %118 = arith.mulf %116, %117 : vector<16x64xbf16>
    %c0_72 = arith.constant 0 : index
    %c0_73 = arith.constant 0 : index
    %c320_74 = arith.constant 320 : index
    %119 = vector.load %arg3[%c0_72, %c0_73, %c320_74] : memref<1x16x1024xbf16, #tpu.memory_space<vmem>>, vector<1x16x64xbf16>
    %120 = vector.shape_cast %119 : vector<1x16x64xbf16> to vector<16x64xbf16>
    %c0_75 = arith.constant 0 : index
    %c0_76 = arith.constant 0 : index
    %c832 = arith.constant 832 : index
    %121 = vector.load %arg3[%c0_75, %c0_76, %c832] : memref<1x16x1024xbf16, #tpu.memory_space<vmem>>, vector<1x16x64xbf16>
    %122 = vector.shape_cast %121 : vector<1x16x64xbf16> to vector<16x64xbf16>
    %cst_77 = arith.constant dense<0.000000e+00> : vector<16x16xf32>
    %123 = tpu.matmul %118, %120, %cst_77 {dimension_numbers = #tpu.dot_dimension_numbers<[1], [1], [0], [0], [0, 0, 1, 0], [], []>} : vector<16x64xbf16>, vector<16x64xbf16>, vector<16x16xf32> -> vector<16x16xf32>
    %cst_78 = arith.constant dense<0xFF800000> : vector<16xf32>
    %124 = vector.multi_reduction <maximumf>, %123, %cst_78 [1] : vector<16x16xf32> to vector<16xf32>
    %125 = vector.shape_cast %124 : vector<16xf32> to vector<16x1xf32>
    %126 = vector.broadcast %125 : vector<16x1xf32> to vector<16x16xf32>
    %127 = arith.subf %123, %126 : vector<16x16xf32>
    %128 = math.exp %127 : vector<16x16xf32>
    %cst_79 = arith.constant dense<0.000000e+00> : vector<16xf32>
    %129 = vector.multi_reduction <add>, %128, %cst_79 [1] : vector<16x16xf32> to vector<16xf32>
    %130 = vector.shape_cast %129 : vector<16xf32> to vector<16x1xf32>
    %131 = arith.truncf %128 : vector<16x16xf32> to vector<16x16xbf16>
    %cst_80 = arith.constant dense<0.000000e+00> : vector<16x64xf32>
    %132 = tpu.matmul %131, %122, %cst_80 {dimension_numbers = #tpu.dot_dimension_numbers<[1], [0], [0], [1], [0, 0, 1, 1], [], []>} : vector<16x16xbf16>, vector<16x64xbf16>, vector<16x64xf32> -> vector<16x64xf32>
    %133 = tpu.reciprocal %130 {approx = true} : vector<16x1xf32> -> vector<16x1xf32>
    %134 = vector.broadcast %133 : vector<16x1xf32> to vector<16x64xf32>
    %135 = arith.mulf %132, %134 : vector<16x64xf32>
    %136 = arith.truncf %135 : vector<16x64xf32> to vector<16x64xbf16>
    %c0_81 = arith.constant 0 : index
    %c320_82 = arith.constant 320 : index
    %137 = vector.load %arg9[%c0_81, %c320_82] : memref<16x512xbf16, #tpu.memory_space<vmem>>, vector<16x64xbf16>
    tpu.vector_store %arg9[%c0_81, %c320_82], %136 {strides = array<i32>} : memref<16x512xbf16, #tpu.memory_space<vmem>>, vector<16x64xbf16>,
    %c0_83 = arith.constant 0 : index
    %c0_84 = arith.constant 0 : index
    %c384 = arith.constant 384 : index
    %138 = vector.load %arg2[%c0_83, %c0_84, %c384] : memref<1x16x512xbf16, #tpu.memory_space<vmem>>, vector<1x16x64xbf16>
    %139 = vector.shape_cast %138 : vector<1x16x64xbf16> to vector<16x64xbf16>
    %cst_85 = arith.constant 1.250000e-01 : bf16
    %140 = vector.broadcast %cst_85 : bf16 to vector<16x64xbf16>
    %141 = arith.mulf %139, %140 : vector<16x64xbf16>
    %c0_86 = arith.constant 0 : index
    %c0_87 = arith.constant 0 : index
    %c384_88 = arith.constant 384 : index
    %142 = vector.load %arg3[%c0_86, %c0_87, %c384_88] : memref<1x16x1024xbf16, #tpu.memory_space<vmem>>, vector<1x16x64xbf16>
    %143 = vector.shape_cast %142 : vector<1x16x64xbf16> to vector<16x64xbf16>
    %c0_89 = arith.constant 0 : index
    %c0_90 = arith.constant 0 : index
    %c896 = arith.constant 896 : index
    %144 = vector.load %arg3[%c0_89, %c0_90, %c896] : memref<1x16x1024xbf16, #tpu.memory_space<vmem>>, vector<1x16x64xbf16>
    %145 = vector.shape_cast %144 : vector<1x16x64xbf16> to vector<16x64xbf16>
    %cst_91 = arith.constant dense<0.000000e+00> : vector<16x16xf32>
    %146 = tpu.matmul %141, %143, %cst_91 {dimension_numbers = #tpu.dot_dimension_numbers<[1], [1], [0], [0], [0, 0, 1, 0], [], []>} : vector<16x64xbf16>, vector<16x64xbf16>, vector<16x16xf32> -> vector<16x16xf32>
    %cst_92 = arith.constant dense<0xFF800000> : vector<16xf32>
    %147 = vector.multi_reduction <maximumf>, %146, %cst_92 [1] : vector<16x16xf32> to vector<16xf32>
    %148 = vector.shape_cast %147 : vector<16xf32> to vector<16x1xf32>
    %149 = vector.broadcast %148 : vector<16x1xf32> to vector<16x16xf32>
    %150 = arith.subf %146, %149 : vector<16x16xf32>
    %151 = math.exp %150 : vector<16x16xf32>
    %cst_93 = arith.constant dense<0.000000e+00> : vector<16xf32>
    %152 = vector.multi_reduction <add>, %151, %cst_93 [1] : vector<16x16xf32> to vector<16xf32>
    %153 = vector.shape_cast %152 : vector<16xf32> to vector<16x1xf32>
    %154 = arith.truncf %151 : vector<16x16xf32> to vector<16x16xbf16>
    %cst_94 = arith.constant dense<0.000000e+00> : vector<16x64xf32>
    %155 = tpu.matmul %154, %145, %cst_94 {dimension_numbers = #tpu.dot_dimension_numbers<[1], [0], [0], [1], [0, 0, 1, 1], [], []>} : vector<16x16xbf16>, vector<16x64xbf16>, vector<16x64xf32> -> vector<16x64xf32>
    %156 = tpu.reciprocal %153 {approx = true} : vector<16x1xf32> -> vector<16x1xf32>
    %157 = vector.broadcast %156 : vector<16x1xf32> to vector<16x64xf32>
    %158 = arith.mulf %155, %157 : vector<16x64xf32>
    %159 = arith.truncf %158 : vector<16x64xf32> to vector<16x64xbf16>
    %c0_95 = arith.constant 0 : index
    %c384_96 = arith.constant 384 : index
    %160 = vector.load %arg9[%c0_95, %c384_96] : memref<16x512xbf16, #tpu.memory_space<vmem>>, vector<16x64xbf16>
    tpu.vector_store %arg9[%c0_95, %c384_96], %159 {strides = array<i32>} : memref<16x512xbf16, #tpu.memory_space<vmem>>, vector<16x64xbf16>,
    %c0_97 = arith.constant 0 : index
    %c0_98 = arith.constant 0 : index
    %c448 = arith.constant 448 : index
    %161 = vector.load %arg2[%c0_97, %c0_98, %c448] : memref<1x16x512xbf16, #tpu.memory_space<vmem>>, vector<1x16x64xbf16>
    %162 = vector.shape_cast %161 : vector<1x16x64xbf16> to vector<16x64xbf16>
    %cst_99 = arith.constant 1.250000e-01 : bf16
    %163 = vector.broadcast %cst_99 : bf16 to vector<16x64xbf16>
    %164 = arith.mulf %162, %163 : vector<16x64xbf16>
    %c0_100 = arith.constant 0 : index
    %c0_101 = arith.constant 0 : index
    %c448_102 = arith.constant 448 : index
    %165 = vector.load %arg3[%c0_100, %c0_101, %c448_102] : memref<1x16x1024xbf16, #tpu.memory_space<vmem>>, vector<1x16x64xbf16>
    %166 = vector.shape_cast %165 : vector<1x16x64xbf16> to vector<16x64xbf16>
    %c0_103 = arith.constant 0 : index
    %c0_104 = arith.constant 0 : index
    %c960 = arith.constant 960 : index
    %167 = vector.load %arg3[%c0_103, %c0_104, %c960] : memref<1x16x1024xbf16, #tpu.memory_space<vmem>>, vector<1x16x64xbf16>
    %168 = vector.shape_cast %167 : vector<1x16x64xbf16> to vector<16x64xbf16>
    %cst_105 = arith.constant dense<0.000000e+00> : vector<16x16xf32>
    %169 = tpu.matmul %164, %166, %cst_105 {dimension_numbers = #tpu.dot_dimension_numbers<[1], [1], [0], [0], [0, 0, 1, 0], [], []>} : vector<16x64xbf16>, vector<16x64xbf16>, vector<16x16xf32> -> vector<16x16xf32>
    %cst_106 = arith.constant dense<0xFF800000> : vector<16xf32>
    %170 = vector.multi_reduction <maximumf>, %169, %cst_106 [1] : vector<16x16xf32> to vector<16xf32>
    %171 = vector.shape_cast %170 : vector<16xf32> to vector<16x1xf32>
    %172 = vector.broadcast %171 : vector<16x1xf32> to vector<16x16xf32>
    %173 = arith.subf %169, %172 : vector<16x16xf32>
    %174 = math.exp %173 : vector<16x16xf32>
    %cst_107 = arith.constant dense<0.000000e+00> : vector<16xf32>
    %175 = vector.multi_reduction <add>, %174, %cst_107 [1] : vector<16x16xf32> to vector<16xf32>
    %176 = vector.shape_cast %175 : vector<16xf32> to vector<16x1xf32>
    %177 = arith.truncf %174 : vector<16x16xf32> to vector<16x16xbf16>
    %cst_108 = arith.constant dense<0.000000e+00> : vector<16x64xf32>
    %178 = tpu.matmul %177, %168, %cst_108 {dimension_numbers = #tpu.dot_dimension_numbers<[1], [0], [0], [1], [0, 0, 1, 1], [], []>} : vector<16x16xbf16>, vector<16x64xbf16>, vector<16x64xf32> -> vector<16x64xf32>
    %179 = tpu.reciprocal %176 {approx = true} : vector<16x1xf32> -> vector<16x1xf32>
    %180 = vector.broadcast %179 : vector<16x1xf32> to vector<16x64xf32>
    %181 = arith.mulf %178, %180 : vector<16x64xf32>
    %182 = arith.truncf %181 : vector<16x64xf32> to vector<16x64xbf16>
    %c0_109 = arith.constant 0 : index
    %c448_110 = arith.constant 448 : index
    %183 = vector.load %arg9[%c0_109, %c448_110] : memref<16x512xbf16, #tpu.memory_space<vmem>>, vector<16x64xbf16>
    tpu.vector_store %arg9[%c0_109, %c448_110], %182 {strides = array<i32>} : memref<16x512xbf16, #tpu.memory_space<vmem>>, vector<16x64xbf16>,
    %c0_111 = arith.constant 0 : index
    %c0_112 = arith.constant 0 : index
    %184 = vector.load %arg9[%c0_111, %c0_112] : memref<16x512xbf16, #tpu.memory_space<vmem>>, vector<16x512xbf16>
    %c0_113 = arith.constant 0 : index
    %c0_114 = arith.constant 0 : index
    %185 = vector.load %arg4[%c0_113, %c0_114] : memref<512x512xbf16, #tpu.memory_space<vmem>>, vector<512x512xbf16>
    %cst_115 = arith.constant dense<0.000000e+00> : vector<16x512xf32>
    %186 = tpu.matmul %184, %185, %cst_115 {dimension_numbers = #tpu.dot_dimension_numbers<[1], [0], [0], [1], [0, 0, 1, 1], [], []>} : vector<16x512xbf16>, vector<512x512xbf16>, vector<16x512xf32> -> vector<16x512xf32>
    %c0_116 = arith.constant 0 : index
    %c0_117 = arith.constant 0 : index
    %c0_118 = arith.constant 0 : index
    %187 = vector.load %arg5[%c0_116, %c0_117, %c0_118] : memref<1x16x512xf32, #tpu.memory_space<vmem>>, vector<1x16x512xf32>
    %188 = vector.shape_cast %187 : vector<1x16x512xf32> to vector<16x512xf32>
    %189 = arith.addf %186, %188 : vector<16x512xf32>
    %cst_119 = arith.constant dense<0.000000e+00> : vector<16xf32>
    %190 = vector.multi_reduction <add>, %189, %cst_119 [1] : vector<16x512xf32> to vector<16xf32>
    %191 = vector.shape_cast %190 : vector<16xf32> to vector<16x1xf32>
    %cst_120 = arith.constant 5.120000e+02 : f32
    %192 = vector.broadcast %cst_120 : f32 to vector<16x1xf32>
    %193 = arith.divf %191, %192 : vector<16x1xf32>
    %194 = vector.broadcast %193 : vector<16x1xf32> to vector<16x512xf32>
    %195 = arith.subf %189, %194 : vector<16x512xf32>
    %196 = arith.mulf %195, %195 : vector<16x512xf32>
    %cst_121 = arith.constant dense<0.000000e+00> : vector<16xf32>
    %197 = vector.multi_reduction <add>, %196, %cst_121 [1] : vector<16x512xf32> to vector<16xf32>
    %198 = vector.shape_cast %197 : vector<16xf32> to vector<16x1xf32>
    %cst_122 = arith.constant 5.120000e+02 : f32
    %199 = vector.broadcast %cst_122 : f32 to vector<16x1xf32>
    %200 = arith.divf %198, %199 : vector<16x1xf32>
    %201 = vector.broadcast %193 : vector<16x1xf32> to vector<16x512xf32>
    %202 = arith.subf %189, %201 : vector<16x512xf32>
    %cst_123 = arith.constant 9.99999974E-6 : f32
    %203 = vector.broadcast %cst_123 : f32 to vector<16x1xf32>
    %204 = arith.addf %200, %203 : vector<16x1xf32>
    %205 = math.rsqrt %204 : vector<16x1xf32>
    %206 = vector.broadcast %205 : vector<16x1xf32> to vector<16x512xf32>
    %207 = arith.mulf %202, %206 : vector<16x512xf32>
    %c0_124 = arith.constant 0 : index
    %c0_125 = arith.constant 0 : index
    %208 = vector.load %arg6[%c0_124, %c0_125] : memref<1x512xf32, #tpu.memory_space<vmem>>, vector<1x512xf32>
    %209 = vector.broadcast %208 : vector<1x512xf32> to vector<16x512xf32>
    %210 = arith.mulf %207, %209 : vector<16x512xf32>
    %c0_126 = arith.constant 0 : index
    %c0_127 = arith.constant 0 : index
    %211 = vector.load %arg7[%c0_126, %c0_127] : memref<1x512xf32, #tpu.memory_space<vmem>>, vector<1x512xf32>
    %212 = vector.broadcast %211 : vector<1x512xf32> to vector<16x512xf32>
    %213 = arith.addf %210, %212 : vector<16x512xf32>
    %c0_128 = arith.constant 0 : index
    %c0_129 = arith.constant 0 : index
    %c0_130 = arith.constant 0 : index
    %214 = vector.load %arg8[%c0_128, %c0_129, %c0_130] : memref<1x16x512xf32, #tpu.memory_space<vmem>>, vector<1x16x512xf32>
    %215 = vector.shape_cast %214 : vector<1x16x512xf32> to vector<16x512xf32>
    %216 = vector.shape_cast %213 : vector<16x512xf32> to vector<1x16x512xf32>
    tpu.vector_store %arg8[%c0_128, %c0_129, %c0_130], %216 {strides = array<i32>} : memref<1x16x512xf32, #tpu.memory_space<vmem>>, vector<1x16x512xf32>,
    return
  }
  func.func @transform_0(%arg0: i32, %arg1: i32) -> (i32, i32, i32) {
    %c0_i32 = arith.constant 0 : i32
    %c0_i32_0 = arith.constant 0 : i32
    return %arg0, %arg1, %c0_i32 : i32, i32, i32
  }
  func.func @transform_1(%arg0: i32, %arg1: i32) -> (i32, i32, i32) {
    %c0_i32 = arith.constant 0 : i32
    %c0_i32_0 = arith.constant 0 : i32
    %c0_i32_1 = arith.constant 0 : i32
    return %arg0, %c0_i32, %c0_i32_0 : i32, i32, i32
  }
  func.func @transform_2(%arg0: i32, %arg1: i32) -> (i32, i32) {
    %c0_i32 = arith.constant 0 : i32
    %c0_i32_0 = arith.constant 0 : i32
    %c0_i32_1 = arith.constant 0 : i32
    return %c0_i32, %c0_i32_0 : i32, i32
  }
  func.func @transform_3(%arg0: i32, %arg1: i32) -> (i32, i32, i32) {
    %c0_i32 = arith.constant 0 : i32
    %c0_i32_0 = arith.constant 0 : i32
    return %arg0, %arg1, %c0_i32 : i32, i32, i32
  }
  func.func @transform_4(%arg0: i32, %arg1: i32) -> (i32, i32) {
    %c0_i32 = arith.constant 0 : i32
    %c0_i32_0 = arith.constant 0 : i32
    %c0_i32_1 = arith.constant 0 : i32
    return %c0_i32, %c0_i32_0 : i32, i32
  }
  func.func @transform_5(%arg0: i32, %arg1: i32) -> (i32, i32) {
    %c0_i32 = arith.constant 0 : i32
    %c0_i32_0 = arith.constant 0 : i32
    %c0_i32_1 = arith.constant 0 : i32
    return %c0_i32, %c0_i32_0 : i32, i32
  }
  func.func @transform_6(%arg0: i32, %arg1: i32) -> (i32, i32, i32) {
    %c0_i32 = arith.constant 0 : i32
    %c0_i32_0 = arith.constant 0 : i32
    return %arg0, %arg1, %c0_i32 : i32, i32, i32
  }
}

</mosaic_0001>

<llo_original>
// kernel: multi_head_attention.3
$region0: #{multi_head_attention.3}
  #allocation0 [shape = 'u32[]', space=smem, size = 0x4, offset = 0x4, fixed_abs, tag = 'smem constant byte address 0x4 - core index']
  #allocation1 [shape = 'u32[144,128]{1,0:T(1,128)}', space=vmem, size = 0x12000, scoped, tag = 'internal scratch']
  #allocation2 [shape = 'bf16[16,512]{1,0:T(16,128)(2,1)}', space=vmem, size = 0x4000, scoped, tag = 'scratch operand']
  %s0 = inlined_call_operand.vmem [shape: bf16[2,16,512], index: 0, kind: input, shape index: {}]
  %s1 = inlined_call_operand.vmem [shape: bf16[2,16,1024], index: 1, kind: input, shape index: {}]
  %s2 = inlined_call_operand.vmem [shape: bf16[512,512], index: 2, kind: input, shape index: {}]
  %s3 = inlined_call_operand.vmem [shape: f32[2,16,512], index: 3, kind: input, shape index: {}]
  %s4 = inlined_call_operand.vmem [shape: f32[1,512], index: 4, kind: input, shape index: {}]
  %s5 = inlined_call_operand.vmem [shape: f32[1,512], index: 5, kind: input, shape index: {}]
  %s6 = inlined_call_operand.hbm [shape: f32[2,16,512], index: 6, kind: output, shape index: {}]
  %s7 = sld [smem:[#allocation0]]
  $region57: #{multi_head_attention.3} parent=0
    _
  %s9 = ssub.s32 1, %s7
  %s10 = scalar_select 0, %s9, %s7
  $region1: #{multi_head_attention.3} parent=0
    #allocation3 [shape = 'u8[65536]{0}', space=vmem, size = 0x10000, scoped, tag = 'output window, operand 0']
    #allocation4 [shape = 's32[2]{0}', space=sflag, size = 0x8, scoped, tag = 'scoped memory for multi_head_attention.3']
    %11 = vsyncpa [#allocation4], 0
    %s12 = scalar_lea.sflag [#allocation4], 1
    %13 = vsyncpa %s12, 0
    loop: start=0, step=1, limit=4
    $region2: #{multi_head_attention.3} parent=1 // loop_pre_header
      _
    $region3: #{multi_head_attention.3} parent=1 // loop_header
      %s15 = sphi 0, %s19
      %p16 = scmp.ge.s32.totalorder %s15, 4
      %s22 = sphi 0, %s34
      %s23 = sphi 0, %s30
      %s24 = sphi 0, %s22
      %s25 = sphi 0, %s23
      %s26 = sphi 0, %s24
      %s27 = sphi 0, %s25
      %s39 = sphi 0, %s41
      %s42 = sphi 0, %s39
      %s43 = sphi 0, %s42
      %s59 = sphi 0, %s43
      %s65 = sphi 0, %s67
      %s68 = sphi 0, %s65
      %s69 = sphi 0, %s68
      %s85 = sphi 0, %s69
      %s89 = sphi 0, %s89
      %s91 = sphi 0, %s89
      %s92 = sphi 0, %s91
      %s106 = sphi 0, %s92
      %s114 = sphi 0, %s116
      %s117 = sphi 0, %s114
      %s118 = sphi 0, %s117
      %s134 = sphi 0, %s118
      %s138 = sphi 0, %s138
      %s140 = sphi 0, %s138
      %s141 = sphi 0, %s140
      %s155 = sphi 0, %s141
      %s159 = sphi 0, %s159
      %s161 = sphi 0, %s159
      %s162 = sphi 0, %s161
      %s176 = sphi 0, %s162
      %s184 = sphi 0, %s186
      %s187 = sphi 0, %s184
      %s188 = sphi 0, %s187
      %s204 = sphi 0, %s188
    $region4: #{multi_head_attention.3} parent=1 // loop_header_branch
      %18 = sbr.rel (%p16) target = $region8
    $region5: #{multi_head_attention.3} parent=1 // loop_body
      %s20 = ssub.s32 %s15, 1
      %s21 = ssub.s32 %s15, 2
      %s28 = sadd.s32 1, %s23
      %p29 = scmp.ge.s32.totalorder %s28, 1
      %s30 = scalar_select %p29, 0, %s28
      %s31 = sadd.s32 1, %s22
      %s32 = scalar_select %p29, %s31, %s22
      %p33 = scmp.ge.s32.totalorder %s32, 2
      %s34 = scalar_select %p33, 0, %s32
      %s35 = ssub.s32 %s22, %s34
      %s36 = ssub.s32 %s23, %s30
      %s37 = sor.u32 %s35, %s36
      %p38 = scmp.eq.s32.totalorder %s37, 0
      %s40 = sadd.s32 %s39, 1
      %s41 = scalar_select %p38, %s39, %s40
      %p44 = pneg %p38
      %p45 = scmp.eq.s32.totalorder %s15, 1
      %p46 = por %p44, %p45
      %p47 = scmp.ne.s32.totalorder %s39, %s42
      %p48 = scmp.eq.s32.totalorder %s15, 0
      %p49 = por %p47, %p48
      %p50 = scmp.ne.s32.totalorder %s39, %s42
      %p51 = scmp.eq.s32.totalorder %s20, 1
      %p52 = por %p50, %p51
      %p53 = scmp.ne.s32.totalorder %s42, %s43
      %p54 = scmp.eq.s32.totalorder %s20, 0
      %p55 = por %p53, %p54
      %p56 = scmp.ne.s32.totalorder %s42, %s43
      %p57 = scmp.eq.s32.totalorder %s21, 1
      %p58 = por %p56, %p57
      %p60 = scmp.ne.s32.totalorder %s43, %s59
      %p61 = scmp.eq.s32.totalorder %s21, 0
      %p62 = por %p60, %p61
      %s63 = ssub.s32 %s22, %s34
      %p64 = scmp.eq.s32.totalorder %s63, 0
      %s66 = sadd.s32 %s65, 1
      %s67 = scalar_select %p64, %s65, %s66
      %p70 = pneg %p64
      %p71 = scmp.eq.s32.totalorder %s15, 1
      %p72 = por %p70, %p71
      %p73 = scmp.ne.s32.totalorder %s65, %s68
      %p74 = scmp.eq.s32.totalorder %s15, 0
      %p75 = por %p73, %p74
      %p76 = scmp.ne.s32.totalorder %s65, %s68
      %p77 = scmp.eq.s32.totalorder %s20, 1
      %p78 = por %p76, %p77
      %p79 = scmp.ne.s32.totalorder %s68, %s69
      %p80 = scmp.eq.s32.totalorder %s20, 0
      %p81 = por %p79, %p80
      %p82 = scmp.ne.s32.totalorder %s68, %s69
      %p83 = scmp.eq.s32.totalorder %s21, 1
      %p84 = por %p82, %p83
      %p86 = scmp.ne.s32.totalorder %s69, %s85
      %p87 = scmp.eq.s32.totalorder %s21, 0
      %p88 = por %p86, %p87
      %s90 = sadd.s32 %s89, 1
      %p93 = scmp.eq.s32.totalorder %s15, 1
      %p94 = scmp.ne.s32.totalorder %s89, %s91
      %p95 = scmp.eq.s32.totalorder %s15, 0
      %p96 = por %p94, %p95
      %p97 = scmp.ne.s32.totalorder %s89, %s91
      %p98 = scmp.eq.s32.totalorder %s20, 1
      %p99 = por %p97, %p98
      %p100 = scmp.ne.s32.totalorder %s91, %s92
      %p101 = scmp.eq.s32.totalorder %s20, 0
      %p102 = por %p100, %p101
      %p103 = scmp.ne.s32.totalorder %s91, %s92
      %p104 = scmp.eq.s32.totalorder %s21, 1
      %p105 = por %p103, %p104
      %p107 = scmp.ne.s32.totalorder %s92, %s106
      %p108 = scmp.eq.s32.totalorder %s21, 0
      %p109 = por %p107, %p108
      %s110 = ssub.s32 %s22, %s34
      %s111 = ssub.s32 %s23, %s30
      %s112 = sor.u32 %s110, %s111
      %p113 = scmp.eq.s32.totalorder %s112, 0
      %s115 = sadd.s32 %s114, 1
      %s116 = scalar_select %p113, %s114, %s115
      %p119 = pneg %p113
      %p120 = scmp.eq.s32.totalorder %s15, 1
      %p121 = por %p119, %p120
      %p122 = scmp.ne.s32.totalorder %s114, %s117
      %p123 = scmp.eq.s32.totalorder %s15, 0
      %p124 = por %p122, %p123
      %p125 = scmp.ne.s32.totalorder %s114, %s117
      %p126 = scmp.eq.s32.totalorder %s20, 1
      %p127 = por %p125, %p126
      %p128 = scmp.ne.s32.totalorder %s117, %s118
      %p129 = scmp.eq.s32.totalorder %s20, 0
      %p130 = por %p128, %p129
      %p131 = scmp.ne.s32.totalorder %s117, %s118
      %p132 = scmp.eq.s32.totalorder %s21, 1
      %p133 = por %p131, %p132
      %p135 = scmp.ne.s32.totalorder %s118, %s134
      %p136 = scmp.eq.s32.totalorder %s21, 0
      %p137 = por %p135, %p136
      %s139 = sadd.s32 %s138, 1
      %p142 = scmp.eq.s32.totalorder %s15, 1
      %p143 = scmp.ne.s32.totalorder %s138, %s140
      %p144 = scmp.eq.s32.totalorder %s15, 0
      %p145 = por %p143, %p144
      %p146 = scmp.ne.s32.totalorder %s138, %s140
      %p147 = scmp.eq.s32.totalorder %s20, 1
      %p148 = por %p146, %p147
      %p149 = scmp.ne.s32.totalorder %s140, %s141
      %p150 = scmp.eq.s32.totalorder %s20, 0
      %p151 = por %p149, %p150
      %p152 = scmp.ne.s32.totalorder %s140, %s141
      %p153 = scmp.eq.s32.totalorder %s21, 1
      %p154 = por %p152, %p153
      %p156 = scmp.ne.s32.totalorder %s141, %s155
      %p157 = scmp.eq.s32.totalorder %s21, 0
      %p158 = por %p156, %p157
      %s160 = sadd.s32 %s159, 1
      %p163 = scmp.eq.s32.totalorder %s15, 1
      %p164 = scmp.ne.s32.totalorder %s159, %s161
      %p165 = scmp.eq.s32.totalorder %s15, 0
      %p166 = por %p164, %p165
      %p167 = scmp.ne.s32.totalorder %s159, %s161
      %p168 = scmp.eq.s32.totalorder %s20, 1
      %p169 = por %p167, %p168
      %p170 = scmp.ne.s32.totalorder %s161, %s162
      %p171 = scmp.eq.s32.totalorder %s20, 0
      %p172 = por %p170, %p171
      %p173 = scmp.ne.s32.totalorder %s161, %s162
      %p174 = scmp.eq.s32.totalorder %s21, 1
      %p175 = por %p173, %p174
      %p177 = scmp.ne.s32.totalorder %s162, %s176
      %p178 = scmp.eq.s32.totalorder %s21, 0
      %p179 = por %p177, %p178
      %s180 = ssub.s32 %s22, %s34
      %s181 = ssub.s32 %s23, %s30
      %s182 = sor.u32 %s180, %s181
      %p183 = scmp.eq.s32.totalorder %s182, 0
      %s185 = sadd.s32 %s184, 1
      %s186 = scalar_select %p183, %s184, %s185
      %p189 = pneg %p183
      %p190 = scmp.eq.s32.totalorder %s15, 1
      %p191 = por %p189, %p190
      %p192 = scmp.ne.s32.totalorder %s184, %s187
      %p193 = scmp.eq.s32.totalorder %s15, 0
      %p194 = por %p192, %p193
      %p195 = scmp.ne.s32.totalorder %s184, %s187
      %p196 = scmp.eq.s32.totalorder %s20, 1
      %p197 = por %p195, %p196
      %p198 = scmp.ne.s32.totalorder %s187, %s188
      %p199 = scmp.eq.s32.totalorder %s20, 0
      %p200 = por %p198, %p199
      %p201 = scmp.ne.s32.totalorder %s187, %s188
      %p202 = scmp.eq.s32.totalorder %s21, 1
      %p203 = por %p201, %p202
      %p205 = scmp.ne.s32.totalorder %s188, %s204
      %p206 = scmp.eq.s32.totalorder %s21, 0
      %p207 = por %p205, %p206
      %p208 = scmp.le.s32.totalorder 1, %s15
      %p209 = scmp.lt.s32.totalorder %s15, 3
      %p210 = pnand %p208, %p209
      %p211 = pneg %p210
      // Predicated region
      $region9: #{multi_head_attention.3} parent=5 // pred_check
        _
      $region10: #{multi_head_attention.3} parent=5 // pred_check_branch
        %213 = sbr.rel (%p210) target = $region12
      $region11: #{multi_head_attention.3} parent=5 // pred_region
        %s214 = ssub.s32 %s15, 1
        // Predicated region
        $region13: #{multi_head_attention.3} parent=11 // pred_check
          %p215 = pneg %p102
        $region14: #{multi_head_attention.3} parent=11 // pred_check_branch
          %217 = sbr.rel (%p215) target = $region16
        $region15: #{multi_head_attention.3} parent=11 // pred_region
          _
        $region16: #{multi_head_attention.3} parent=11 // pred_fallthru
          _
        // Predicated region
        $region17: #{multi_head_attention.3} parent=11 // pred_check
          %p218 = pneg %p151
        $region18: #{multi_head_attention.3} parent=11 // pred_check_branch
          %220 = sbr.rel (%p218) target = $region20
        $region19: #{multi_head_attention.3} parent=11 // pred_region
          _
        $region20: #{multi_head_attention.3} parent=11 // pred_fallthru
          _
        // Predicated region
        $region21: #{multi_head_attention.3} parent=11 // pred_check
          %p221 = pneg %p172
        $region22: #{multi_head_attention.3} parent=11 // pred_check_branch
          %223 = sbr.rel (%p221) target = $region24
        $region23: #{multi_head_attention.3} parent=11 // pred_region
          _
        $region24: #{multi_head_attention.3} parent=11 // pred_fallthru
          _
      $region12: #{multi_head_attention.3} parent=5 // pred_fallthru
        _
      %p224 = scmp.lt.s32.totalorder %s15, 2
      // Predicated region
      $region25: #{multi_head_attention.3} parent=5 // pred_check
        %p225 = pneg %p224
      $region26: #{multi_head_attention.3} parent=5 // pred_check_branch
        %227 = sbr.rel (%p225) target = $region28
      $region27: #{multi_head_attention.3} parent=5 // pred_region
        // Predicated region
        $region29: #{multi_head_attention.3} parent=27 // pred_check
          %p228 = pneg %p49
        $region30: #{multi_head_attention.3} parent=27 // pred_check_branch
          %230 = sbr.rel (%p228) target = $region32
        $region31: #{multi_head_attention.3} parent=27 // pred_region
          %s231 = smul.u32 2, %s23
          %p232 = scmp.lt.s32.totalorder %s22, 1
          %s233 = scalar_select %p232, %s22, 1
          %p234 = scmp.lt.s32.totalorder %s231, 1
          %s235 = scalar_select %p234, %s231, 1
          %s236 = smul.addr %s235, 4
          %s237 = smul.addr %s233, 8
          %s238 = sadd.s32 %s236, %s237
          %s239 = smul.addr %s238, 4
          %s240 = scalar_lea.vmem %s0, %s239
          %s241 = smul.u32 2, %s23
        $region32: #{multi_head_attention.3} parent=27 // pred_fallthru
          _
        // Predicated region
        $region33: #{multi_head_attention.3} parent=27 // pred_check
          %p242 = pneg %p75
        $region34: #{multi_head_attention.3} parent=27 // pred_check_branch
          %244 = sbr.rel (%p242) target = $region36
        $region35: #{multi_head_attention.3} parent=27 // pred_region
          %p245 = scmp.lt.s32.totalorder %s22, 1
          %s246 = scalar_select %p245, %s22, 1
          %s247 = smul.addr %s246, 16
          %s248 = smul.addr %s247, 4
          %s249 = scalar_lea.vmem %s1, %s248
        $region36: #{multi_head_attention.3} parent=27 // pred_fallthru
          _
        // Predicated region
        $region37: #{multi_head_attention.3} parent=27 // pred_check
          %p250 = pneg %p124
        $region38: #{multi_head_attention.3} parent=27 // pred_check_branch
          %252 = sbr.rel (%p250) target = $region40
        $region39: #{multi_head_attention.3} parent=27 // pred_region
          %s253 = smul.u32 2, %s23
          %p254 = scmp.lt.s32.totalorder %s22, 1
          %s255 = scalar_select %p254, %s22, 1
          %p256 = scmp.lt.s32.totalorder %s253, 1
          %s257 = scalar_select %p256, %s253, 1
          %s258 = smul.addr %s257, 4
          %s259 = smul.addr %s255, 8
          %s260 = sadd.s32 %s258, %s259
          %s261 = smul.addr %s260, 8
          %s262 = scalar_lea.vmem %s3, %s261
          %s263 = smul.u32 2, %s23
        $region40: #{multi_head_attention.3} parent=27 // pred_fallthru
          _
      $region28: #{multi_head_attention.3} parent=5 // pred_fallthru
        _
      %p264 = scmp.le.s32.totalorder 1, %s15
      %p265 = scmp.lt.s32.totalorder %s15, 3
      %p266 = pnand %p264, %p265
      %p267 = pneg %p266
      // Predicated region
      $region41: #{multi_head_attention.3} parent=5 // pred_check
        _
      $region42: #{multi_head_attention.3} parent=5 // pred_check_branch
        %269 = sbr.rel (%p266) target = $region44
      $region43: #{multi_head_attention.3} parent=5 // pred_region
        %s270 = ssub.s32 %s15, 1
        %s271 = smul.u32 2, %s25
        %p272 = scmp.lt.s32.totalorder %s24, 1
        %s273 = scalar_select %p272, %s24, 1
        %p274 = scmp.lt.s32.totalorder %s271, 1
        %s275 = scalar_select %p274, %s271, 1
        %s276 = smul.addr %s275, 4
        %s277 = smul.addr %s273, 8
        %s278 = sadd.s32 %s276, %s277
        %s279 = smul.addr %s278, 4
        %s280 = scalar_lea.vmem %s0, %s279
        %p281 = pneg %p55
        %p282 = pneg %p52
        %p283 = scmp.lt.s32.totalorder %s24, 1
        %s284 = scalar_select %p283, %s24, 1
        %s285 = smul.addr %s284, 16
        %s286 = smul.addr %s285, 4
        %s287 = scalar_lea.vmem %s1, %s286
        %p288 = pneg %p81
        %p289 = pneg %p78
        %p290 = pneg %p102
        %p291 = pneg %p99
        %s292 = smul.u32 2, %s25
        %p293 = scmp.lt.s32.totalorder %s24, 1
        %s294 = scalar_select %p293, %s24, 1
        %p295 = scmp.lt.s32.totalorder %s292, 1
        %s296 = scalar_select %p295, %s292, 1
        %s297 = smul.addr %s296, 4
        %s298 = smul.addr %s294, 8
        %s299 = sadd.s32 %s297, %s298
        %s300 = smul.addr %s299, 8
        %s301 = scalar_lea.vmem %s3, %s300
        %p302 = pneg %p130
        %p303 = pneg %p127
        %p304 = pneg %p151
        %p305 = pneg %p148
        %p306 = pneg %p172
        %p307 = pneg %p169
        %p308 = pneg %p200
        %p309 = pneg %p197
        %s310 = sand.u32 %s187, 1
        %s311 = scalar_lea.sflag [#allocation4], %s310
        %s312 = sand.u32 %s187, 1
        %s313 = smul.addr %s312, 64
        %s314 = scalar_lea.vmem [#allocation3], %s313
        %s315 = smul.u32 2, %s25
        %p316 = scmp.lt.s32.totalorder %s24, 1
        %s317 = scalar_select %p316, %s24, 1
        %p318 = scmp.lt.s32.totalorder %s315, 1
        %s319 = scalar_select %p318, %s315, 1
        %s320 = smul.addr %s319, 4
        %s321 = smul.addr %s317, 8
        %s322 = sadd.s32 %s320, %s321
        %s323 = smul.addr %s322, 4
        %s324 = scalar_lea.vmem %s0, %s323
        %s325 = smul.u32 2, %s25
        %p326 = scmp.lt.s32.totalorder %s24, 1
        %s327 = scalar_select %p326, %s24, 1
        %s328 = smul.addr %s327, 16
        %s329 = smul.addr %s328, 4
        %s330 = scalar_lea.vmem %s1, %s329
        %s331 = smul.u32 2, %s25
        %p332 = scmp.lt.s32.totalorder %s24, 1
        %s333 = scalar_select %p332, %s24, 1
        %p334 = scmp.lt.s32.totalorder %s331, 1
        %s335 = scalar_select %p334, %s331, 1
        %s336 = smul.addr %s335, 4
        %s337 = smul.addr %s333, 8
        %s338 = sadd.s32 %s336, %s337
        %s339 = smul.addr %s338, 8
        %s340 = scalar_lea.vmem %s3, %s339
        %s341 = smul.u32 2, %s25
        %s342 = smul.u32 2, %s25
        %v345 = vld [vmem:[%s324] sm:$0xf]
        %v346 = vld [vmem:[%s324 + $0x10] sm:$0xf]
        %v347 = vmul.bf16 %v345, 1040203264
        %v348 = vmul.bf16 %v346, 1040203264
        %v349 = vld [vmem:[%s330] sm:$0xf]
        %v350 = vld [vmem:[%s330 + $0x20] sm:$0xf]
        %v351 = vld [vmem:[%s330 + $0x10] sm:$0xf]
        %v352 = vld [vmem:[%s330 + $0x30] sm:$0xf]
        %v355 = vunpack.c.l.b16 %v347
        %v356 = vunpack.c.l.b16 %v348
        %v357 = vpack.c.b16 %v356, %v355
        %v360 = vunpack.c.l.b16 %v349
        %v361 = vunpack.c.l.b16 %v350
        %v362 = vpack.c.b16 %v361, %v360
        %vm363 = vcmask 523264
        %v365 = vsel %vm363, %v357, 0
        %v368 = vsel %vm363, %v362, 0
        %370 = vmatprep.subr.bf16.mxu0 0
        %371 = vmatpush1.bf16.xpose.msra.mxu0 %v368
        %372 = vmatprep.subr.bf16.mxu0 0
        %373 = vmatpush1.bf16.xpose.msra.mxu0 0
        %374 = vmatprep.subr.bf16.mxu0 0
        %375 = vmatpush1.bf16.xpose.msra.mxu0 0
        %376 = vmatprep.subr.bf16.mxu0 0
        %377 = vmatpush1.bf16.xpose.msra.mxu0 0
        %378 = vmatprep.subr.bf16.mxu0 0
        %379 = vmatpush1.bf16.xpose.msra.mxu0 0
        %380 = vmatprep.subr.bf16.mxu0 0
        %381 = vmatpush1.bf16.xpose.msra.mxu0 0
        %382 = vmatprep.subr.bf16.mxu0 0
        %383 = vmatpush1.bf16.xpose.msra.mxu0 0
        %384 = vmatprep.subr.bf16.mxu0 0
        %385 = vmatpush1.bf16.xpose.msra.mxu0 0
        %386 = vmatprep.subr.bf16.mxu0 0
        %387 = vmatpush1.bf16.xpose.msra.mxu0 0
        %388 = vmatprep.subr.bf16.mxu0 0
        %389 = vmatpush1.bf16.xpose.msra.mxu0 0
        %390 = vmatprep.subr.bf16.mxu0 0
        %391 = vmatpush1.bf16.xpose.msra.mxu0 0
        %392 = vmatprep.subr.bf16.mxu0 0
        %393 = vmatpush1.bf16.xpose.msra.mxu0 0
        %394 = vmatprep.subr.bf16.mxu0 0
        %395 = vmatpush1.bf16.xpose.msra.mxu0 0
        %396 = vmatprep.subr.bf16.mxu0 0
        %397 = vmatpush1.bf16.xpose.msra.mxu0 0
        %398 = vmatprep.subr.bf16.mxu0 0
        %399 = vmatpush1.bf16.xpose.msra.mxu0 0
        %400 = vmatprep.subr.bf16.mxu0 0
        %401 = vmatpush1.bf16.xpose.msra.mxu0 0
        %402 = vmatprep.mubr.bf16.mxu0 0
        %403 = vmatmul.mubr.bf16.gmra.mrb[0].mxu0 %v365
        %v404 = vpop.f32.mrb[0].mxu0
        %v405 = vadd.f32 0.0, %v404
        %v406 = vpop.f32.mrb[0].mxu0
        %v407 = vpop.f32.mrb[0].mxu0
        %v408 = vadd.f32 0.0, %v407
        %v409 = vpop.f32.mrb[0].mxu0
        %410 = vdwg.mxu0
        %vm411 = vcmask 130048
        %v412 = vsel %vm411, %v405, -inf
        %413 = vmax.xlane.f32.xlu0 %v412
        %v414 = vpop.xlane.xlu0 %413
        %v415 = vsel %vm411, %v408, -inf
        %416 = vmax.xlane.f32.xlu0 %v415
        %v417 = vpop.xlane.xlu0 %416
        %v418 = vsub.f32 %v405, %v414
        %v419 = vsub.f32 %v408, %v417
        %v420 = vmul.f32 %v418, 1.442695
        %v421 = vpow.pop %v420
        %v422 = vmul.f32 %v419, 1.442695
        %v423 = vpow.pop %v422
        %v424 = vsel %vm411, %v421, 0.0
        %425 = vadd.xlane.f32.xlu0 %v424
        %v426 = vpop.xlane.xlu0 %425
        %v427 = vsel %vm411, %v423, 0.0
        %428 = vadd.xlane.f32.xlu0 %v427
        %v429 = vpop.xlane.xlu0 %428
        %v430 = vpack.c.bf16 %v423, %v421
        %v433 = vunpack.c.l.b16 %v351
        %v434 = vunpack.c.l.b16 %v352
        %v435 = vpack.c.b16 %v434, %v433
        %v438 = vsel %vm411, %v430, 0
        %440 = vmatprep.subr.bf16.mxu0 0
        %441 = vmatpush1.bf16.msra.mxu0 %v435
        %442 = vmatprep.subr.bf16.mxu0 0
        %443 = vmatpush1.bf16.msra.mxu0 0
        %444 = vmatprep.subr.bf16.mxu0 0
        %445 = vmatpush1.bf16.msra.mxu0 0
        %446 = vmatprep.subr.bf16.mxu0 0
        %447 = vmatpush1.bf16.msra.mxu0 0
        %448 = vmatprep.subr.bf16.mxu0 0
        %449 = vmatpush1.bf16.msra.mxu0 0
        %450 = vmatprep.subr.bf16.mxu0 0
        %451 = vmatpush1.bf16.msra.mxu0 0
        %452 = vmatprep.subr.bf16.mxu0 0
        %453 = vmatpush1.bf16.msra.mxu0 0
        %454 = vmatprep.subr.bf16.mxu0 0
        %455 = vmatpush1.bf16.msra.mxu0 0
        %456 = vmatprep.subr.bf16.mxu0 0
        %457 = vmatpush1.bf16.msra.mxu0 0
        %458 = vmatprep.subr.bf16.mxu0 0
        %459 = vmatpush1.bf16.msra.mxu0 0
        %460 = vmatprep.subr.bf16.mxu0 0
        %461 = vmatpush1.bf16.msra.mxu0 0
        %462 = vmatprep.subr.bf16.mxu0 0
        %463 = vmatpush1.bf16.msra.mxu0 0
        %464 = vmatprep.subr.bf16.mxu0 0
        %465 = vmatpush1.bf16.msra.mxu0 0
        %466 = vmatprep.subr.bf16.mxu0 0
        %467 = vmatpush1.bf16.msra.mxu0 0
        %468 = vmatprep.subr.bf16.mxu0 0
        %469 = vmatpush1.bf16.msra.mxu0 0
        %470 = vmatprep.subr.bf16.mxu0 0
        %471 = vmatpush1.bf16.msra.mxu0 0
        %472 = vmatprep.mubr.bf16.mxu0 0
        %473 = vmatmul.mubr.bf16.gmra.mrb[0].mxu0 %v438
        %v474 = vpop.f32.mrb[0].mxu0
        %v475 = vadd.f32 0.0, %v474
        %v476 = vpop.f32.mrb[0].mxu0
        %v477 = vpop.f32.mrb[0].mxu0
        %v478 = vadd.f32 0.0, %v477
        %v479 = vpop.f32.mrb[0].mxu0
        %480 = vdwg.mxu0
        %v481 = vrcp.pop %v426
        %v482 = vrcp.pop %v429
        %v483 = vmul.f32 %v475, %v481
        %v484 = vmul.f32 %v478, %v482
        %v485 = vpack.c.bf16 %v484, %v483
        %486 = vst.msk [vmem:[#allocation2] sm:$0xff] %vm363, %v485
        %v487 = vld [vmem:[%s324] sm:$0xf]
        %v488 = vld [vmem:[%s324 + $0x10] sm:$0xf]
        %v489 = vmul.bf16 %v487, 1040203264
        %v490 = vmul.bf16 %v488, 1040203264
        %v491 = vld [vmem:[%s330] sm:$0xf]
        %v492 = vld [vmem:[%s330 + $0x20] sm:$0xf]
        %v493 = vld [vmem:[%s330 + $0x10] sm:$0xf]
        %v494 = vld [vmem:[%s330 + $0x30] sm:$0xf]
        %v497 = vunpack.c.l.b16 %v489
        %v498 = vunpack.c.l.b16 %v490
        %v499 = vpack.c.b16 %v498, %v497
        %500 = vrot.lane.b32.xlu0 %v499, 64
        %v501 = vpop.permute.xlu0 %500
        %v504 = vunpack.c.l.b16 %v491
        %v505 = vunpack.c.l.b16 %v492
        %v506 = vpack.c.b16 %v505, %v504
        %507 = vrot.lane.b32.xlu0 %v506, 64
        %v508 = vpop.permute.xlu0 %507
        %v510 = vsel %vm363, %v501, 0
        %v513 = vsel %vm363, %v508, 0
        %515 = vmatprep.subr.bf16.mxu0 0
        %516 = vmatpush1.bf16.xpose.msra.mxu0 %v513
        %517 = vmatprep.subr.bf16.mxu0 0
        %518 = vmatpush1.bf16.xpose.msra.mxu0 0
        %519 = vmatprep.subr.bf16.mxu0 0
        %520 = vmatpush1.bf16.xpose.msra.mxu0 0
        %521 = vmatprep.subr.bf16.mxu0 0
        %522 = vmatpush1.bf16.xpose.msra.mxu0 0
        %523 = vmatprep.subr.bf16.mxu0 0
        %524 = vmatpush1.bf16.xpose.msra.mxu0 0
        %525 = vmatprep.subr.bf16.mxu0 0
        %526 = vmatpush1.bf16.xpose.msra.mxu0 0
        %527 = vmatprep.subr.bf16.mxu0 0
        %528 = vmatpush1.bf16.xpose.msra.mxu0 0
        %529 = vmatprep.subr.bf16.mxu0 0
        %530 = vmatpush1.bf16.xpose.msra.mxu0 0
        %531 = vmatprep.subr.bf16.mxu0 0
        %532 = vmatpush1.bf16.xpose.msra.mxu0 0
        %533 = vmatprep.subr.bf16.mxu0 0
        %534 = vmatpush1.bf16.xpose.msra.mxu0 0
        %535 = vmatprep.subr.bf16.mxu0 0
        %536 = vmatpush1.bf16.xpose.msra.mxu0 0
        %537 = vmatprep.subr.bf16.mxu0 0
        %538 = vmatpush1.bf16.xpose.msra.mxu0 0
        %539 = vmatprep.subr.bf16.mxu0 0
        %540 = vmatpush1.bf16.xpose.msra.mxu0 0
        %541 = vmatprep.subr.bf16.mxu0 0
        %542 = vmatpush1.bf16.xpose.msra.mxu0 0
        %543 = vmatprep.subr.bf16.mxu0 0
        %544 = vmatpush1.bf16.xpose.msra.mxu0 0
        %545 = vmatprep.subr.bf16.mxu0 0
        %546 = vmatpush1.bf16.xpose.msra.mxu0 0
        %547 = vmatprep.mubr.bf16.mxu0 0
        %548 = vmatmul.mubr.bf16.gmra.mrb[0].mxu0 %v510
        %v549 = vpop.f32.mrb[0].mxu0
        %v550 = vadd.f32 0.0, %v549
        %v551 = vpop.f32.mrb[0].mxu0
        %v552 = vpop.f32.mrb[0].mxu0
        %v553 = vadd.f32 0.0, %v552
        %v554 = vpop.f32.mrb[0].mxu0
        %555 = vdwg.mxu0
        %v556 = vsel %vm411, %v550, -inf
        %557 = vmax.xlane.f32.xlu0 %v556
        %v558 = vpop.xlane.xlu0 %557
        %v559 = vsel %vm411, %v553, -inf
        %560 = vmax.xlane.f32.xlu0 %v559
        %v561 = vpop.xlane.xlu0 %560
        %v562 = vsub.f32 %v550, %v558
        %v563 = vsub.f32 %v553, %v561
        %v564 = vmul.f32 %v562, 1.442695
        %v565 = vpow.pop %v564
        %v566 = vmul.f32 %v563, 1.442695
        %v567 = vpow.pop %v566
        %v568 = vsel %vm411, %v565, 0.0
        %569 = vadd.xlane.f32.xlu0 %v568
        %v570 = vpop.xlane.xlu0 %569
        %v571 = vsel %vm411, %v567, 0.0
        %572 = vadd.xlane.f32.xlu0 %v571
        %v573 = vpop.xlane.xlu0 %572
        %v574 = vpack.c.bf16 %v567, %v565
        %v577 = vunpack.c.l.b16 %v493
        %v578 = vunpack.c.l.b16 %v494
        %v579 = vpack.c.b16 %v578, %v577
        %580 = vrot.lane.b32.xlu0 %v579, 64
        %v581 = vpop.permute.xlu0 %580
        %v584 = vsel %vm411, %v574, 0
        %586 = vmatprep.subr.bf16.mxu0 0
        %587 = vmatpush1.bf16.msra.mxu0 %v581
        %588 = vmatprep.subr.bf16.mxu0 0
        %589 = vmatpush1.bf16.msra.mxu0 0
        %590 = vmatprep.subr.bf16.mxu0 0
        %591 = vmatpush1.bf16.msra.mxu0 0
        %592 = vmatprep.subr.bf16.mxu0 0
        %593 = vmatpush1.bf16.msra.mxu0 0
        %594 = vmatprep.subr.bf16.mxu0 0
        %595 = vmatpush1.bf16.msra.mxu0 0
        %596 = vmatprep.subr.bf16.mxu0 0
        %597 = vmatpush1.bf16.msra.mxu0 0
        %598 = vmatprep.subr.bf16.mxu0 0
        %599 = vmatpush1.bf16.msra.mxu0 0
        %600 = vmatprep.subr.bf16.mxu0 0
        %601 = vmatpush1.bf16.msra.mxu0 0
        %602 = vmatprep.subr.bf16.mxu0 0
        %603 = vmatpush1.bf16.msra.mxu0 0
        %604 = vmatprep.subr.bf16.mxu0 0
        %605 = vmatpush1.bf16.msra.mxu0 0
        %606 = vmatprep.subr.bf16.mxu0 0
        %607 = vmatpush1.bf16.msra.mxu0 0
        %608 = vmatprep.subr.bf16.mxu0 0
        %609 = vmatpush1.bf16.msra.mxu0 0
        %610 = vmatprep.subr.bf16.mxu0 0
        %611 = vmatpush1.bf16.msra.mxu0 0
        %612 = vmatprep.subr.bf16.mxu0 0
        %613 = vmatpush1.bf16.msra.mxu0 0
        %614 = vmatprep.subr.bf16.mxu0 0
        %615 = vmatpush1.bf16.msra.mxu0 0
        %616 = vmatprep.subr.bf16.mxu0 0
        %617 = vmatpush1.bf16.msra.mxu0 0
        %618 = vmatprep.mubr.bf16.mxu0 0
        %619 = vmatmul.mubr.bf16.gmra.mrb[0].mxu0 %v584
        %v620 = vpop.f32.mrb[0].mxu0
        %v621 = vadd.f32 0.0, %v620
        %v622 = vpop.f32.mrb[0].mxu0
        %v623 = vpop.f32.mrb[0].mxu0
        %v624 = vadd.f32 0.0, %v623
        %v625 = vpop.f32.mrb[0].mxu0
        %626 = vdwg.mxu0
        %v627 = vrcp.pop %v570
        %v628 = vrcp.pop %v573
        %v629 = vmul.f32 %v621, %v627
        %v630 = vmul.f32 %v624, %v628
        %v631 = vpack.c.bf16 %v630, %v629
        %633 = vrot.lane.b32.xlu0 %v631, 64
        %v634 = vpop.permute.xlu0 %633
        %vm636 = vcmask 1048064
        %637 = vst.msk [vmem:[#allocation2] sm:$0xff] %vm636, %v634
        %v638 = vld [vmem:[%s324 + $0x4] sm:$0xf]
        %v639 = vld [vmem:[%s324 + $0x14] sm:$0xf]
        %v640 = vmul.bf16 %v638, 1040203264
        %v641 = vmul.bf16 %v639, 1040203264
        %v642 = vld [vmem:[%s330 + $0x4] sm:$0xf]
        %v643 = vld [vmem:[%s330 + $0x24] sm:$0xf]
        %v644 = vld [vmem:[%s330 + $0x14] sm:$0xf]
        %v645 = vld [vmem:[%s330 + $0x34] sm:$0xf]
        %v648 = vunpack.c.l.b16 %v640
        %v649 = vunpack.c.l.b16 %v641
        %v650 = vpack.c.b16 %v649, %v648
        %v653 = vunpack.c.l.b16 %v642
        %v654 = vunpack.c.l.b16 %v643
        %v655 = vpack.c.b16 %v654, %v653
        %v657 = vsel %vm363, %v650, 0
        %v660 = vsel %vm363, %v655, 0
        %662 = vmatprep.subr.bf16.mxu0 0
        %663 = vmatpush1.bf16.xpose.msra.mxu0 %v660
        %664 = vmatprep.subr.bf16.mxu0 0
        %665 = vmatpush1.bf16.xpose.msra.mxu0 0
        %666 = vmatprep.subr.bf16.mxu0 0
        %667 = vmatpush1.bf16.xpose.msra.mxu0 0
        %668 = vmatprep.subr.bf16.mxu0 0
        %669 = vmatpush1.bf16.xpose.msra.mxu0 0
        %670 = vmatprep.subr.bf16.mxu0 0
        %671 = vmatpush1.bf16.xpose.msra.mxu0 0
        %672 = vmatprep.subr.bf16.mxu0 0
        %673 = vmatpush1.bf16.xpose.msra.mxu0 0
        %674 = vmatprep.subr.bf16.mxu0 0
        %675 = vmatpush1.bf16.xpose.msra.mxu0 0
        %676 = vmatprep.subr.bf16.mxu0 0
        %677 = vmatpush1.bf16.xpose.msra.mxu0 0
        %678 = vmatprep.subr.bf16.mxu0 0
        %679 = vmatpush1.bf16.xpose.msra.mxu0 0
        %680 = vmatprep.subr.bf16.mxu0 0
        %681 = vmatpush1.bf16.xpose.msra.mxu0 0
        %682 = vmatprep.subr.bf16.mxu0 0
        %683 = vmatpush1.bf16.xpose.msra.mxu0 0
        %684 = vmatprep.subr.bf16.mxu0 0
        %685 = vmatpush1.bf16.xpose.msra.mxu0 0
        %686 = vmatprep.subr.bf16.mxu0 0
        %687 = vmatpush1.bf16.xpose.msra.mxu0 0
        %688 = vmatprep.subr.bf16.mxu0 0
        %689 = vmatpush1.bf16.xpose.msra.mxu0 0
        %690 = vmatprep.subr.bf16.mxu0 0
        %691 = vmatpush1.bf16.xpose.msra.mxu0 0
        %692 = vmatprep.subr.bf16.mxu0 0
        %693 = vmatpush1.bf16.xpose.msra.mxu0 0
        %694 = vmatprep.mubr.bf16.mxu0 0
        %695 = vmatmul.mubr.bf16.gmra.mrb[0].mxu0 %v657
        %v696 = vpop.f32.mrb[0].mxu0
        %v697 = vadd.f32 0.0, %v696
        %v698 = vpop.f32.mrb[0].mxu0
        %v699 = vpop.f32.mrb[0].mxu0
        %v700 = vadd.f32 0.0, %v699
        %v701 = vpop.f32.mrb[0].mxu0
        %702 = vdwg.mxu0
        %v703 = vsel %vm411, %v697, -inf
        %704 = vmax.xlane.f32.xlu0 %v703
        %v705 = vpop.xlane.xlu0 %704
        %v706 = vsel %vm411, %v700, -inf
        %707 = vmax.xlane.f32.xlu0 %v706
        %v708 = vpop.xlane.xlu0 %707
        %v709 = vsub.f32 %v697, %v705
        %v710 = vsub.f32 %v700, %v708
        %v711 = vmul.f32 %v709, 1.442695
        %v712 = vpow.pop %v711
        %v713 = vmul.f32 %v710, 1.442695
        %v714 = vpow.pop %v713
        %v715 = vsel %vm411, %v712, 0.0
        %716 = vadd.xlane.f32.xlu0 %v715
        %v717 = vpop.xlane.xlu0 %716
        %v718 = vsel %vm411, %v714, 0.0
        %719 = vadd.xlane.f32.xlu0 %v718
        %v720 = vpop.xlane.xlu0 %719
        %v721 = vpack.c.bf16 %v714, %v712
        %v724 = vunpack.c.l.b16 %v644
        %v725 = vunpack.c.l.b16 %v645
        %v726 = vpack.c.b16 %v725, %v724
        %v729 = vsel %vm411, %v721, 0
        %731 = vmatprep.subr.bf16.mxu0 0
        %732 = vmatpush1.bf16.msra.mxu0 %v726
        %733 = vmatprep.subr.bf16.mxu0 0
        %734 = vmatpush1.bf16.msra.mxu0 0
        %735 = vmatprep.subr.bf16.mxu0 0
        %736 = vmatpush1.bf16.msra.mxu0 0
        %737 = vmatprep.subr.bf16.mxu0 0
        %738 = vmatpush1.bf16.msra.mxu0 0
        %739 = vmatprep.subr.bf16.mxu0 0
        %740 = vmatpush1.bf16.msra.mxu0 0
        %741 = vmatprep.subr.bf16.mxu0 0
        %742 = vmatpush1.bf16.msra.mxu0 0
        %743 = vmatprep.subr.bf16.mxu0 0
        %744 = vmatpush1.bf16.msra.mxu0 0
        %745 = vmatprep.subr.bf16.mxu0 0
        %746 = vmatpush1.bf16.msra.mxu0 0
        %747 = vmatprep.subr.bf16.mxu0 0
        %748 = vmatpush1.bf16.msra.mxu0 0
        %749 = vmatprep.subr.bf16.mxu0 0
        %750 = vmatpush1.bf16.msra.mxu0 0
        %751 = vmatprep.subr.bf16.mxu0 0
        %752 = vmatpush1.bf16.msra.mxu0 0
        %753 = vmatprep.subr.bf16.mxu0 0
        %754 = vmatpush1.bf16.msra.mxu0 0
        %755 = vmatprep.subr.bf16.mxu0 0
        %756 = vmatpush1.bf16.msra.mxu0 0
        %757 = vmatprep.subr.bf16.mxu0 0
        %758 = vmatpush1.bf16.msra.mxu0 0
        %759 = vmatprep.subr.bf16.mxu0 0
        %760 = vmatpush1.bf16.msra.mxu0 0
        %761 = vmatprep.subr.bf16.mxu0 0
        %762 = vmatpush1.bf16.msra.mxu0 0
        %763 = vmatprep.mubr.bf16.mxu0 0
        %764 = vmatmul.mubr.bf16.gmra.mrb[0].mxu0 %v729
        %v765 = vpop.f32.mrb[0].mxu0
        %v766 = vadd.f32 0.0, %v765
        %v767 = vpop.f32.mrb[0].mxu0
        %v768 = vpop.f32.mrb[0].mxu0
        %v769 = vadd.f32 0.0, %v768
        %v770 = vpop.f32.mrb[0].mxu0
        %771 = vdwg.mxu0
        %v772 = vrcp.pop %v717
        %v773 = vrcp.pop %v720
        %v774 = vmul.f32 %v766, %v772
        %v775 = vmul.f32 %v769, %v773
        %v776 = vpack.c.bf16 %v775, %v774
        %777 = vst.msk [vmem:[#allocation2 + $0x8] sm:$0xff] %vm363, %v776
        %v778 = vld [vmem:[%s324 + $0x4] sm:$0xf]
        %v779 = vld [vmem:[%s324 + $0x14] sm:$0xf]
        %v780 = vmul.bf16 %v778, 1040203264
        %v781 = vmul.bf16 %v779, 1040203264
        %v782 = vld [vmem:[%s330 + $0x4] sm:$0xf]
        %v783 = vld [vmem:[%s330 + $0x24] sm:$0xf]
        %v784 = vld [vmem:[%s330 + $0x14] sm:$0xf]
        %v785 = vld [vmem:[%s330 + $0x34] sm:$0xf]
        %v788 = vunpack.c.l.b16 %v780
        %v789 = vunpack.c.l.b16 %v781
        %v790 = vpack.c.b16 %v789, %v788
        %791 = vrot.lane.b32.xlu0 %v790, 64
        %v792 = vpop.permute.xlu0 %791
        %v795 = vunpack.c.l.b16 %v782
        %v796 = vunpack.c.l.b16 %v783
        %v797 = vpack.c.b16 %v796, %v795
        %798 = vrot.lane.b32.xlu0 %v797, 64
        %v799 = vpop.permute.xlu0 %798
        %v801 = vsel %vm363, %v792, 0
        %v804 = vsel %vm363, %v799, 0
        %806 = vmatprep.subr.bf16.mxu0 0
        %807 = vmatpush1.bf16.xpose.msra.mxu0 %v804
        %808 = vmatprep.subr.bf16.mxu0 0
        %809 = vmatpush1.bf16.xpose.msra.mxu0 0
        %810 = vmatprep.subr.bf16.mxu0 0
        %811 = vmatpush1.bf16.xpose.msra.mxu0 0
        %812 = vmatprep.subr.bf16.mxu0 0
        %813 = vmatpush1.bf16.xpose.msra.mxu0 0
        %814 = vmatprep.subr.bf16.mxu0 0
        %815 = vmatpush1.bf16.xpose.msra.mxu0 0
        %816 = vmatprep.subr.bf16.mxu0 0
        %817 = vmatpush1.bf16.xpose.msra.mxu0 0
        %818 = vmatprep.subr.bf16.mxu0 0
        %819 = vmatpush1.bf16.xpose.msra.mxu0 0
        %820 = vmatprep.subr.bf16.mxu0 0
        %821 = vmatpush1.bf16.xpose.msra.mxu0 0
        %822 = vmatprep.subr.bf16.mxu0 0
        %823 = vmatpush1.bf16.xpose.msra.mxu0 0
        %824 = vmatprep.subr.bf16.mxu0 0
        %825 = vmatpush1.bf16.xpose.msra.mxu0 0
        %826 = vmatprep.subr.bf16.mxu0 0
        %827 = vmatpush1.bf16.xpose.msra.mxu0 0
        %828 = vmatprep.subr.bf16.mxu0 0
        %829 = vmatpush1.bf16.xpose.msra.mxu0 0
        %830 = vmatprep.subr.bf16.mxu0 0
        %831 = vmatpush1.bf16.xpose.msra.mxu0 0
        %832 = vmatprep.subr.bf16.mxu0 0
        %833 = vmatpush1.bf16.xpose.msra.mxu0 0
        %834 = vmatprep.subr.bf16.mxu0 0
        %835 = vmatpush1.bf16.xpose.msra.mxu0 0
        %836 = vmatprep.subr.bf16.mxu0 0
        %837 = vmatpush1.bf16.xpose.msra.mxu0 0
        %838 = vmatprep.mubr.bf16.mxu0 0
        %839 = vmatmul.mubr.bf16.gmra.mrb[0].mxu0 %v801
        %v840 = vpop.f32.mrb[0].mxu0
        %v841 = vadd.f32 0.0, %v840
        %v842 = vpop.f32.mrb[0].mxu0
        %v843 = vpop.f32.mrb[0].mxu0
        %v844 = vadd.f32 0.0, %v843
        %v845 = vpop.f32.mrb[0].mxu0
        %846 = vdwg.mxu0
        %v847 = vsel %vm411, %v841, -inf
        %848 = vmax.xlane.f32.xlu0 %v847
        %v849 = vpop.xlane.xlu0 %848
        %v850 = vsel %vm411, %v844, -inf
        %851 = vmax.xlane.f32.xlu0 %v850
        %v852 = vpop.xlane.xlu0 %851
        %v853 = vsub.f32 %v841, %v849
        %v854 = vsub.f32 %v844, %v852
        %v855 = vmul.f32 %v853, 1.442695
        %v856 = vpow.pop %v855
        %v857 = vmul.f32 %v854, 1.442695
        %v858 = vpow.pop %v857
        %v859 = vsel %vm411, %v856, 0.0
        %860 = vadd.xlane.f32.xlu0 %v859
        %v861 = vpop.xlane.xlu0 %860
        %v862 = vsel %vm411, %v858, 0.0
        %863 = vadd.xlane.f32.xlu0 %v862
        %v864 = vpop.xlane.xlu0 %863
        %v865 = vpack.c.bf16 %v858, %v856
        %v868 = vunpack.c.l.b16 %v784
        %v869 = vunpack.c.l.b16 %v785
        %v870 = vpack.c.b16 %v869, %v868
        %871 = vrot.lane.b32.xlu0 %v870, 64
        %v872 = vpop.permute.xlu0 %871
        %v875 = vsel %vm411, %v865, 0
        %877 = vmatprep.subr.bf16.mxu0 0
        %878 = vmatpush1.bf16.msra.mxu0 %v872
        %879 = vmatprep.subr.bf16.mxu0 0
        %880 = vmatpush1.bf16.msra.mxu0 0
        %881 = vmatprep.subr.bf16.mxu0 0
        %882 = vmatpush1.bf16.msra.mxu0 0
        %883 = vmatprep.subr.bf16.mxu0 0
        %884 = vmatpush1.bf16.msra.mxu0 0
        %885 = vmatprep.subr.bf16.mxu0 0
        %886 = vmatpush1.bf16.msra.mxu0 0
        %887 = vmatprep.subr.bf16.mxu0 0
        %888 = vmatpush1.bf16.msra.mxu0 0
        %889 = vmatprep.subr.bf16.mxu0 0
        %890 = vmatpush1.bf16.msra.mxu0 0
        %891 = vmatprep.subr.bf16.mxu0 0
        %892 = vmatpush1.bf16.msra.mxu0 0
        %893 = vmatprep.subr.bf16.mxu0 0
        %894 = vmatpush1.bf16.msra.mxu0 0
        %895 = vmatprep.subr.bf16.mxu0 0
        %896 = vmatpush1.bf16.msra.mxu0 0
        %897 = vmatprep.subr.bf16.mxu0 0
        %898 = vmatpush1.bf16.msra.mxu0 0
        %899 = vmatprep.subr.bf16.mxu0 0
        %900 = vmatpush1.bf16.msra.mxu0 0
        %901 = vmatprep.subr.bf16.mxu0 0
        %902 = vmatpush1.bf16.msra.mxu0 0
        %903 = vmatprep.subr.bf16.mxu0 0
        %904 = vmatpush1.bf16.msra.mxu0 0
        %905 = vmatprep.subr.bf16.mxu0 0
        %906 = vmatpush1.bf16.msra.mxu0 0
        %907 = vmatprep.subr.bf16.mxu0 0
        %908 = vmatpush1.bf16.msra.mxu0 0
        %909 = vmatprep.mubr.bf16.mxu0 0
        %910 = vmatmul.mubr.bf16.gmra.mrb[0].mxu0 %v875
        %v911 = vpop.f32.mrb[0].mxu0
        %v912 = vadd.f32 0.0, %v911
        %v913 = vpop.f32.mrb[0].mxu0
        %v914 = vpop.f32.mrb[0].mxu0
        %v915 = vadd.f32 0.0, %v914
        %v916 = vpop.f32.mrb[0].mxu0
        %917 = vdwg.mxu0
        %v918 = vrcp.pop %v861
        %v919 = vrcp.pop %v864
        %v920 = vmul.f32 %v912, %v918
        %v921 = vmul.f32 %v915, %v919
        %v922 = vpack.c.bf16 %v921, %v920
        %924 = vrot.lane.b32.xlu0 %v922, 64
        %v925 = vpop.permute.xlu0 %924
        %927 = vst.msk [vmem:[#allocation2 + $0x8] sm:$0xff] %vm636, %v925
        %v928 = vld [vmem:[%s324 + $0x8] sm:$0xf]
        %v929 = vld [vmem:[%s324 + $0x18] sm:$0xf]
        %v930 = vmul.bf16 %v928, 1040203264
        %v931 = vmul.bf16 %v929, 1040203264
        %v932 = vld [vmem:[%s330 + $0x8] sm:$0xf]
        %v933 = vld [vmem:[%s330 + $0x28] sm:$0xf]
        %v934 = vld [vmem:[%s330 + $0x18] sm:$0xf]
        %v935 = vld [vmem:[%s330 + $0x38] sm:$0xf]
        %v938 = vunpack.c.l.b16 %v930
        %v939 = vunpack.c.l.b16 %v931
        %v940 = vpack.c.b16 %v939, %v938
        %v943 = vunpack.c.l.b16 %v932
        %v944 = vunpack.c.l.b16 %v933
        %v945 = vpack.c.b16 %v944, %v943
        %v947 = vsel %vm363, %v940, 0
        %v950 = vsel %vm363, %v945, 0
        %952 = vmatprep.subr.bf16.mxu0 0
        %953 = vmatpush1.bf16.xpose.msra.mxu0 %v950
        %954 = vmatprep.subr.bf16.mxu0 0
        %955 = vmatpush1.bf16.xpose.msra.mxu0 0
        %956 = vmatprep.subr.bf16.mxu0 0
        %957 = vmatpush1.bf16.xpose.msra.mxu0 0
        %958 = vmatprep.subr.bf16.mxu0 0
        %959 = vmatpush1.bf16.xpose.msra.mxu0 0
        %960 = vmatprep.subr.bf16.mxu0 0
        %961 = vmatpush1.bf16.xpose.msra.mxu0 0
        %962 = vmatprep.subr.bf16.mxu0 0
        %963 = vmatpush1.bf16.xpose.msra.mxu0 0
        %964 = vmatprep.subr.bf16.mxu0 0
        %965 = vmatpush1.bf16.xpose.msra.mxu0 0
        %966 = vmatprep.subr.bf16.mxu0 0
        %967 = vmatpush1.bf16.xpose.msra.mxu0 0
        %968 = vmatprep.subr.bf16.mxu0 0
        %969 = vmatpush1.bf16.xpose.msra.mxu0 0
        %970 = vmatprep.subr.bf16.mxu0 0
        %971 = vmatpush1.bf16.xpose.msra.mxu0 0
        %972 = vmatprep.subr.bf16.mxu0 0
        %973 = vmatpush1.bf16.xpose.msra.mxu0 0
        %974 = vmatprep.subr.bf16.mxu0 0
        %975 = vmatpush1.bf16.xpose.msra.mxu0 0
        %976 = vmatprep.subr.bf16.mxu0 0
        %977 = vmatpush1.bf16.xpose.msra.mxu0 0
        %978 = vmatprep.subr.bf16.mxu0 0
        %979 = vmatpush1.bf16.xpose.msra.mxu0 0
        %980 = vmatprep.subr.bf16.mxu0 0
        %981 = vmatpush1.bf16.xpose.msra.mxu0 0
        %982 = vmatprep.subr.bf16.mxu0 0
        %983 = vmatpush1.bf16.xpose.msra.mxu0 0
        %984 = vmatprep.mubr.bf16.mxu0 0
        %985 = vmatmul.mubr.bf16.gmra.mrb[0].mxu0 %v947
        %v986 = vpop.f32.mrb[0].mxu0
        %v987 = vadd.f32 0.0, %v986
        %v988 = vpop.f32.mrb[0].mxu0
        %v989 = vpop.f32.mrb[0].mxu0
        %v990 = vadd.f32 0.0, %v989
        %v991 = vpop.f32.mrb[0].mxu0
        %992 = vdwg.mxu0
        %v993 = vsel %vm411, %v987, -inf
        %994 = vmax.xlane.f32.xlu0 %v993
        %v995 = vpop.xlane.xlu0 %994
        %v996 = vsel %vm411, %v990, -inf
        %997 = vmax.xlane.f32.xlu0 %v996
        %v998 = vpop.xlane.xlu0 %997
        %v999 = vsub.f32 %v987, %v995
        %v1000 = vsub.f32 %v990, %v998
        %v1001 = vmul.f32 %v999, 1.442695
        %v1002 = vpow.pop %v1001
        %v1003 = vmul.f32 %v1000, 1.442695
        %v1004 = vpow.pop %v1003
        %v1005 = vsel %vm411, %v1002, 0.0
        %1006 = vadd.xlane.f32.xlu0 %v1005
        %v1007 = vpop.xlane.xlu0 %1006
        %v1008 = vsel %vm411, %v1004, 0.0
        %1009 = vadd.xlane.f32.xlu0 %v1008
        %v1010 = vpop.xlane.xlu0 %1009
        %v1011 = vpack.c.bf16 %v1004, %v1002
        %v1014 = vunpack.c.l.b16 %v934
        %v1015 = vunpack.c.l.b16 %v935
        %v1016 = vpack.c.b16 %v1015, %v1014
        %v1019 = vsel %vm411, %v1011, 0
        %1021 = vmatprep.subr.bf16.mxu0 0
        %1022 = vmatpush1.bf16.msra.mxu0 %v1016
        %1023 = vmatprep.subr.bf16.mxu0 0
        %1024 = vmatpush1.bf16.msra.mxu0 0
        %1025 = vmatprep.subr.bf16.mxu0 0
        %1026 = vmatpush1.bf16.msra.mxu0 0
        %1027 = vmatprep.subr.bf16.mxu0 0
        %1028 = vmatpush1.bf16.msra.mxu0 0
        %1029 = vmatprep.subr.bf16.mxu0 0
        %1030 = vmatpush1.bf16.msra.mxu0 0
        %1031 = vmatprep.subr.bf16.mxu0 0
        %1032 = vmatpush1.bf16.msra.mxu0 0
        %1033 = vmatprep.subr.bf16.mxu0 0
        %1034 = vmatpush1.bf16.msra.mxu0 0
        %1035 = vmatprep.subr.bf16.mxu0 0
        %1036 = vmatpush1.bf16.msra.mxu0 0
        %1037 = vmatprep.subr.bf16.mxu0 0
        %1038 = vmatpush1.bf16.msra.mxu0 0
        %1039 = vmatprep.subr.bf16.mxu0 0
        %1040 = vmatpush1.bf16.msra.mxu0 0
        %1041 = vmatprep.subr.bf16.mxu0 0
        %1042 = vmatpush1.bf16.msra.mxu0 0
        %1043 = vmatprep.subr.bf16.mxu0 0
        %1044 = vmatpush1.bf16.msra.mxu0 0
        %1045 = vmatprep.subr.bf16.mxu0 0
        %1046 = vmatpush1.bf16.msra.mxu0 0
        %1047 = vmatprep.subr.bf16.mxu0 0
        %1048 = vmatpush1.bf16.msra.mxu0 0
        %1049 = vmatprep.subr.bf16.mxu0 0
        %1050 = vmatpush1.bf16.msra.mxu0 0
        %1051 = vmatprep.subr.bf16.mxu0 0
        %1052 = vmatpush1.bf16.msra.mxu0 0
        %1053 = vmatprep.mubr.bf16.mxu0 0
        %1054 = vmatmul.mubr.bf16.gmra.mrb[0].mxu0 %v1019
        %v1055 = vpop.f32.mrb[0].mxu0
        %v1056 = vadd.f32 0.0, %v1055
        %v1057 = vpop.f32.mrb[0].mxu0
        %v1058 = vpop.f32.mrb[0].mxu0
        %v1059 = vadd.f32 0.0, %v1058
        %v1060 = vpop.f32.mrb[0].mxu0
        %1061 = vdwg.mxu0
        %v1062 = vrcp.pop %v1007
        %v1063 = vrcp.pop %v1010
        %v1064 = vmul.f32 %v1056, %v1062
        %v1065 = vmul.f32 %v1059, %v1063
        %v1066 = vpack.c.bf16 %v1065, %v1064
        %1067 = vst.msk [vmem:[#allocation2 + $0x10] sm:$0xff] %vm363, %v1066
        %v1068 = vld [vmem:[%s324 + $0x8] sm:$0xf]
        %v1069 = vld [vmem:[%s324 + $0x18] sm:$0xf]
        %v1070 = vmul.bf16 %v1068, 1040203264
        %v1071 = vmul.bf16 %v1069, 1040203264
        %v1072 = vld [vmem:[%s330 + $0x8] sm:$0xf]
        %v1073 = vld [vmem:[%s330 + $0x28] sm:$0xf]
        %v1074 = vld [vmem:[%s330 + $0x18] sm:$0xf]
        %v1075 = vld [vmem:[%s330 + $0x38] sm:$0xf]
        %v1078 = vunpack.c.l.b16 %v1070
        %v1079 = vunpack.c.l.b16 %v1071
        %v1080 = vpack.c.b16 %v1079, %v1078
        %1081 = vrot.lane.b32.xlu0 %v1080, 64
        %v1082 = vpop.permute.xlu0 %1081
        %v1085 = vunpack.c.l.b16 %v1072
        %v1086 = vunpack.c.l.b16 %v1073
        %v1087 = vpack.c.b16 %v1086, %v1085
        %1088 = vrot.lane.b32.xlu0 %v1087, 64
        %v1089 = vpop.permute.xlu0 %1088
        %v1091 = vsel %vm363, %v1082, 0
        %v1094 = vsel %vm363, %v1089, 0
        %1096 = vmatprep.subr.bf16.mxu0 0
        %1097 = vmatpush1.bf16.xpose.msra.mxu0 %v1094
        %1098 = vmatprep.subr.bf16.mxu0 0
        %1099 = vmatpush1.bf16.xpose.msra.mxu0 0
        %1100 = vmatprep.subr.bf16.mxu0 0
        %1101 = vmatpush1.bf16.xpose.msra.mxu0 0
        %1102 = vmatprep.subr.bf16.mxu0 0
        %1103 = vmatpush1.bf16.xpose.msra.mxu0 0
        %1104 = vmatprep.subr.bf16.mxu0 0
        %1105 = vmatpush1.bf16.xpose.msra.mxu0 0
        %1106 = vmatprep.subr.bf16.mxu0 0
        %1107 = vmatpush1.bf16.xpose.msra.mxu0 0
        %1108 = vmatprep.subr.bf16.mxu0 0
        %1109 = vmatpush1.bf16.xpose.msra.mxu0 0
        %1110 = vmatprep.subr.bf16.mxu0 0
        %1111 = vmatpush1.bf16.xpose.msra.mxu0 0
        %1112 = vmatprep.subr.bf16.mxu0 0
        %1113 = vmatpush1.bf16.xpose.msra.mxu0 0
        %1114 = vmatprep.subr.bf16.mxu0 0
        %1115 = vmatpush1.bf16.xpose.msra.mxu0 0
        %1116 = vmatprep.subr.bf16.mxu0 0
        %1117 = vmatpush1.bf16.xpose.msra.mxu0 0
        %1118 = vmatprep.subr.bf16.mxu0 0
        %1119 = vmatpush1.bf16.xpose.msra.mxu0 0
        %1120 = vmatprep.subr.bf16.mxu0 0
        %1121 = vmatpush1.bf16.xpose.msra.mxu0 0
        %1122 = vmatprep.subr.bf16.mxu0 0
        %1123 = vmatpush1.bf16.xpose.msra.mxu0 0
        %1124 = vmatprep.subr.bf16.mxu0 0
        %1125 = vmatpush1.bf16.xpose.msra.mxu0 0
        %1126 = vmatprep.subr.bf16.mxu0 0
        %1127 = vmatpush1.bf16.xpose.msra.mxu0 0
        %1128 = vmatprep.mubr.bf16.mxu0 0
        %1129 = vmatmul.mubr.bf16.gmra.mrb[0].mxu0 %v1091
        %v1130 = vpop.f32.mrb[0].mxu0
        %v1131 = vadd.f32 0.0, %v1130
        %v1132 = vpop.f32.mrb[0].mxu0
        %v1133 = vpop.f32.mrb[0].mxu0
        %v1134 = vadd.f32 0.0, %v1133
        %v1135 = vpop.f32.mrb[0].mxu0
        %1136 = vdwg.mxu0
        %v1137 = vsel %vm411, %v1131, -inf
        %1138 = vmax.xlane.f32.xlu0 %v1137
        %v1139 = vpop.xlane.xlu0 %1138
        %v1140 = vsel %vm411, %v1134, -inf
        %1141 = vmax.xlane.f32.xlu0 %v1140
        %v1142 = vpop.xlane.xlu0 %1141
        %v1143 = vsub.f32 %v1131, %v1139
        %v1144 = vsub.f32 %v1134, %v1142
        %v1145 = vmul.f32 %v1143, 1.442695
        %v1146 = vpow.pop %v1145
        %v1147 = vmul.f32 %v1144, 1.442695
        %v1148 = vpow.pop %v1147
        %v1149 = vsel %vm411, %v1146, 0.0
        %1150 = vadd.xlane.f32.xlu0 %v1149
        %v1151 = vpop.xlane.xlu0 %1150
        %v1152 = vsel %vm411, %v1148, 0.0
        %1153 = vadd.xlane.f32.xlu0 %v1152
        %v1154 = vpop.xlane.xlu0 %1153
        %v1155 = vpack.c.bf16 %v1148, %v1146
        %v1158 = vunpack.c.l.b16 %v1074
        %v1159 = vunpack.c.l.b16 %v1075
        %v1160 = vpack.c.b16 %v1159, %v1158
        %1161 = vrot.lane.b32.xlu0 %v1160, 64
        %v1162 = vpop.permute.xlu0 %1161
        %v1165 = vsel %vm411, %v1155, 0
        %1167 = vmatprep.subr.bf16.mxu0 0
        %1168 = vmatpush1.bf16.msra.mxu0 %v1162
        %1169 = vmatprep.subr.bf16.mxu0 0
        %1170 = vmatpush1.bf16.msra.mxu0 0
        %1171 = vmatprep.subr.bf16.mxu0 0
        %1172 = vmatpush1.bf16.msra.mxu0 0
        %1173 = vmatprep.subr.bf16.mxu0 0
        %1174 = vmatpush1.bf16.msra.mxu0 0
        %1175 = vmatprep.subr.bf16.mxu0 0
        %1176 = vmatpush1.bf16.msra.mxu0 0
        %1177 = vmatprep.subr.bf16.mxu0 0
        %1178 = vmatpush1.bf16.msra.mxu0 0
        %1179 = vmatprep.subr.bf16.mxu0 0
        %1180 = vmatpush1.bf16.msra.mxu0 0
        %1181 = vmatprep.subr.bf16.mxu0 0
        %1182 = vmatpush1.bf16.msra.mxu0 0
        %1183 = vmatprep.subr.bf16.mxu0 0
        %1184 = vmatpush1.bf16.msra.mxu0 0
        %1185 = vmatprep.subr.bf16.mxu0 0
        %1186 = vmatpush1.bf16.msra.mxu0 0
        %1187 = vmatprep.subr.bf16.mxu0 0
        %1188 = vmatpush1.bf16.msra.mxu0 0
        %1189 = vmatprep.subr.bf16.mxu0 0
        %1190 = vmatpush1.bf16.msra.mxu0 0
        %1191 = vmatprep.subr.bf16.mxu0 0
        %1192 = vmatpush1.bf16.msra.mxu0 0
        %1193 = vmatprep.subr.bf16.mxu0 0
        %1194 = vmatpush1.bf16.msra.mxu0 0
        %1195 = vmatprep.subr.bf16.mxu0 0
        %1196 = vmatpush1.bf16.msra.mxu0 0
        %1197 = vmatprep.subr.bf16.mxu0 0
        %1198 = vmatpush1.bf16.msra.mxu0 0
        %1199 = vmatprep.mubr.bf16.mxu0 0
        %1200 = vmatmul.mubr.bf16.gmra.mrb[0].mxu0 %v1165
        %v1201 = vpop.f32.mrb[0].mxu0
        %v1202 = vadd.f32 0.0, %v1201
        %v1203 = vpop.f32.mrb[0].mxu0
        %v1204 = vpop.f32.mrb[0].mxu0
        %v1205 = vadd.f32 0.0, %v1204
        %v1206 = vpop.f32.mrb[0].mxu0
        %1207 = vdwg.mxu0
        %v1208 = vrcp.pop %v1151
        %v1209 = vrcp.pop %v1154
        %v1210 = vmul.f32 %v1202, %v1208
        %v1211 = vmul.f32 %v1205, %v1209
        %v1212 = vpack.c.bf16 %v1211, %v1210
        %1214 = vrot.lane.b32.xlu0 %v1212, 64
        %v1215 = vpop.permute.xlu0 %1214
        %1217 = vst.msk [vmem:[#allocation2 + $0x10] sm:$0xff] %vm636, %v1215
        %v1218 = vld [vmem:[%s324 + $0xc] sm:$0xf]
        %v1219 = vld [vmem:[%s324 + $0x1c] sm:$0xf]
        %v1220 = vmul.bf16 %v1218, 1040203264
        %v1221 = vmul.bf16 %v1219, 1040203264
        %v1222 = vld [vmem:[%s330 + $0xc] sm:$0xf]
        %v1223 = vld [vmem:[%s330 + $0x2c] sm:$0xf]
        %v1224 = vld [vmem:[%s330 + $0x1c] sm:$0xf]
        %v1225 = vld [vmem:[%s330 + $0x3c] sm:$0xf]
        %v1228 = vunpack.c.l.b16 %v1220
        %v1229 = vunpack.c.l.b16 %v1221
        %v1230 = vpack.c.b16 %v1229, %v1228
        %v1233 = vunpack.c.l.b16 %v1222
        %v1234 = vunpack.c.l.b16 %v1223
        %v1235 = vpack.c.b16 %v1234, %v1233
        %v1237 = vsel %vm363, %v1230, 0
        %v1240 = vsel %vm363, %v1235, 0
        %1242 = vmatprep.subr.bf16.mxu0 0
        %1243 = vmatpush1.bf16.xpose.msra.mxu0 %v1240
        %1244 = vmatprep.subr.bf16.mxu0 0
        %1245 = vmatpush1.bf16.xpose.msra.mxu0 0
        %1246 = vmatprep.subr.bf16.mxu0 0
        %1247 = vmatpush1.bf16.xpose.msra.mxu0 0
        %1248 = vmatprep.subr.bf16.mxu0 0
        %1249 = vmatpush1.bf16.xpose.msra.mxu0 0
        %1250 = vmatprep.subr.bf16.mxu0 0
        %1251 = vmatpush1.bf16.xpose.msra.mxu0 0
        %1252 = vmatprep.subr.bf16.mxu0 0
        %1253 = vmatpush1.bf16.xpose.msra.mxu0 0
        %1254 = vmatprep.subr.bf16.mxu0 0
        %1255 = vmatpush1.bf16.xpose.msra.mxu0 0
        %1256 = vmatprep.subr.bf16.mxu0 0
        %1257 = vmatpush1.bf16.xpose.msra.mxu0 0
        %1258 = vmatprep.subr.bf16.mxu0 0
        %1259 = vmatpush1.bf16.xpose.msra.mxu0 0
        %1260 = vmatprep.subr.bf16.mxu0 0
        %1261 = vmatpush1.bf16.xpose.msra.mxu0 0
        %1262 = vmatprep.subr.bf16.mxu0 0
        %1263 = vmatpush1.bf16.xpose.msra.mxu0 0
        %1264 = vmatprep.subr.bf16.mxu0 0
        %1265 = vmatpush1.bf16.xpose.msra.mxu0 0
        %1266 = vmatprep.subr.bf16.mxu0 0
        %1267 = vmatpush1.bf16.xpose.msra.mxu0 0
        %1268 = vmatprep.subr.bf16.mxu0 0
        %1269 = vmatpush1.bf16.xpose.msra.mxu0 0
        %1270 = vmatprep.subr.bf16.mxu0 0
        %1271 = vmatpush1.bf16.xpose.msra.mxu0 0
        %1272 = vmatprep.subr.bf16.mxu0 0
        %1273 = vmatpush1.bf16.xpose.msra.mxu0 0
        %1274 = vmatprep.mubr.bf16.mxu0 0
        %1275 = vmatmul.mubr.bf16.gmra.mrb[0].mxu0 %v1237
        %v1276 = vpop.f32.mrb[0].mxu0
        %v1277 = vadd.f32 0.0, %v1276
        %v1278 = vpop.f32.mrb[0].mxu0
        %v1279 = vpop.f32.mrb[0].mxu0
        %v1280 = vadd.f32 0.0, %v1279
        %v1281 = vpop.f32.mrb[0].mxu0
        %1282 = vdwg.mxu0
        %v1283 = vsel %vm411, %v1277, -inf
        %1284 = vmax.xlane.f32.xlu0 %v1283
        %v1285 = vpop.xlane.xlu0 %1284
        %v1286 = vsel %vm411, %v1280, -inf
        %1287 = vmax.xlane.f32.xlu0 %v1286
        %v1288 = vpop.xlane.xlu0 %1287
        %v1289 = vsub.f32 %v1277, %v1285
        %v1290 = vsub.f32 %v1280, %v1288
        %v1291 = vmul.f32 %v1289, 1.442695
        %v1292 = vpow.pop %v1291
        %v1293 = vmul.f32 %v1290, 1.442695
        %v1294 = vpow.pop %v1293
        %v1295 = vsel %vm411, %v1292, 0.0
        %1296 = vadd.xlane.f32.xlu0 %v1295
        %v1297 = vpop.xlane.xlu0 %1296
        %v1298 = vsel %vm411, %v1294, 0.0
        %1299 = vadd.xlane.f32.xlu0 %v1298
        %v1300 = vpop.xlane.xlu0 %1299
        %v1301 = vpack.c.bf16 %v1294, %v1292
        %v1304 = vunpack.c.l.b16 %v1224
        %v1305 = vunpack.c.l.b16 %v1225
        %v1306 = vpack.c.b16 %v1305, %v1304
        %v1309 = vsel %vm411, %v1301, 0
        %1311 = vmatprep.subr.bf16.mxu0 0
        %1312 = vmatpush1.bf16.msra.mxu0 %v1306
        %1313 = vmatprep.subr.bf16.mxu0 0
        %1314 = vmatpush1.bf16.msra.mxu0 0
        %1315 = vmatprep.subr.bf16.mxu0 0
        %1316 = vmatpush1.bf16.msra.mxu0 0
        %1317 = vmatprep.subr.bf16.mxu0 0
        %1318 = vmatpush1.bf16.msra.mxu0 0
        %1319 = vmatprep.subr.bf16.mxu0 0
        %1320 = vmatpush1.bf16.msra.mxu0 0
        %1321 = vmatprep.subr.bf16.mxu0 0
        %1322 = vmatpush1.bf16.msra.mxu0 0
        %1323 = vmatprep.subr.bf16.mxu0 0
        %1324 = vmatpush1.bf16.msra.mxu0 0
        %1325 = vmatprep.subr.bf16.mxu0 0
        %1326 = vmatpush1.bf16.msra.mxu0 0
        %1327 = vmatprep.subr.bf16.mxu0 0
        %1328 = vmatpush1.bf16.msra.mxu0 0
        %1329 = vmatprep.subr.bf16.mxu0 0
        %1330 = vmatpush1.bf16.msra.mxu0 0
        %1331 = vmatprep.subr.bf16.mxu0 0
        %1332 = vmatpush1.bf16.msra.mxu0 0
        %1333 = vmatprep.subr.bf16.mxu0 0
        %1334 = vmatpush1.bf16.msra.mxu0 0
        %1335 = vmatprep.subr.bf16.mxu0 0
        %1336 = vmatpush1.bf16.msra.mxu0 0
        %1337 = vmatprep.subr.bf16.mxu0 0
        %1338 = vmatpush1.bf16.msra.mxu0 0
        %1339 = vmatprep.subr.bf16.mxu0 0
        %1340 = vmatpush1.bf16.msra.mxu0 0
        %1341 = vmatprep.subr.bf16.mxu0 0
        %1342 = vmatpush1.bf16.msra.mxu0 0
        %1343 = vmatprep.mubr.bf16.mxu0 0
        %1344 = vmatmul.mubr.bf16.gmra.mrb[0].mxu0 %v1309
        %v1345 = vpop.f32.mrb[0].mxu0
        %v1346 = vadd.f32 0.0, %v1345
        %v1347 = vpop.f32.mrb[0].mxu0
        %v1348 = vpop.f32.mrb[0].mxu0
        %v1349 = vadd.f32 0.0, %v1348
        %v1350 = vpop.f32.mrb[0].mxu0
        %1351 = vdwg.mxu0
        %v1352 = vrcp.pop %v1297
        %v1353 = vrcp.pop %v1300
        %v1354 = vmul.f32 %v1346, %v1352
        %v1355 = vmul.f32 %v1349, %v1353
        %v1356 = vpack.c.bf16 %v1355, %v1354
        %1357 = vst.msk [vmem:[#allocation2 + $0x18] sm:$0xff] %vm363, %v1356
        %v1358 = vld [vmem:[%s324 + $0xc] sm:$0xf]
        %v1359 = vld [vmem:[%s324 + $0x1c] sm:$0xf]
        %v1360 = vmul.bf16 %v1358, 1040203264
        %v1361 = vmul.bf16 %v1359, 1040203264
        %v1362 = vld [vmem:[%s330 + $0xc] sm:$0xf]
        %v1363 = vld [vmem:[%s330 + $0x2c] sm:$0xf]
        %v1364 = vld [vmem:[%s330 + $0x1c] sm:$0xf]
        %v1365 = vld [vmem:[%s330 + $0x3c] sm:$0xf]
        %v1368 = vunpack.c.l.b16 %v1360
        %v1369 = vunpack.c.l.b16 %v1361
        %v1370 = vpack.c.b16 %v1369, %v1368
        %1371 = vrot.lane.b32.xlu0 %v1370, 64
        %v1372 = vpop.permute.xlu0 %1371
        %v1375 = vunpack.c.l.b16 %v1362
        %v1376 = vunpack.c.l.b16 %v1363
        %v1377 = vpack.c.b16 %v1376, %v1375
        %1378 = vrot.lane.b32.xlu0 %v1377, 64
        %v1379 = vpop.permute.xlu0 %1378
        %v1381 = vsel %vm363, %v1372, 0
        %v1384 = vsel %vm363, %v1379, 0
        %1386 = vmatprep.subr.bf16.mxu0 0
        %1387 = vmatpush1.bf16.xpose.msra.mxu0 %v1384
        %1388 = vmatprep.subr.bf16.mxu0 0
        %1389 = vmatpush1.bf16.xpose.msra.mxu0 0
        %1390 = vmatprep.subr.bf16.mxu0 0
        %1391 = vmatpush1.bf16.xpose.msra.mxu0 0
        %1392 = vmatprep.subr.bf16.mxu0 0
        %1393 = vmatpush1.bf16.xpose.msra.mxu0 0
        %1394 = vmatprep.subr.bf16.mxu0 0
        %1395 = vmatpush1.bf16.xpose.msra.mxu0 0
        %1396 = vmatprep.subr.bf16.mxu0 0
        %1397 = vmatpush1.bf16.xpose.msra.mxu0 0
        %1398 = vmatprep.subr.bf16.mxu0 0
        %1399 = vmatpush1.bf16.xpose.msra.mxu0 0
        %1400 = vmatprep.subr.bf16.mxu0 0
        %1401 = vmatpush1.bf16.xpose.msra.mxu0 0
        %1402 = vmatprep.subr.bf16.mxu0 0
        %1403 = vmatpush1.bf16.xpose.msra.mxu0 0
        %1404 = vmatprep.subr.bf16.mxu0 0
        %1405 = vmatpush1.bf16.xpose.msra.mxu0 0
        %1406 = vmatprep.subr.bf16.mxu0 0
        %1407 = vmatpush1.bf16.xpose.msra.mxu0 0
        %1408 = vmatprep.subr.bf16.mxu0 0
        %1409 = vmatpush1.bf16.xpose.msra.mxu0 0
        %1410 = vmatprep.subr.bf16.mxu0 0
        %1411 = vmatpush1.bf16.xpose.msra.mxu0 0
        %1412 = vmatprep.subr.bf16.mxu0 0
        %1413 = vmatpush1.bf16.xpose.msra.mxu0 0
        %1414 = vmatprep.subr.bf16.mxu0 0
        %1415 = vmatpush1.bf16.xpose.msra.mxu0 0
        %1416 = vmatprep.subr.bf16.mxu0 0
        %1417 = vmatpush1.bf16.xpose.msra.mxu0 0
        %1418 = vmatprep.mubr.bf16.mxu0 0
        %1419 = vmatmul.mubr.bf16.gmra.mrb[0].mxu0 %v1381
        %v1420 = vpop.f32.mrb[0].mxu0
        %v1421 = vadd.f32 0.0, %v1420
        %v1422 = vpop.f32.mrb[0].mxu0
        %v1423 = vpop.f32.mrb[0].mxu0
        %v1424 = vadd.f32 0.0, %v1423
        %v1425 = vpop.f32.mrb[0].mxu0
        %1426 = vdwg.mxu0
        %v1427 = vsel %vm411, %v1421, -inf
        %1428 = vmax.xlane.f32.xlu0 %v1427
        %v1429 = vpop.xlane.xlu0 %1428
        %v1430 = vsel %vm411, %v1424, -inf
        %1431 = vmax.xlane.f32.xlu0 %v1430
        %v1432 = vpop.xlane.xlu0 %1431
        %v1433 = vsub.f32 %v1421, %v1429
        %v1434 = vsub.f32 %v1424, %v1432
        %v1435 = vmul.f32 %v1433, 1.442695
        %v1436 = vpow.pop %v1435
        %v1437 = vmul.f32 %v1434, 1.442695
        %v1438 = vpow.pop %v1437
        %v1439 = vsel %vm411, %v1436, 0.0
        %1440 = vadd.xlane.f32.xlu0 %v1439
        %v1441 = vpop.xlane.xlu0 %1440
        %v1442 = vsel %vm411, %v1438, 0.0
        %1443 = vadd.xlane.f32.xlu0 %v1442
        %v1444 = vpop.xlane.xlu0 %1443
        %v1445 = vpack.c.bf16 %v1438, %v1436
        %v1448 = vunpack.c.l.b16 %v1364
        %v1449 = vunpack.c.l.b16 %v1365
        %v1450 = vpack.c.b16 %v1449, %v1448
        %1451 = vrot.lane.b32.xlu0 %v1450, 64
        %v1452 = vpop.permute.xlu0 %1451
        %v1455 = vsel %vm411, %v1445, 0
        %1457 = vmatprep.subr.bf16.mxu0 0
        %1458 = vmatpush1.bf16.msra.mxu0 %v1452
        %1459 = vmatprep.subr.bf16.mxu0 0
        %1460 = vmatpush1.bf16.msra.mxu0 0
        %1461 = vmatprep.subr.bf16.mxu0 0
        %1462 = vmatpush1.bf16.msra.mxu0 0
        %1463 = vmatprep.subr.bf16.mxu0 0
        %1464 = vmatpush1.bf16.msra.mxu0 0
        %1465 = vmatprep.subr.bf16.mxu0 0
        %1466 = vmatpush1.bf16.msra.mxu0 0
        %1467 = vmatprep.subr.bf16.mxu0 0
        %1468 = vmatpush1.bf16.msra.mxu0 0
        %1469 = vmatprep.subr.bf16.mxu0 0
        %1470 = vmatpush1.bf16.msra.mxu0 0
        %1471 = vmatprep.subr.bf16.mxu0 0
        %1472 = vmatpush1.bf16.msra.mxu0 0
        %1473 = vmatprep.subr.bf16.mxu0 0
        %1474 = vmatpush1.bf16.msra.mxu0 0
        %1475 = vmatprep.subr.bf16.mxu0 0
        %1476 = vmatpush1.bf16.msra.mxu0 0
        %1477 = vmatprep.subr.bf16.mxu0 0
        %1478 = vmatpush1.bf16.msra.mxu0 0
        %1479 = vmatprep.subr.bf16.mxu0 0
        %1480 = vmatpush1.bf16.msra.mxu0 0
        %1481 = vmatprep.subr.bf16.mxu0 0
        %1482 = vmatpush1.bf16.msra.mxu0 0
        %1483 = vmatprep.subr.bf16.mxu0 0
        %1484 = vmatpush1.bf16.msra.mxu0 0
        %1485 = vmatprep.subr.bf16.mxu0 0
        %1486 = vmatpush1.bf16.msra.mxu0 0
        %1487 = vmatprep.subr.bf16.mxu0 0
        %1488 = vmatpush1.bf16.msra.mxu0 0
        %1489 = vmatprep.mubr.bf16.mxu0 0
        %1490 = vmatmul.mubr.bf16.gmra.mrb[0].mxu0 %v1455
        %v1491 = vpop.f32.mrb[0].mxu0
        %v1492 = vadd.f32 0.0, %v1491
        %v1493 = vpop.f32.mrb[0].mxu0
        %v1494 = vpop.f32.mrb[0].mxu0
        %v1495 = vadd.f32 0.0, %v1494
        %v1496 = vpop.f32.mrb[0].mxu0
        %1497 = vdwg.mxu0
        %v1498 = vrcp.pop %v1441
        %v1499 = vrcp.pop %v1444
        %v1500 = vmul.f32 %v1492, %v1498
        %v1501 = vmul.f32 %v1495, %v1499
        %v1502 = vpack.c.bf16 %v1501, %v1500
        %1504 = vrot.lane.b32.xlu0 %v1502, 64
        %v1505 = vpop.permute.xlu0 %1504
        %1507 = vst.msk [vmem:[#allocation2 + $0x18] sm:$0xff] %vm636, %v1505
        %v1508 = vld [vmem:[#allocation2] sm:$0xff]
        %v1509 = vld [vmem:[#allocation2 + $0x8] sm:$0xff]
        %v1510 = vld [vmem:[#allocation2 + $0x10] sm:$0xff]
        %v1511 = vld [vmem:[#allocation2 + $0x18] sm:$0xff]
        %v1512 = vld [vmem:[%s2] sm:$0xff]
        %v1513 = vld [vmem:[%s2 + $0x8] sm:$0xff]
        %v1514 = vld [vmem:[%s2 + $0x10] sm:$0xff]
        %v1515 = vld [vmem:[%s2 + $0x18] sm:$0xff]
        %v1516 = vld [vmem:[%s2 + $0x20] sm:$0xff]
        %v1517 = vld [vmem:[%s2 + $0x28] sm:$0xff]
        %v1518 = vld [vmem:[%s2 + $0x30] sm:$0xff]
        %v1519 = vld [vmem:[%s2 + $0x38] sm:$0xff]
        %v1520 = vld [vmem:[%s2 + $0x40] sm:$0xff]
        %v1521 = vld [vmem:[%s2 + $0x48] sm:$0xff]
        %v1522 = vld [vmem:[%s2 + $0x50] sm:$0xff]
        %v1523 = vld [vmem:[%s2 + $0x58] sm:$0xff]
        %v1524 = vld [vmem:[%s2 + $0x60] sm:$0xff]
        %v1525 = vld [vmem:[%s2 + $0x68] sm:$0xff]
        %v1526 = vld [vmem:[%s2 + $0x70] sm:$0xff]
        %v1527 = vld [vmem:[%s2 + $0x78] sm:$0xff]
        %v1528 = vld [vmem:[%s2 + $0x80] sm:$0xff]
        %v1529 = vld [vmem:[%s2 + $0x88] sm:$0xff]
        %v1530 = vld [vmem:[%s2 + $0x90] sm:$0xff]
        %v1531 = vld [vmem:[%s2 + $0x98] sm:$0xff]
        %v1532 = vld [vmem:[%s2 + $0xa0] sm:$0xff]
        %v1533 = vld [vmem:[%s2 + $0xa8] sm:$0xff]
        %v1534 = vld [vmem:[%s2 + $0xb0] sm:$0xff]
        %v1535 = vld [vmem:[%s2 + $0xb8] sm:$0xff]
        %v1536 = vld [vmem:[%s2 + $0xc0] sm:$0xff]
        %v1537 = vld [vmem:[%s2 + $0xc8] sm:$0xff]
        %v1538 = vld [vmem:[%s2 + $0xd0] sm:$0xff]
        %v1539 = vld [vmem:[%s2 + $0xd8] sm:$0xff]
        %v1540 = vld [vmem:[%s2 + $0xe0] sm:$0xff]
        %v1541 = vld [vmem:[%s2 + $0xe8] sm:$0xff]
        %v1542 = vld [vmem:[%s2 + $0xf0] sm:$0xff]
        %v1543 = vld [vmem:[%s2 + $0xf8] sm:$0xff]
        %v1544 = vld [vmem:[%s2 + $0x100] sm:$0xff]
        %v1545 = vld [vmem:[%s2 + $0x108] sm:$0xff]
        %v1546 = vld [vmem:[%s2 + $0x110] sm:$0xff]
        %v1547 = vld [vmem:[%s2 + $0x118] sm:$0xff]
        %v1548 = vld [vmem:[%s2 + $0x120] sm:$0xff]
        %v1549 = vld [vmem:[%s2 + $0x128] sm:$0xff]
        %v1550 = vld [vmem:[%s2 + $0x130] sm:$0xff]
        %v1551 = vld [vmem:[%s2 + $0x138] sm:$0xff]
        %v1552 = vld [vmem:[%s2 + $0x140] sm:$0xff]
        %v1553 = vld [vmem:[%s2 + $0x148] sm:$0xff]
        %v1554 = vld [vmem:[%s2 + $0x150] sm:$0xff]
        %v1555 = vld [vmem:[%s2 + $0x158] sm:$0xff]
        %v1556 = vld [vmem:[%s2 + $0x160] sm:$0xff]
        %v1557 = vld [vmem:[%s2 + $0x168] sm:$0xff]
        %v1558 = vld [vmem:[%s2 + $0x170] sm:$0xff]
        %v1559 = vld [vmem:[%s2 + $0x178] sm:$0xff]
        %v1560 = vld [vmem:[%s2 + $0x180] sm:$0xff]
        %v1561 = vld [vmem:[%s2 + $0x188] sm:$0xff]
        %v1562 = vld [vmem:[%s2 + $0x190] sm:$0xff]
        %v1563 = vld [vmem:[%s2 + $0x198] sm:$0xff]
        %v1564 = vld [vmem:[%s2 + $0x1a0] sm:$0xff]
        %v1565 = vld [vmem:[%s2 + $0x1a8] sm:$0xff]
        %v1566 = vld [vmem:[%s2 + $0x1b0] sm:$0xff]
        %v1567 = vld [vmem:[%s2 + $0x1b8] sm:$0xff]
        %v1568 = vld [vmem:[%s2 + $0x1c0] sm:$0xff]
        %v1569 = vld [vmem:[%s2 + $0x1c8] sm:$0xff]
        %v1570 = vld [vmem:[%s2 + $0x1d0] sm:$0xff]
        %v1571 = vld [vmem:[%s2 + $0x1d8] sm:$0xff]
        %v1572 = vld [vmem:[%s2 + $0x1e0] sm:$0xff]
        %v1573 = vld [vmem:[%s2 + $0x1e8] sm:$0xff]
        %v1574 = vld [vmem:[%s2 + $0x1f0] sm:$0xff]
        %v1575 = vld [vmem:[%s2 + $0x1f8] sm:$0xff]
        %v1576 = vld [vmem:[%s2 + $0x200] sm:$0xff]
        %v1577 = vld [vmem:[%s2 + $0x208] sm:$0xff]
        %v1578 = vld [vmem:[%s2 + $0x210] sm:$0xff]
        %v1579 = vld [vmem:[%s2 + $0x218] sm:$0xff]
        %v1580 = vld [vmem:[%s2 + $0x220] sm:$0xff]
        %v1581 = vld [vmem:[%s2 + $0x228] sm:$0xff]
        %v1582 = vld [vmem:[%s2 + $0x230] sm:$0xff]
        %v1583 = vld [vmem:[%s2 + $0x238] sm:$0xff]
        %v1584 = vld [vmem:[%s2 + $0x240] sm:$0xff]
        %v1585 = vld [vmem:[%s2 + $0x248] sm:$0xff]
        %v1586 = vld [vmem:[%s2 + $0x250] sm:$0xff]
        %v1587 = vld [vmem:[%s2 + $0x258] sm:$0xff]
        %v1588 = vld [vmem:[%s2 + $0x260] sm:$0xff]
        %v1589 = vld [vmem:[%s2 + $0x268] sm:$0xff]
        %v1590 = vld [vmem:[%s2 + $0x270] sm:$0xff]
        %v1591 = vld [vmem:[%s2 + $0x278] sm:$0xff]
        %v1592 = vld [vmem:[%s2 + $0x280] sm:$0xff]
        %v1593 = vld [vmem:[%s2 + $0x288] sm:$0xff]
        %v1594 = vld [vmem:[%s2 + $0x290] sm:$0xff]
        %v1595 = vld [vmem:[%s2 + $0x298] sm:$0xff]
        %v1596 = vld [vmem:[%s2 + $0x2a0] sm:$0xff]
        %v1597 = vld [vmem:[%s2 + $0x2a8] sm:$0xff]
        %v1598 = vld [vmem:[%s2 + $0x2b0] sm:$0xff]
        %v1599 = vld [vmem:[%s2 + $0x2b8] sm:$0xff]
        %v1600 = vld [vmem:[%s2 + $0x2c0] sm:$0xff]
        %v1601 = vld [vmem:[%s2 + $0x2c8] sm:$0xff]
        %v1602 = vld [vmem:[%s2 + $0x2d0] sm:$0xff]
        %v1603 = vld [vmem:[%s2 + $0x2d8] sm:$0xff]
        %v1604 = vld [vmem:[%s2 + $0x2e0] sm:$0xff]
        %v1605 = vld [vmem:[%s2 + $0x2e8] sm:$0xff]
        %v1606 = vld [vmem:[%s2 + $0x2f0] sm:$0xff]
        %v1607 = vld [vmem:[%s2 + $0x2f8] sm:$0xff]
        %v1608 = vld [vmem:[%s2 + $0x300] sm:$0xff]
        %v1609 = vld [vmem:[%s2 + $0x308] sm:$0xff]
        %v1610 = vld [vmem:[%s2 + $0x310] sm:$0xff]
        %v1611 = vld [vmem:[%s2 + $0x318] sm:$0xff]
        %v1612 = vld [vmem:[%s2 + $0x320] sm:$0xff]
        %v1613 = vld [vmem:[%s2 + $0x328] sm:$0xff]
        %v1614 = vld [vmem:[%s2 + $0x330] sm:$0xff]
        %v1615 = vld [vmem:[%s2 + $0x338] sm:$0xff]
        %v1616 = vld [vmem:[%s2 + $0x340] sm:$0xff]
        %v1617 = vld [vmem:[%s2 + $0x348] sm:$0xff]
        %v1618 = vld [vmem:[%s2 + $0x350] sm:$0xff]
        %v1619 = vld [vmem:[%s2 + $0x358] sm:$0xff]
        %v1620 = vld [vmem:[%s2 + $0x360] sm:$0xff]
        %v1621 = vld [vmem:[%s2 + $0x368] sm:$0xff]
        %v1622 = vld [vmem:[%s2 + $0x370] sm:$0xff]
        %v1623 = vld [vmem:[%s2 + $0x378] sm:$0xff]
        %v1624 = vld [vmem:[%s2 + $0x380] sm:$0xff]
        %v1625 = vld [vmem:[%s2 + $0x388] sm:$0xff]
        %v1626 = vld [vmem:[%s2 + $0x390] sm:$0xff]
        %v1627 = vld [vmem:[%s2 + $0x398] sm:$0xff]
        %v1628 = vld [vmem:[%s2 + $0x3a0] sm:$0xff]
        %v1629 = vld [vmem:[%s2 + $0x3a8] sm:$0xff]
        %v1630 = vld [vmem:[%s2 + $0x3b0] sm:$0xff]
        %v1631 = vld [vmem:[%s2 + $0x3b8] sm:$0xff]
        %v1632 = vld [vmem:[%s2 + $0x3c0] sm:$0xff]
        %v1633 = vld [vmem:[%s2 + $0x3c8] sm:$0xff]
        %v1634 = vld [vmem:[%s2 + $0x3d0] sm:$0xff]
        %v1635 = vld [vmem:[%s2 + $0x3d8] sm:$0xff]
        %v1636 = vld [vmem:[%s2 + $0x3e0] sm:$0xff]
        %v1637 = vld [vmem:[%s2 + $0x3e8] sm:$0xff]
        %v1638 = vld [vmem:[%s2 + $0x3f0] sm:$0xff]
        %v1639 = vld [vmem:[%s2 + $0x3f8] sm:$0xff]
        %v1640 = vld [vmem:[%s340] sm:$0xff]
        %v1641 = vld [vmem:[%s340 + $0x8] sm:$0xff]
        %v1642 = vld [vmem:[%s340 + $0x10] sm:$0xff]
        %v1643 = vld [vmem:[%s340 + $0x18] sm:$0xff]
        %v1644 = vld [vmem:[%s340 + $0x20] sm:$0xff]
        %v1645 = vld [vmem:[%s340 + $0x28] sm:$0xff]
        %v1646 = vld [vmem:[%s340 + $0x30] sm:$0xff]
        %v1647 = vld [vmem:[%s340 + $0x38] sm:$0xff]
        %v1776 = vunpack.c.l.b16 %v1512
        %v1777 = vunpack.c.h.b16 %v1512
        %v1778 = vunpack.c.l.b16 %v1513
        %v1779 = vunpack.c.h.b16 %v1513
        %v1780 = vunpack.c.l.b16 %v1514
        %v1781 = vunpack.c.h.b16 %v1514
        %v1782 = vunpack.c.l.b16 %v1515
        %v1783 = vunpack.c.h.b16 %v1515
        %v1784 = vunpack.c.l.b16 %v1516
        %v1785 = vunpack.c.h.b16 %v1516
        %v1786 = vunpack.c.l.b16 %v1517
        %v1787 = vunpack.c.h.b16 %v1517
        %v1788 = vunpack.c.l.b16 %v1518
        %v1789 = vunpack.c.h.b16 %v1518
        %v1790 = vunpack.c.l.b16 %v1519
        %v1791 = vunpack.c.h.b16 %v1519
        %v1792 = vunpack.c.l.b16 %v1520
        %v1793 = vunpack.c.h.b16 %v1520
        %v1794 = vunpack.c.l.b16 %v1521
        %v1795 = vunpack.c.h.b16 %v1521
        %v1796 = vunpack.c.l.b16 %v1522
        %v1797 = vunpack.c.h.b16 %v1522
        %v1798 = vunpack.c.l.b16 %v1523
        %v1799 = vunpack.c.h.b16 %v1523
        %v1800 = vunpack.c.l.b16 %v1524
        %v1801 = vunpack.c.h.b16 %v1524
        %v1802 = vunpack.c.l.b16 %v1525
        %v1803 = vunpack.c.h.b16 %v1525
        %v1804 = vunpack.c.l.b16 %v1526
        %v1805 = vunpack.c.h.b16 %v1526
        %v1806 = vunpack.c.l.b16 %v1527
        %v1807 = vunpack.c.h.b16 %v1527
        %v1808 = vunpack.c.l.b16 %v1528
        %v1809 = vunpack.c.h.b16 %v1528
        %v1810 = vunpack.c.l.b16 %v1529
        %v1811 = vunpack.c.h.b16 %v1529
        %v1812 = vunpack.c.l.b16 %v1530
        %v1813 = vunpack.c.h.b16 %v1530
        %v1814 = vunpack.c.l.b16 %v1531
        %v1815 = vunpack.c.h.b16 %v1531
        %v1816 = vunpack.c.l.b16 %v1532
        %v1817 = vunpack.c.h.b16 %v1532
        %v1818 = vunpack.c.l.b16 %v1533
        %v1819 = vunpack.c.h.b16 %v1533
        %v1820 = vunpack.c.l.b16 %v1534
        %v1821 = vunpack.c.h.b16 %v1534
        %v1822 = vunpack.c.l.b16 %v1535
        %v1823 = vunpack.c.h.b16 %v1535
        %v1824 = vunpack.c.l.b16 %v1536
        %v1825 = vunpack.c.h.b16 %v1536
        %v1826 = vunpack.c.l.b16 %v1537
        %v1827 = vunpack.c.h.b16 %v1537
        %v1828 = vunpack.c.l.b16 %v1538
        %v1829 = vunpack.c.h.b16 %v1538
        %v1830 = vunpack.c.l.b16 %v1539
        %v1831 = vunpack.c.h.b16 %v1539
        %v1832 = vunpack.c.l.b16 %v1540
        %v1833 = vunpack.c.h.b16 %v1540
        %v1834 = vunpack.c.l.b16 %v1541
        %v1835 = vunpack.c.h.b16 %v1541
        %v1836 = vunpack.c.l.b16 %v1542
        %v1837 = vunpack.c.h.b16 %v1542
        %v1838 = vunpack.c.l.b16 %v1543
        %v1839 = vunpack.c.h.b16 %v1543
        %v1840 = vunpack.c.l.b16 %v1544
        %v1841 = vunpack.c.h.b16 %v1544
        %v1842 = vunpack.c.l.b16 %v1545
        %v1843 = vunpack.c.h.b16 %v1545
        %v1844 = vunpack.c.l.b16 %v1546
        %v1845 = vunpack.c.h.b16 %v1546
        %v1846 = vunpack.c.l.b16 %v1547
        %v1847 = vunpack.c.h.b16 %v1547
        %v1848 = vunpack.c.l.b16 %v1548
        %v1849 = vunpack.c.h.b16 %v1548
        %v1850 = vunpack.c.l.b16 %v1549
        %v1851 = vunpack.c.h.b16 %v1549
        %v1852 = vunpack.c.l.b16 %v1550
        %v1853 = vunpack.c.h.b16 %v1550
        %v1854 = vunpack.c.l.b16 %v1551
        %v1855 = vunpack.c.h.b16 %v1551
        %v1856 = vunpack.c.l.b16 %v1552
        %v1857 = vunpack.c.h.b16 %v1552
        %v1858 = vunpack.c.l.b16 %v1553
        %v1859 = vunpack.c.h.b16 %v1553
        %v1860 = vunpack.c.l.b16 %v1554
        %v1861 = vunpack.c.h.b16 %v1554
        %v1862 = vunpack.c.l.b16 %v1555
        %v1863 = vunpack.c.h.b16 %v1555
        %v1864 = vunpack.c.l.b16 %v1556
        %v1865 = vunpack.c.h.b16 %v1556
        %v1866 = vunpack.c.l.b16 %v1557
        %v1867 = vunpack.c.h.b16 %v1557
        %v1868 = vunpack.c.l.b16 %v1558
        %v1869 = vunpack.c.h.b16 %v1558
        %v1870 = vunpack.c.l.b16 %v1559
        %v1871 = vunpack.c.h.b16 %v1559
        %v1872 = vunpack.c.l.b16 %v1560
        %v1873 = vunpack.c.h.b16 %v1560
        %v1874 = vunpack.c.l.b16 %v1561
        %v1875 = vunpack.c.h.b16 %v1561
        %v1876 = vunpack.c.l.b16 %v1562
        %v1877 = vunpack.c.h.b16 %v1562
        %v1878 = vunpack.c.l.b16 %v1563
        %v1879 = vunpack.c.h.b16 %v1563
        %v1880 = vunpack.c.l.b16 %v1564
        %v1881 = vunpack.c.h.b16 %v1564
        %v1882 = vunpack.c.l.b16 %v1565
        %v1883 = vunpack.c.h.b16 %v1565
        %v1884 = vunpack.c.l.b16 %v1566
        %v1885 = vunpack.c.h.b16 %v1566
        %v1886 = vunpack.c.l.b16 %v1567
        %v1887 = vunpack.c.h.b16 %v1567
        %v1888 = vunpack.c.l.b16 %v1568
        %v1889 = vunpack.c.h.b16 %v1568
        %v1890 = vunpack.c.l.b16 %v1569
        %v1891 = vunpack.c.h.b16 %v1569
        %v1892 = vunpack.c.l.b16 %v1570
        %v1893 = vunpack.c.h.b16 %v1570
        %v1894 = vunpack.c.l.b16 %v1571
        %v1895 = vunpack.c.h.b16 %v1571
        %v1896 = vunpack.c.l.b16 %v1572
        %v1897 = vunpack.c.h.b16 %v1572
        %v1898 = vunpack.c.l.b16 %v1573
        %v1899 = vunpack.c.h.b16 %v1573
        %v1900 = vunpack.c.l.b16 %v1574
        %v1901 = vunpack.c.h.b16 %v1574
        %v1902 = vunpack.c.l.b16 %v1575
        %v1903 = vunpack.c.h.b16 %v1575
        %v1904 = vunpack.c.l.b16 %v1576
        %v1905 = vunpack.c.h.b16 %v1576
        %v1906 = vunpack.c.l.b16 %v1577
        %v1907 = vunpack.c.h.b16 %v1577
        %v1908 = vunpack.c.l.b16 %v1578
        %v1909 = vunpack.c.h.b16 %v1578
        %v1910 = vunpack.c.l.b16 %v1579
        %v1911 = vunpack.c.h.b16 %v1579
        %v1912 = vunpack.c.l.b16 %v1580
        %v1913 = vunpack.c.h.b16 %v1580
        %v1914 = vunpack.c.l.b16 %v1581
        %v1915 = vunpack.c.h.b16 %v1581
        %v1916 = vunpack.c.l.b16 %v1582
        %v1917 = vunpack.c.h.b16 %v1582
        %v1918 = vunpack.c.l.b16 %v1583
        %v1919 = vunpack.c.h.b16 %v1583
        %v1920 = vunpack.c.l.b16 %v1584
        %v1921 = vunpack.c.h.b16 %v1584
        %v1922 = vunpack.c.l.b16 %v1585
        %v1923 = vunpack.c.h.b16 %v1585
        %v1924 = vunpack.c.l.b16 %v1586
        %v1925 = vunpack.c.h.b16 %v1586
        %v1926 = vunpack.c.l.b16 %v1587
        %v1927 = vunpack.c.h.b16 %v1587
        %v1928 = vunpack.c.l.b16 %v1588
        %v1929 = vunpack.c.h.b16 %v1588
        %v1930 = vunpack.c.l.b16 %v1589
        %v1931 = vunpack.c.h.b16 %v1589
        %v1932 = vunpack.c.l.b16 %v1590
        %v1933 = vunpack.c.h.b16 %v1590
        %v1934 = vunpack.c.l.b16 %v1591
        %v1935 = vunpack.c.h.b16 %v1591
        %v1936 = vunpack.c.l.b16 %v1592
        %v1937 = vunpack.c.h.b16 %v1592
        %v1938 = vunpack.c.l.b16 %v1593
        %v1939 = vunpack.c.h.b16 %v1593
        %v1940 = vunpack.c.l.b16 %v1594
        %v1941 = vunpack.c.h.b16 %v1594
        %v1942 = vunpack.c.l.b16 %v1595
        %v1943 = vunpack.c.h.b16 %v1595
        %v1944 = vunpack.c.l.b16 %v1596
        %v1945 = vunpack.c.h.b16 %v1596
        %v1946 = vunpack.c.l.b16 %v1597
        %v1947 = vunpack.c.h.b16 %v1597
        %v1948 = vunpack.c.l.b16 %v1598
        %v1949 = vunpack.c.h.b16 %v1598
        %v1950 = vunpack.c.l.b16 %v1599
        %v1951 = vunpack.c.h.b16 %v1599
        %v1952 = vunpack.c.l.b16 %v1600
        %v1953 = vunpack.c.h.b16 %v1600
        %v1954 = vunpack.c.l.b16 %v1601
        %v1955 = vunpack.c.h.b16 %v1601
        %v1956 = vunpack.c.l.b16 %v1602
        %v1957 = vunpack.c.h.b16 %v1602
        %v1958 = vunpack.c.l.b16 %v1603
        %v1959 = vunpack.c.h.b16 %v1603
        %v1960 = vunpack.c.l.b16 %v1604
        %v1961 = vunpack.c.h.b16 %v1604
        %v1962 = vunpack.c.l.b16 %v1605
        %v1963 = vunpack.c.h.b16 %v1605
        %v1964 = vunpack.c.l.b16 %v1606
        %v1965 = vunpack.c.h.b16 %v1606
        %v1966 = vunpack.c.l.b16 %v1607
        %v1967 = vunpack.c.h.b16 %v1607
        %v1968 = vunpack.c.l.b16 %v1608
        %v1969 = vunpack.c.h.b16 %v1608
        %v1970 = vunpack.c.l.b16 %v1609
        %v1971 = vunpack.c.h.b16 %v1609
        %v1972 = vunpack.c.l.b16 %v1610
        %v1973 = vunpack.c.h.b16 %v1610
        %v1974 = vunpack.c.l.b16 %v1611
        %v1975 = vunpack.c.h.b16 %v1611
        %v1976 = vunpack.c.l.b16 %v1612
        %v1977 = vunpack.c.h.b16 %v1612
        %v1978 = vunpack.c.l.b16 %v1613
        %v1979 = vunpack.c.h.b16 %v1613
        %v1980 = vunpack.c.l.b16 %v1614
        %v1981 = vunpack.c.h.b16 %v1614
        %v1982 = vunpack.c.l.b16 %v1615
        %v1983 = vunpack.c.h.b16 %v1615
        %v1984 = vunpack.c.l.b16 %v1616
        %v1985 = vunpack.c.h.b16 %v1616
        %v1986 = vunpack.c.l.b16 %v1617
        %v1987 = vunpack.c.h.b16 %v1617
        %v1988 = vunpack.c.l.b16 %v1618
        %v1989 = vunpack.c.h.b16 %v1618
        %v1990 = vunpack.c.l.b16 %v1619
        %v1991 = vunpack.c.h.b16 %v1619
        %v1992 = vunpack.c.l.b16 %v1620
        %v1993 = vunpack.c.h.b16 %v1620
        %v1994 = vunpack.c.l.b16 %v1621
        %v1995 = vunpack.c.h.b16 %v1621
        %v1996 = vunpack.c.l.b16 %v1622
        %v1997 = vunpack.c.h.b16 %v1622
        %v1998 = vunpack.c.l.b16 %v1623
        %v1999 = vunpack.c.h.b16 %v1623
        %v2000 = vunpack.c.l.b16 %v1624
        %v2001 = vunpack.c.h.b16 %v1624
        %v2002 = vunpack.c.l.b16 %v1625
        %v2003 = vunpack.c.h.b16 %v1625
        %v2004 = vunpack.c.l.b16 %v1626
        %v2005 = vunpack.c.h.b16 %v1626
        %v2006 = vunpack.c.l.b16 %v1627
        %v2007 = vunpack.c.h.b16 %v1627
        %v2008 = vunpack.c.l.b16 %v1628
        %v2009 = vunpack.c.h.b16 %v1628
        %v2010 = vunpack.c.l.b16 %v1629
        %v2011 = vunpack.c.h.b16 %v1629
        %v2012 = vunpack.c.l.b16 %v1630
        %v2013 = vunpack.c.h.b16 %v1630
        %v2014 = vunpack.c.l.b16 %v1631
        %v2015 = vunpack.c.h.b16 %v1631
        %v2016 = vunpack.c.l.b16 %v1632
        %v2017 = vunpack.c.h.b16 %v1632
        %v2018 = vunpack.c.l.b16 %v1633
        %v2019 = vunpack.c.h.b16 %v1633
        %v2020 = vunpack.c.l.b16 %v1634
        %v2021 = vunpack.c.h.b16 %v1634
        %v2022 = vunpack.c.l.b16 %v1635
        %v2023 = vunpack.c.h.b16 %v1635
        %v2024 = vunpack.c.l.b16 %v1636
        %v2025 = vunpack.c.h.b16 %v1636
        %v2026 = vunpack.c.l.b16 %v1637
        %v2027 = vunpack.c.h.b16 %v1637
        %v2028 = vunpack.c.l.b16 %v1638
        %v2029 = vunpack.c.h.b16 %v1638
        %v2030 = vunpack.c.l.b16 %v1639
        %v2031 = vunpack.c.h.b16 %v1639
        %v2032 = vpack.c.b16 %v1780, %v1776
        %v2033 = vpack.c.b16 %v1781, %v1777
        %v2034 = vpack.c.b16 %v1782, %v1778
        %v2035 = vpack.c.b16 %v1783, %v1779
        %v2036 = vpack.c.b16 %v1788, %v1784
        %v2037 = vpack.c.b16 %v1789, %v1785
        %v2038 = vpack.c.b16 %v1790, %v1786
        %v2039 = vpack.c.b16 %v1791, %v1787
        %v2040 = vpack.c.b16 %v1796, %v1792
        %v2041 = vpack.c.b16 %v1797, %v1793
        %v2042 = vpack.c.b16 %v1798, %v1794
        %v2043 = vpack.c.b16 %v1799, %v1795
        %v2044 = vpack.c.b16 %v1804, %v1800
        %v2045 = vpack.c.b16 %v1805, %v1801
        %v2046 = vpack.c.b16 %v1806, %v1802
        %v2047 = vpack.c.b16 %v1807, %v1803
        %v2048 = vpack.c.b16 %v1812, %v1808
        %v2049 = vpack.c.b16 %v1813, %v1809
        %v2050 = vpack.c.b16 %v1814, %v1810
        %v2051 = vpack.c.b16 %v1815, %v1811
        %v2052 = vpack.c.b16 %v1820, %v1816
        %v2053 = vpack.c.b16 %v1821, %v1817
        %v2054 = vpack.c.b16 %v1822, %v1818
        %v2055 = vpack.c.b16 %v1823, %v1819
        %v2056 = vpack.c.b16 %v1828, %v1824
        %v2057 = vpack.c.b16 %v1829, %v1825
        %v2058 = vpack.c.b16 %v1830, %v1826
        %v2059 = vpack.c.b16 %v1831, %v1827
        %v2060 = vpack.c.b16 %v1836, %v1832
        %v2061 = vpack.c.b16 %v1837, %v1833
        %v2062 = vpack.c.b16 %v1838, %v1834
        %v2063 = vpack.c.b16 %v1839, %v1835
        %v2064 = vpack.c.b16 %v1844, %v1840
        %v2065 = vpack.c.b16 %v1845, %v1841
        %v2066 = vpack.c.b16 %v1846, %v1842
        %v2067 = vpack.c.b16 %v1847, %v1843
        %v2068 = vpack.c.b16 %v1852, %v1848
        %v2069 = vpack.c.b16 %v1853, %v1849
        %v2070 = vpack.c.b16 %v1854, %v1850
        %v2071 = vpack.c.b16 %v1855, %v1851
        %v2072 = vpack.c.b16 %v1860, %v1856
        %v2073 = vpack.c.b16 %v1861, %v1857
        %v2074 = vpack.c.b16 %v1862, %v1858
        %v2075 = vpack.c.b16 %v1863, %v1859
        %v2076 = vpack.c.b16 %v1868, %v1864
        %v2077 = vpack.c.b16 %v1869, %v1865
        %v2078 = vpack.c.b16 %v1870, %v1866
        %v2079 = vpack.c.b16 %v1871, %v1867
        %v2080 = vpack.c.b16 %v1876, %v1872
        %v2081 = vpack.c.b16 %v1877, %v1873
        %v2082 = vpack.c.b16 %v1878, %v1874
        %v2083 = vpack.c.b16 %v1879, %v1875
        %v2084 = vpack.c.b16 %v1884, %v1880
        %v2085 = vpack.c.b16 %v1885, %v1881
        %v2086 = vpack.c.b16 %v1886, %v1882
        %v2087 = vpack.c.b16 %v1887, %v1883
        %v2088 = vpack.c.b16 %v1892, %v1888
        %v2089 = vpack.c.b16 %v1893, %v1889
        %v2090 = vpack.c.b16 %v1894, %v1890
        %v2091 = vpack.c.b16 %v1895, %v1891
        %v2092 = vpack.c.b16 %v1900, %v1896
        %v2093 = vpack.c.b16 %v1901, %v1897
        %v2094 = vpack.c.b16 %v1902, %v1898
        %v2095 = vpack.c.b16 %v1903, %v1899
        %v2096 = vpack.c.b16 %v1908, %v1904
        %v2097 = vpack.c.b16 %v1909, %v1905
        %v2098 = vpack.c.b16 %v1910, %v1906
        %v2099 = vpack.c.b16 %v1911, %v1907
        %v2100 = vpack.c.b16 %v1916, %v1912
        %v2101 = vpack.c.b16 %v1917, %v1913
        %v2102 = vpack.c.b16 %v1918, %v1914
        %v2103 = vpack.c.b16 %v1919, %v1915
        %v2104 = vpack.c.b16 %v1924, %v1920
        %v2105 = vpack.c.b16 %v1925, %v1921
        %v2106 = vpack.c.b16 %v1926, %v1922
        %v2107 = vpack.c.b16 %v1927, %v1923
        %v2108 = vpack.c.b16 %v1932, %v1928
        %v2109 = vpack.c.b16 %v1933, %v1929
        %v2110 = vpack.c.b16 %v1934, %v1930
        %v2111 = vpack.c.b16 %v1935, %v1931
        %v2112 = vpack.c.b16 %v1940, %v1936
        %v2113 = vpack.c.b16 %v1941, %v1937
        %v2114 = vpack.c.b16 %v1942, %v1938
        %v2115 = vpack.c.b16 %v1943, %v1939
        %v2116 = vpack.c.b16 %v1948, %v1944
        %v2117 = vpack.c.b16 %v1949, %v1945
        %v2118 = vpack.c.b16 %v1950, %v1946
        %v2119 = vpack.c.b16 %v1951, %v1947
        %v2120 = vpack.c.b16 %v1956, %v1952
        %v2121 = vpack.c.b16 %v1957, %v1953
        %v2122 = vpack.c.b16 %v1958, %v1954
        %v2123 = vpack.c.b16 %v1959, %v1955
        %v2124 = vpack.c.b16 %v1964, %v1960
        %v2125 = vpack.c.b16 %v1965, %v1961
        %v2126 = vpack.c.b16 %v1966, %v1962
        %v2127 = vpack.c.b16 %v1967, %v1963
        %v2128 = vpack.c.b16 %v1972, %v1968
        %v2129 = vpack.c.b16 %v1973, %v1969
        %v2130 = vpack.c.b16 %v1974, %v1970
        %v2131 = vpack.c.b16 %v1975, %v1971
        %v2132 = vpack.c.b16 %v1980, %v1976
        %v2133 = vpack.c.b16 %v1981, %v1977
        %v2134 = vpack.c.b16 %v1982, %v1978
        %v2135 = vpack.c.b16 %v1983, %v1979
        %v2136 = vpack.c.b16 %v1988, %v1984
        %v2137 = vpack.c.b16 %v1989, %v1985
        %v2138 = vpack.c.b16 %v1990, %v1986
        %v2139 = vpack.c.b16 %v1991, %v1987
        %v2140 = vpack.c.b16 %v1996, %v1992
        %v2141 = vpack.c.b16 %v1997, %v1993
        %v2142 = vpack.c.b16 %v1998, %v1994
        %v2143 = vpack.c.b16 %v1999, %v1995
        %v2144 = vpack.c.b16 %v2004, %v2000
        %v2145 = vpack.c.b16 %v2005, %v2001
        %v2146 = vpack.c.b16 %v2006, %v2002
        %v2147 = vpack.c.b16 %v2007, %v2003
        %v2148 = vpack.c.b16 %v2012, %v2008
        %v2149 = vpack.c.b16 %v2013, %v2009
        %v2150 = vpack.c.b16 %v2014, %v2010
        %v2151 = vpack.c.b16 %v2015, %v2011
        %v2152 = vpack.c.b16 %v2020, %v2016
        %v2153 = vpack.c.b16 %v2021, %v2017
        %v2154 = vpack.c.b16 %v2022, %v2018
        %v2155 = vpack.c.b16 %v2023, %v2019
        %v2156 = vpack.c.b16 %v2028, %v2024
        %v2157 = vpack.c.b16 %v2029, %v2025
        %v2158 = vpack.c.b16 %v2030, %v2026
        %v2159 = vpack.c.b16 %v2031, %v2027
        %2288 = vmatprep.subr.bf16.mxu0 %v2033
        %2289 = vmatpush1.bf16.msra.mxu0 %v2032
        %2290 = vmatprep.subr.bf16.mxu0 %v2037
        %2291 = vmatpush1.bf16.msra.mxu0 %v2036
        %2292 = vmatprep.subr.bf16.mxu0 %v2041
        %2293 = vmatpush1.bf16.msra.mxu0 %v2040
        %2294 = vmatprep.subr.bf16.mxu0 %v2045
        %2295 = vmatpush1.bf16.msra.mxu0 %v2044
        %2296 = vmatprep.subr.bf16.mxu0 %v2049
        %2297 = vmatpush1.bf16.msra.mxu0 %v2048
        %2298 = vmatprep.subr.bf16.mxu0 %v2053
        %2299 = vmatpush1.bf16.msra.mxu0 %v2052
        %2300 = vmatprep.subr.bf16.mxu0 %v2057
        %2301 = vmatpush1.bf16.msra.mxu0 %v2056
        %2302 = vmatprep.subr.bf16.mxu0 %v2061
        %2303 = vmatpush1.bf16.msra.mxu0 %v2060
        %2304 = vmatprep.subr.bf16.mxu0 %v2065
        %2305 = vmatpush1.bf16.msra.mxu0 %v2064
        %2306 = vmatprep.subr.bf16.mxu0 %v2069
        %2307 = vmatpush1.bf16.msra.mxu0 %v2068
        %2308 = vmatprep.subr.bf16.mxu0 %v2073
        %2309 = vmatpush1.bf16.msra.mxu0 %v2072
        %2310 = vmatprep.subr.bf16.mxu0 %v2077
        %2311 = vmatpush1.bf16.msra.mxu0 %v2076
        %2312 = vmatprep.subr.bf16.mxu0 %v2081
        %2313 = vmatpush1.bf16.msra.mxu0 %v2080
        %2314 = vmatprep.subr.bf16.mxu0 %v2085
        %2315 = vmatpush1.bf16.msra.mxu0 %v2084
        %2316 = vmatprep.subr.bf16.mxu0 %v2089
        %2317 = vmatpush1.bf16.msra.mxu0 %v2088
        %2318 = vmatprep.subr.bf16.mxu0 %v2093
        %2319 = vmatpush1.bf16.msra.mxu0 %v2092
        %2320 = vmatprep.mubr.bf16.mxu0 %v1509
        %2321 = vmatmul.mubr.bf16.gmra.mrb[0].mxu0 %v1508
        %v2322 = vpop.f32.mrb[0].mxu0
        %v2323 = vadd.f32 %v1640, %v2322
        %v2324 = vpop.f32.mrb[0].mxu0
        %v2325 = vadd.f32 %v1641, %v2324
        %v2326 = vpop.f32.mrb[0].mxu0
        %v2327 = vadd.f32 %v1644, %v2326
        %v2328 = vpop.f32.mrb[0].mxu0
        %v2329 = vadd.f32 %v1645, %v2328
        %2330 = vdwg.mxu0
        %2331 = vmatprep.subr.bf16.mxu0 %v2097
        %2332 = vmatpush1.bf16.msra.mxu0 %v2096
        %2333 = vmatprep.subr.bf16.mxu0 %v2101
        %2334 = vmatpush1.bf16.msra.mxu0 %v2100
        %2335 = vmatprep.subr.bf16.mxu0 %v2105
        %2336 = vmatpush1.bf16.msra.mxu0 %v2104
        %2337 = vmatprep.subr.bf16.mxu0 %v2109
        %2338 = vmatpush1.bf16.msra.mxu0 %v2108
        %2339 = vmatprep.subr.bf16.mxu0 %v2113
        %2340 = vmatpush1.bf16.msra.mxu0 %v2112
        %2341 = vmatprep.subr.bf16.mxu0 %v2117
        %2342 = vmatpush1.bf16.msra.mxu0 %v2116
        %2343 = vmatprep.subr.bf16.mxu0 %v2121
        %2344 = vmatpush1.bf16.msra.mxu0 %v2120
        %2345 = vmatprep.subr.bf16.mxu0 %v2125
        %2346 = vmatpush1.bf16.msra.mxu0 %v2124
        %2347 = vmatprep.subr.bf16.mxu0 %v2129
        %2348 = vmatpush1.bf16.msra.mxu0 %v2128
        %2349 = vmatprep.subr.bf16.mxu0 %v2133
        %2350 = vmatpush1.bf16.msra.mxu0 %v2132
        %2351 = vmatprep.subr.bf16.mxu0 %v2137
        %2352 = vmatpush1.bf16.msra.mxu0 %v2136
        %2353 = vmatprep.subr.bf16.mxu0 %v2141
        %2354 = vmatpush1.bf16.msra.mxu0 %v2140
        %2355 = vmatprep.subr.bf16.mxu0 %v2145
        %2356 = vmatpush1.bf16.msra.mxu0 %v2144
        %2357 = vmatprep.subr.bf16.mxu0 %v2149
        %2358 = vmatpush1.bf16.msra.mxu0 %v2148
        %2359 = vmatprep.subr.bf16.mxu0 %v2153
        %2360 = vmatpush1.bf16.msra.mxu0 %v2152
        %2361 = vmatprep.subr.bf16.mxu0 %v2157
        %2362 = vmatpush1.bf16.msra.mxu0 %v2156
        %2363 = vmatprep.mubr.bf16.mxu0 %v1511
        %2364 = vmatmul.mubr.bf16.gmra.mrb[0].mxu0 %v1510
        %v2365 = vpop.f32.mrb[0].mxu0
        %v2366 = vadd.f32 %v2323, %v2365
        %v2367 = vpop.f32.mrb[0].mxu0
        %v2368 = vadd.f32 %v2325, %v2367
        %v2369 = vpop.f32.mrb[0].mxu0
        %v2370 = vadd.f32 %v2327, %v2369
        %v2371 = vpop.f32.mrb[0].mxu0
        %v2372 = vadd.f32 %v2329, %v2371
        %2373 = vdwg.mxu0
        %2374 = vmatprep.subr.bf16.mxu0 %v2035
        %2375 = vmatpush1.bf16.msra.mxu0 %v2034
        %2376 = vmatprep.subr.bf16.mxu0 %v2039
        %2377 = vmatpush1.bf16.msra.mxu0 %v2038
        %2378 = vmatprep.subr.bf16.mxu0 %v2043
        %2379 = vmatpush1.bf16.msra.mxu0 %v2042
        %2380 = vmatprep.subr.bf16.mxu0 %v2047
        %2381 = vmatpush1.bf16.msra.mxu0 %v2046
        %2382 = vmatprep.subr.bf16.mxu0 %v2051
        %2383 = vmatpush1.bf16.msra.mxu0 %v2050
        %2384 = vmatprep.subr.bf16.mxu0 %v2055
        %2385 = vmatpush1.bf16.msra.mxu0 %v2054
        %2386 = vmatprep.subr.bf16.mxu0 %v2059
        %2387 = vmatpush1.bf16.msra.mxu0 %v2058
        %2388 = vmatprep.subr.bf16.mxu0 %v2063
        %2389 = vmatpush1.bf16.msra.mxu0 %v2062
        %2390 = vmatprep.subr.bf16.mxu0 %v2067
        %2391 = vmatpush1.bf16.msra.mxu0 %v2066
        %2392 = vmatprep.subr.bf16.mxu0 %v2071
        %2393 = vmatpush1.bf16.msra.mxu0 %v2070
        %2394 = vmatprep.subr.bf16.mxu0 %v2075
        %2395 = vmatpush1.bf16.msra.mxu0 %v2074
        %2396 = vmatprep.subr.bf16.mxu0 %v2079
        %2397 = vmatpush1.bf16.msra.mxu0 %v2078
        %2398 = vmatprep.subr.bf16.mxu0 %v2083
        %2399 = vmatpush1.bf16.msra.mxu0 %v2082
        %2400 = vmatprep.subr.bf16.mxu0 %v2087
        %2401 = vmatpush1.bf16.msra.mxu0 %v2086
        %2402 = vmatprep.subr.bf16.mxu0 %v2091
        %2403 = vmatpush1.bf16.msra.mxu0 %v2090
        %2404 = vmatprep.subr.bf16.mxu0 %v2095
        %2405 = vmatpush1.bf16.msra.mxu0 %v2094
        %2406 = vmatprep.mubr.bf16.mxu0 %v1509
        %2407 = vmatmul.mubr.bf16.gmra.mrb[0].mxu0 %v1508
        %v2408 = vpop.f32.mrb[0].mxu0
        %v2409 = vadd.f32 %v1642, %v2408
        %v2410 = vpop.f32.mrb[0].mxu0
        %v2411 = vadd.f32 %v1643, %v2410
        %v2412 = vpop.f32.mrb[0].mxu0
        %v2413 = vadd.f32 %v1646, %v2412
        %v2414 = vpop.f32.mrb[0].mxu0
        %v2415 = vadd.f32 %v1647, %v2414
        %2416 = vdwg.mxu0
        %2417 = vmatprep.subr.bf16.mxu0 %v2099
        %2418 = vmatpush1.bf16.msra.mxu0 %v2098
        %2419 = vmatprep.subr.bf16.mxu0 %v2103
        %2420 = vmatpush1.bf16.msra.mxu0 %v2102
        %2421 = vmatprep.subr.bf16.mxu0 %v2107
        %2422 = vmatpush1.bf16.msra.mxu0 %v2106
        %2423 = vmatprep.subr.bf16.mxu0 %v2111
        %2424 = vmatpush1.bf16.msra.mxu0 %v2110
        %2425 = vmatprep.subr.bf16.mxu0 %v2115
        %2426 = vmatpush1.bf16.msra.mxu0 %v2114
        %2427 = vmatprep.subr.bf16.mxu0 %v2119
        %2428 = vmatpush1.bf16.msra.mxu0 %v2118
        %2429 = vmatprep.subr.bf16.mxu0 %v2123
        %2430 = vmatpush1.bf16.msra.mxu0 %v2122
        %2431 = vmatprep.subr.bf16.mxu0 %v2127
        %2432 = vmatpush1.bf16.msra.mxu0 %v2126
        %2433 = vmatprep.subr.bf16.mxu0 %v2131
        %2434 = vmatpush1.bf16.msra.mxu0 %v2130
        %2435 = vmatprep.subr.bf16.mxu0 %v2135
        %2436 = vmatpush1.bf16.msra.mxu0 %v2134
        %2437 = vmatprep.subr.bf16.mxu0 %v2139
        %2438 = vmatpush1.bf16.msra.mxu0 %v2138
        %2439 = vmatprep.subr.bf16.mxu0 %v2143
        %2440 = vmatpush1.bf16.msra.mxu0 %v2142
        %2441 = vmatprep.subr.bf16.mxu0 %v2147
        %2442 = vmatpush1.bf16.msra.mxu0 %v2146
        %2443 = vmatprep.subr.bf16.mxu0 %v2151
        %2444 = vmatpush1.bf16.msra.mxu0 %v2150
        %2445 = vmatprep.subr.bf16.mxu0 %v2155
        %2446 = vmatpush1.bf16.msra.mxu0 %v2154
        %2447 = vmatprep.subr.bf16.mxu0 %v2159
        %2448 = vmatpush1.bf16.msra.mxu0 %v2158
        %2449 = vmatprep.mubr.bf16.mxu0 %v1511
        %2450 = vmatmul.mubr.bf16.gmra.mrb[0].mxu0 %v1510
        %v2451 = vpop.f32.mrb[0].mxu0
        %v2452 = vadd.f32 %v2409, %v2451
        %v2453 = vpop.f32.mrb[0].mxu0
        %v2454 = vadd.f32 %v2411, %v2453
        %v2455 = vpop.f32.mrb[0].mxu0
        %v2456 = vadd.f32 %v2413, %v2455
        %v2457 = vpop.f32.mrb[0].mxu0
        %v2458 = vadd.f32 %v2415, %v2457
        %2459 = vdwg.mxu0
        %v2460 = vadd.f32 %v2366, %v2368
        %v2461 = vadd.f32 %v2460, %v2452
        %v2462 = vadd.f32 %v2461, %v2454
        %2463 = vadd.xlane.f32.xlu0 %v2462
        %v2464 = vpop.xlane.xlu0 %2463
        %v2465 = vadd.f32 %v2370, %v2372
        %v2466 = vadd.f32 %v2465, %v2456
        %v2467 = vadd.f32 %v2466, %v2458
        %2468 = vadd.xlane.f32.xlu0 %v2467
        %v2469 = vpop.xlane.xlu0 %2468
        %v2470 = vrcp.pop 512.0
        %v2471 = vmul.f32 %v2464, %v2470
        %v2472 = vmul.f32 %v2469, %v2470
        %v2473 = vsub.f32 %v2366, %v2471
        %v2474 = vsub.f32 %v2368, %v2471
        %v2475 = vsub.f32 %v2452, %v2471
        %v2476 = vsub.f32 %v2454, %v2471
        %v2477 = vsub.f32 %v2370, %v2472
        %v2478 = vsub.f32 %v2372, %v2472
        %v2479 = vsub.f32 %v2456, %v2472
        %v2480 = vsub.f32 %v2458, %v2472
        %v2481 = vmul.f32 %v2473, %v2473
        %v2482 = vmul.f32 %v2474, %v2474
        %v2483 = vmul.f32 %v2475, %v2475
        %v2484 = vmul.f32 %v2476, %v2476
        %v2485 = vmul.f32 %v2477, %v2477
        %v2486 = vmul.f32 %v2478, %v2478
        %v2487 = vmul.f32 %v2479, %v2479
        %v2488 = vmul.f32 %v2480, %v2480
        %v2489 = vadd.f32 %v2481, %v2482
        %v2490 = vadd.f32 %v2489, %v2483
        %v2491 = vadd.f32 %v2490, %v2484
        %2492 = vadd.xlane.f32.xlu0 %v2491
        %v2493 = vpop.xlane.xlu0 %2492
        %v2494 = vadd.f32 %v2485, %v2486
        %v2495 = vadd.f32 %v2494, %v2487
        %v2496 = vadd.f32 %v2495, %v2488
        %2497 = vadd.xlane.f32.xlu0 %v2496
        %v2498 = vpop.xlane.xlu0 %2497
        %v2499 = vmul.f32 %v2493, %v2470
        %v2500 = vmul.f32 %v2498, %v2470
        %v2501 = vadd.f32 %v2499, 1e-05
        %v2502 = vadd.f32 %v2500, 1e-05
        %v2503 = vrsqrt.pop %v2501
        %v2504 = vrsqrt.pop %v2502
        %v2505 = vmul.f32 %v2473, %v2503
        %v2506 = vmul.f32 %v2474, %v2503
        %v2507 = vmul.f32 %v2475, %v2503
        %v2508 = vmul.f32 %v2476, %v2503
        %v2509 = vmul.f32 %v2477, %v2504
        %v2510 = vmul.f32 %v2478, %v2504
        %v2511 = vmul.f32 %v2479, %v2504
        %v2512 = vmul.f32 %v2480, %v2504
        %v2513 = vld [vmem:[%s4] sm:$0xf]
        %v2515 = vlaneseq
        %v2516 = vshrl.u32 %v2515, 7
        %v2517 = vsub.s32 0, %v2516
        %v2518 = vrot.slane %v2513, %v2517
        %v2519 = vlaneseq
        %v2520 = vshrl.u32 %v2519, 7
        %v2521 = vsub.s32 1, %v2520
        %v2522 = vrot.slane %v2513, %v2521
        %v2523 = vlaneseq
        %v2524 = vshrl.u32 %v2523, 7
        %v2525 = vsub.s32 2, %v2524
        %v2526 = vrot.slane %v2513, %v2525
        %v2527 = vlaneseq
        %v2528 = vshrl.u32 %v2527, 7
        %v2529 = vsub.s32 3, %v2528
        %v2530 = vrot.slane %v2513, %v2529
        %v2535 = vmul.f32 %v2505, %v2518
        %v2536 = vmul.f32 %v2506, %v2522
        %v2537 = vmul.f32 %v2507, %v2526
        %v2538 = vmul.f32 %v2508, %v2530
        %v2539 = vmul.f32 %v2509, %v2518
        %v2540 = vmul.f32 %v2510, %v2522
        %v2541 = vmul.f32 %v2511, %v2526
        %v2542 = vmul.f32 %v2512, %v2530
        %v2543 = vld [vmem:[%s5] sm:$0xf]
        %v2545 = vlaneseq
        %v2546 = vshrl.u32 %v2545, 7
        %v2547 = vsub.s32 0, %v2546
        %v2548 = vrot.slane %v2543, %v2547
        %v2549 = vlaneseq
        %v2550 = vshrl.u32 %v2549, 7
        %v2551 = vsub.s32 1, %v2550
        %v2552 = vrot.slane %v2543, %v2551
        %v2553 = vlaneseq
        %v2554 = vshrl.u32 %v2553, 7
        %v2555 = vsub.s32 2, %v2554
        %v2556 = vrot.slane %v2543, %v2555
        %v2557 = vlaneseq
        %v2558 = vshrl.u32 %v2557, 7
        %v2559 = vsub.s32 3, %v2558
        %v2560 = vrot.slane %v2543, %v2559
        %v2565 = vadd.f32 %v2535, %v2548
        %v2566 = vadd.f32 %v2536, %v2552
        %v2567 = vadd.f32 %v2537, %v2556
        %v2568 = vadd.f32 %v2538, %v2560
        %v2569 = vadd.f32 %v2539, %v2548
        %v2570 = vadd.f32 %v2540, %v2552
        %v2571 = vadd.f32 %v2541, %v2556
        %v2572 = vadd.f32 %v2542, %v2560
        %2573 = vst [vmem:[%s314] sm:$0xff] %v2565
        %2574 = vst [vmem:[%s314 + $0x8] sm:$0xff] %v2566
        %2575 = vst [vmem:[%s314 + $0x10] sm:$0xff] %v2567
        %2576 = vst [vmem:[%s314 + $0x18] sm:$0xff] %v2568
        %2577 = vst [vmem:[%s314 + $0x20] sm:$0xff] %v2569
        %2578 = vst [vmem:[%s314 + $0x28] sm:$0xff] %v2570
        %2579 = vst [vmem:[%s314 + $0x30] sm:$0xff] %v2571
        %2580 = vst [vmem:[%s314 + $0x38] sm:$0xff] %v2572
        %s2581 = sand.u32 %s187, 1
        %s2582 = scalar_lea.sflag [#allocation4], %s2581
        %s2583 = sand.u32 %s187, 1
        %s2584 = smul.addr %s2583, 64
        %s2585 = scalar_lea.vmem [#allocation3], %s2584
        // Predicated region
        $region45: #{multi_head_attention.3} parent=43 // pred_check
          %p2586 = pneg %p197
        $region46: #{multi_head_attention.3} parent=43 // pred_check_branch
          %2588 = sbr.rel (%p2586) target = $region48
        $region47: #{multi_head_attention.3} parent=43 // pred_region
          %s2589 = smul.u32 2, %s25
          %s2591 = ssub.s32 1024, 1024
          %2592 = vsyncadd %s2582, %s2591
          %s2593 = smul.addr %s2589, 4
          %s2594 = smul.addr %s24, 8
          %s2595 = sadd.s32 %s2593, %s2594
          %s2596 = smul.addr %s2595, 128
          %s2597 = scalar_lea.hbm %s6, %s2596
          %s2598 = sshll.u32 %s2585, 4
          %s2599 = int_to_ptr.vmem [resolvable:$true] %s2598
          %2604 = dma.vmem_to_hbm [thread:$0]  %s2599, 1024, %s2597, %s2582, 512, 512, 32
        $region48: #{multi_head_attention.3} parent=43 // pred_fallthru
          _
      $region44: #{multi_head_attention.3} parent=5 // pred_fallthru
        _
      %p2605 = scmp.le.s32.totalorder 2, %s15
      // Predicated region
      $region49: #{multi_head_attention.3} parent=5 // pred_check
        %p2606 = pneg %p2605
      $region50: #{multi_head_attention.3} parent=5 // pred_check_branch
        %2608 = sbr.rel (%p2606) target = $region52
      $region51: #{multi_head_attention.3} parent=5 // pred_region
        %s2609 = ssub.s32 %s15, 2
        // Predicated region
        $region53: #{multi_head_attention.3} parent=51 // pred_check
          %p2610 = pneg %p203
        $region54: #{multi_head_attention.3} parent=51 // pred_check_branch
          %2612 = sbr.rel (%p2610) target = $region56
        $region55: #{multi_head_attention.3} parent=51 // pred_region
          %s2613 = sand.u32 %s188, 1
          %s2614 = scalar_lea.sflag [#allocation4], %s2613
          %s2615 = sand.u32 %s188, 1
          %s2616 = smul.addr %s2615, 64
          %s2617 = scalar_lea.vmem [#allocation3], %s2616
          %2618 = dma.done %s2614, 1024
        $region56: #{multi_head_attention.3} parent=51 // pred_fallthru
          _
      $region52: #{multi_head_attention.3} parent=5 // pred_fallthru
        _
    $region6: #{multi_head_attention.3} parent=1 // loop_footer
      %s19 = sadd.s32 1, %s15
    $region7: #{multi_head_attention.3} parent=1 // loop_footer_branch
      %14 = sbr.rel target = $region3
    $region8: #{multi_head_attention.3} parent=1 // loop_exit
      _
    %2619 = vsyncpa [#allocation4], 1
    %s2620 = scalar_lea.sflag [#allocation4], 1
    %2621 = vsyncpa %s2620, 1

// kernel: multi_head_attention.2
$region0: #{multi_head_attention.2}
  #allocation0 [shape = 'u32[]', space=smem, size = 0x4, offset = 0x4, fixed_abs, tag = 'smem constant byte address 0x4 - core index']
  #allocation1 [shape = 'u32[144,128]{1,0:T(1,128)}', space=vmem, size = 0x12000, scoped, tag = 'internal scratch']
  %s0 = inlined_call_operand.vmem [shape: bf16[32,512], index: 0, kind: input, shape index: {}]
  %s1 = inlined_call_operand.hbm [shape: bf16[512,512], index: 1, kind: input, shape index: {}]
  %s2 = inlined_call_operand.hbm [shape: bf16[512,1024], index: 2, kind: input, shape index: {}]
  %s3 = inlined_call_operand.vmem [shape: bf16[32,512], index: 3, kind: output, shape index: {0}]
  %s4 = inlined_call_operand.vmem [shape: bf16[32,1024], index: 4, kind: output, shape index: {1}]
  %5 = xla_tuple %s3, %s4
  %s6 = sld [smem:[#allocation0]]
  $region38: #{multi_head_attention.2} parent=0
    _
  %s8 = ssub.s32 1, %s6
  %s9 = scalar_select 0, %s8, %s6
  $region1: #{multi_head_attention.2} parent=0
    #allocation2 [shape = 'u8[524288]{0}', space=vmem, size = 0x80000, scoped, tag = 'input window, operand 1, single buffered']
    #allocation3 [shape = 's32[1]{0}', space=sflag, size = 0x4, scoped, tag = 'scoped memory for multi_head_attention.2']
    #allocation4 [shape = 'u8[1048576]{0}', space=vmem, size = 0x100000, scoped, tag = 'input window, operand 2, single buffered']
    #allocation5 [shape = 's32[1]{0}', space=sflag, size = 0x4, scoped, tag = 'scoped memory for multi_head_attention.2']
    %10 = vsyncpa [#allocation3], 0
    %11 = vsyncpa [#allocation5], 0
    // Predicated region
    $region2: #{multi_head_attention.2} parent=1 // pred_check
      _
    $region3: #{multi_head_attention.2} parent=1 // pred_check_branch
      %13 = sbr.rel (0) target = $region5
    $region4: #{multi_head_attention.2} parent=1 // pred_region
      _
    $region5: #{multi_head_attention.2} parent=1 // pred_fallthru
      _
    // Predicated region
    $region6: #{multi_head_attention.2} parent=1 // pred_check
      _
    $region7: #{multi_head_attention.2} parent=1 // pred_check_branch
      %15 = sbr.rel (0) target = $region9
    $region8: #{multi_head_attention.2} parent=1 // pred_region
      %s17 = ssub.s32 16384, 16384
      %18 = vsyncadd [#allocation3], %s17
      %s19 = sshll.u32 [#allocation2], 4
      %s20 = int_to_ptr.vmem [resolvable:$true] %s19
      %25 = dma.hbm_to_vmem [thread:$0]  %s1, 16384, %s20, [#allocation3], 256, 256, 16
    $region9: #{multi_head_attention.2} parent=1 // pred_fallthru
      _
    // Predicated region
    $region10: #{multi_head_attention.2} parent=1 // pred_check
      _
    $region11: #{multi_head_attention.2} parent=1 // pred_check_branch
      %27 = sbr.rel (0) target = $region13
    $region12: #{multi_head_attention.2} parent=1 // pred_region
      %s29 = ssub.s32 32768, 32768
      %30 = vsyncadd [#allocation5], %s29
      %s31 = sshll.u32 [#allocation4], 4
      %s32 = int_to_ptr.vmem [resolvable:$true] %s31
      %37 = dma.hbm_to_vmem [thread:$0]  %s2, 32768, %s32, [#allocation5], 512, 512, 32
    $region13: #{multi_head_attention.2} parent=1 // pred_fallthru
      _
    // Predicated region
    $region14: #{multi_head_attention.2} parent=1 // pred_check
      _
    $region15: #{multi_head_attention.2} parent=1 // pred_check_branch
      %39 = sbr.rel (0) target = $region17
    $region16: #{multi_head_attention.2} parent=1 // pred_region
      %40 = dma.done [#allocation3], 16384
    $region17: #{multi_head_attention.2} parent=1 // pred_fallthru
      _
    // Predicated region
    $region18: #{multi_head_attention.2} parent=1 // pred_check
      _
    $region19: #{multi_head_attention.2} parent=1 // pred_check_branch
      %42 = sbr.rel (0) target = $region21
    $region20: #{multi_head_attention.2} parent=1 // pred_region
      %43 = dma.done [#allocation5], 32768
    $region21: #{multi_head_attention.2} parent=1 // pred_fallthru
      _
    %v44 = vld [vmem:[%s0] sm:$0xff]
    %v45 = vld [vmem:[%s0 + $0x8] sm:$0xff]
    %v46 = vld [vmem:[%s0 + $0x10] sm:$0xff]
    %v47 = vld [vmem:[%s0 + $0x18] sm:$0xff]
    %v48 = vld [vmem:[%s0 + $0x20] sm:$0xff]
    %v49 = vld [vmem:[%s0 + $0x28] sm:$0xff]
    %v50 = vld [vmem:[%s0 + $0x30] sm:$0xff]
    %v51 = vld [vmem:[%s0 + $0x38] sm:$0xff]
    %v52 = vld [vmem:[#allocation2] sm:$0xff]
    %v53 = vld [vmem:[#allocation2 + $0x8] sm:$0xff]
    %v54 = vld [vmem:[#allocation2 + $0x10] sm:$0xff]
    %v55 = vld [vmem:[#allocation2 + $0x18] sm:$0xff]
    %v56 = vld [vmem:[#allocation2 + $0x20] sm:$0xff]
    %v57 = vld [vmem:[#allocation2 + $0x28] sm:$0xff]
    %v58 = vld [vmem:[#allocation2 + $0x30] sm:$0xff]
    %v59 = vld [vmem:[#allocation2 + $0x38] sm:$0xff]
    %v60 = vld [vmem:[#allocation2 + $0x40] sm:$0xff]
    %v61 = vld [vmem:[#allocation2 + $0x48] sm:$0xff]
    %v62 = vld [vmem:[#allocation2 + $0x50] sm:$0xff]
    %v63 = vld [vmem:[#allocation2 + $0x58] sm:$0xff]
    %v64 = vld [vmem:[#allocation2 + $0x60] sm:$0xff]
    %v65 = vld [vmem:[#allocation2 + $0x68] sm:$0xff]
    %v66 = vld [vmem:[#allocation2 + $0x70] sm:$0xff]
    %v67 = vld [vmem:[#allocation2 + $0x78] sm:$0xff]
    %v68 = vld [vmem:[#allocation2 + $0x80] sm:$0xff]
    %v69 = vld [vmem:[#allocation2 + $0x88] sm:$0xff]
    %v70 = vld [vmem:[#allocation2 + $0x90] sm:$0xff]
    %v71 = vld [vmem:[#allocation2 + $0x98] sm:$0xff]
    %v72 = vld [vmem:[#allocation2 + $0xa0] sm:$0xff]
    %v73 = vld [vmem:[#allocation2 + $0xa8] sm:$0xff]
    %v74 = vld [vmem:[#allocation2 + $0xb0] sm:$0xff]
    %v75 = vld [vmem:[#allocation2 + $0xb8] sm:$0xff]
    %v76 = vld [vmem:[#allocation2 + $0xc0] sm:$0xff]
    %v77 = vld [vmem:[#allocation2 + $0xc8] sm:$0xff]
    %v78 = vld [vmem:[#allocation2 + $0xd0] sm:$0xff]
    %v79 = vld [vmem:[#allocation2 + $0xd8] sm:$0xff]
    %v80 = vld [vmem:[#allocation2 + $0xe0] sm:$0xff]
    %v81 = vld [vmem:[#allocation2 + $0xe8] sm:$0xff]
    %v82 = vld [vmem:[#allocation2 + $0xf0] sm:$0xff]
    %v83 = vld [vmem:[#allocation2 + $0xf8] sm:$0xff]
    %v84 = vld [vmem:[#allocation2 + $0x100] sm:$0xff]
    %v85 = vld [vmem:[#allocation2 + $0x108] sm:$0xff]
    %v86 = vld [vmem:[#allocation2 + $0x110] sm:$0xff]
    %v87 = vld [vmem:[#allocation2 + $0x118] sm:$0xff]
    %v88 = vld [vmem:[#allocation2 + $0x120] sm:$0xff]
    %v89 = vld [vmem:[#allocation2 + $0x128] sm:$0xff]
    %v90 = vld [vmem:[#allocation2 + $0x130] sm:$0xff]
    %v91 = vld [vmem:[#allocation2 + $0x138] sm:$0xff]
    %v92 = vld [vmem:[#allocation2 + $0x140] sm:$0xff]
    %v93 = vld [vmem:[#allocation2 + $0x148] sm:$0xff]
    %v94 = vld [vmem:[#allocation2 + $0x150] sm:$0xff]
    %v95 = vld [vmem:[#allocation2 + $0x158] sm:$0xff]
    %v96 = vld [vmem:[#allocation2 + $0x160] sm:$0xff]
    %v97 = vld [vmem:[#allocation2 + $0x168] sm:$0xff]
    %v98 = vld [vmem:[#allocation2 + $0x170] sm:$0xff]
    %v99 = vld [vmem:[#allocation2 + $0x178] sm:$0xff]
    %v100 = vld [vmem:[#allocation2 + $0x180] sm:$0xff]
    %v101 = vld [vmem:[#allocation2 + $0x188] sm:$0xff]
    %v102 = vld [vmem:[#allocation2 + $0x190] sm:$0xff]
    %v103 = vld [vmem:[#allocation2 + $0x198] sm:$0xff]
    %v104 = vld [vmem:[#allocation2 + $0x1a0] sm:$0xff]
    %v105 = vld [vmem:[#allocation2 + $0x1a8] sm:$0xff]
    %v106 = vld [vmem:[#allocation2 + $0x1b0] sm:$0xff]
    %v107 = vld [vmem:[#allocation2 + $0x1b8] sm:$0xff]
    %v108 = vld [vmem:[#allocation2 + $0x1c0] sm:$0xff]
    %v109 = vld [vmem:[#allocation2 + $0x1c8] sm:$0xff]
    %v110 = vld [vmem:[#allocation2 + $0x1d0] sm:$0xff]
    %v111 = vld [vmem:[#allocation2 + $0x1d8] sm:$0xff]
    %v112 = vld [vmem:[#allocation2 + $0x1e0] sm:$0xff]
    %v113 = vld [vmem:[#allocation2 + $0x1e8] sm:$0xff]
    %v114 = vld [vmem:[#allocation2 + $0x1f0] sm:$0xff]
    %v115 = vld [vmem:[#allocation2 + $0x1f8] sm:$0xff]
    %v116 = vld [vmem:[#allocation2 + $0x200] sm:$0xff]
    %v117 = vld [vmem:[#allocation2 + $0x208] sm:$0xff]
    %v118 = vld [vmem:[#allocation2 + $0x210] sm:$0xff]
    %v119 = vld [vmem:[#allocation2 + $0x218] sm:$0xff]
    %v120 = vld [vmem:[#allocation2 + $0x220] sm:$0xff]
    %v121 = vld [vmem:[#allocation2 + $0x228] sm:$0xff]
    %v122 = vld [vmem:[#allocation2 + $0x230] sm:$0xff]
    %v123 = vld [vmem:[#allocation2 + $0x238] sm:$0xff]
    %v124 = vld [vmem:[#allocation2 + $0x240] sm:$0xff]
    %v125 = vld [vmem:[#allocation2 + $0x248] sm:$0xff]
    %v126 = vld [vmem:[#allocation2 + $0x250] sm:$0xff]
    %v127 = vld [vmem:[#allocation2 + $0x258] sm:$0xff]
    %v128 = vld [vmem:[#allocation2 + $0x260] sm:$0xff]
    %v129 = vld [vmem:[#allocation2 + $0x268] sm:$0xff]
    %v130 = vld [vmem:[#allocation2 + $0x270] sm:$0xff]
    %v131 = vld [vmem:[#allocation2 + $0x278] sm:$0xff]
    %v132 = vld [vmem:[#allocation2 + $0x280] sm:$0xff]
    %v133 = vld [vmem:[#allocation2 + $0x288] sm:$0xff]
    %v134 = vld [vmem:[#allocation2 + $0x290] sm:$0xff]
    %v135 = vld [vmem:[#allocation2 + $0x298] sm:$0xff]
    %v136 = vld [vmem:[#allocation2 + $0x2a0] sm:$0xff]
    %v137 = vld [vmem:[#allocation2 + $0x2a8] sm:$0xff]
    %v138 = vld [vmem:[#allocation2 + $0x2b0] sm:$0xff]
    %v139 = vld [vmem:[#allocation2 + $0x2b8] sm:$0xff]
    %v140 = vld [vmem:[#allocation2 + $0x2c0] sm:$0xff]
    %v141 = vld [vmem:[#allocation2 + $0x2c8] sm:$0xff]
    %v142 = vld [vmem:[#allocation2 + $0x2d0] sm:$0xff]
    %v143 = vld [vmem:[#allocation2 + $0x2d8] sm:$0xff]
    %v144 = vld [vmem:[#allocation2 + $0x2e0] sm:$0xff]
    %v145 = vld [vmem:[#allocation2 + $0x2e8] sm:$0xff]
    %v146 = vld [vmem:[#allocation2 + $0x2f0] sm:$0xff]
    %v147 = vld [vmem:[#allocation2 + $0x2f8] sm:$0xff]
    %v148 = vld [vmem:[#allocation2 + $0x300] sm:$0xff]
    %v149 = vld [vmem:[#allocation2 + $0x308] sm:$0xff]
    %v150 = vld [vmem:[#allocation2 + $0x310] sm:$0xff]
    %v151 = vld [vmem:[#allocation2 + $0x318] sm:$0xff]
    %v152 = vld [vmem:[#allocation2 + $0x320] sm:$0xff]
    %v153 = vld [vmem:[#allocation2 + $0x328] sm:$0xff]
    %v154 = vld [vmem:[#allocation2 + $0x330] sm:$0xff]
    %v155 = vld [vmem:[#allocation2 + $0x338] sm:$0xff]
    %v156 = vld [vmem:[#allocation2 + $0x340] sm:$0xff]
    %v157 = vld [vmem:[#allocation2 + $0x348] sm:$0xff]
    %v158 = vld [vmem:[#allocation2 + $0x350] sm:$0xff]
    %v159 = vld [vmem:[#allocation2 + $0x358] sm:$0xff]
    %v160 = vld [vmem:[#allocation2 + $0x360] sm:$0xff]
    %v161 = vld [vmem:[#allocation2 + $0x368] sm:$0xff]
    %v162 = vld [vmem:[#allocation2 + $0x370] sm:$0xff]
    %v163 = vld [vmem:[#allocation2 + $0x378] sm:$0xff]
    %v164 = vld [vmem:[#allocation2 + $0x380] sm:$0xff]
    %v165 = vld [vmem:[#allocation2 + $0x388] sm:$0xff]
    %v166 = vld [vmem:[#allocation2 + $0x390] sm:$0xff]
    %v167 = vld [vmem:[#allocation2 + $0x398] sm:$0xff]
    %v168 = vld [vmem:[#allocation2 + $0x3a0] sm:$0xff]
    %v169 = vld [vmem:[#allocation2 + $0x3a8] sm:$0xff]
    %v170 = vld [vmem:[#allocation2 + $0x3b0] sm:$0xff]
    %v171 = vld [vmem:[#allocation2 + $0x3b8] sm:$0xff]
    %v172 = vld [vmem:[#allocation2 + $0x3c0] sm:$0xff]
    %v173 = vld [vmem:[#allocation2 + $0x3c8] sm:$0xff]
    %v174 = vld [vmem:[#allocation2 + $0x3d0] sm:$0xff]
    %v175 = vld [vmem:[#allocation2 + $0x3d8] sm:$0xff]
    %v176 = vld [vmem:[#allocation2 + $0x3e0] sm:$0xff]
    %v177 = vld [vmem:[#allocation2 + $0x3e8] sm:$0xff]
    %v178 = vld [vmem:[#allocation2 + $0x3f0] sm:$0xff]
    %v179 = vld [vmem:[#allocation2 + $0x3f8] sm:$0xff]
    %v188 = vunpack.c.l.b16 %v44
    %v189 = vunpack.c.h.b16 %v44
    %v190 = vunpack.c.l.b16 %v45
    %v191 = vunpack.c.h.b16 %v45
    %v192 = vunpack.c.l.b16 %v46
    %v193 = vunpack.c.h.b16 %v46
    %v194 = vunpack.c.l.b16 %v47
    %v195 = vunpack.c.h.b16 %v47
    %v196 = vunpack.c.l.b16 %v48
    %v197 = vunpack.c.h.b16 %v48
    %v198 = vunpack.c.l.b16 %v49
    %v199 = vunpack.c.h.b16 %v49
    %v200 = vunpack.c.l.b16 %v50
    %v201 = vunpack.c.h.b16 %v50
    %v202 = vunpack.c.l.b16 %v51
    %v203 = vunpack.c.h.b16 %v51
    %v204 = vpack.c.b16 %v192, %v188
    %v205 = vpack.c.b16 %v193, %v189
    %v206 = vpack.c.b16 %v194, %v190
    %v207 = vpack.c.b16 %v195, %v191
    %v208 = vpack.c.b16 %v200, %v196
    %v209 = vpack.c.b16 %v201, %v197
    %v210 = vpack.c.b16 %v202, %v198
    %v211 = vpack.c.b16 %v203, %v199
    %v348 = vunpack.c.l.b16 %v52
    %v349 = vunpack.c.h.b16 %v52
    %v350 = vunpack.c.l.b16 %v53
    %v351 = vunpack.c.h.b16 %v53
    %v352 = vunpack.c.l.b16 %v54
    %v353 = vunpack.c.h.b16 %v54
    %v354 = vunpack.c.l.b16 %v55
    %v355 = vunpack.c.h.b16 %v55
    %v356 = vunpack.c.l.b16 %v56
    %v357 = vunpack.c.h.b16 %v56
    %v358 = vunpack.c.l.b16 %v57
    %v359 = vunpack.c.h.b16 %v57
    %v360 = vunpack.c.l.b16 %v58
    %v361 = vunpack.c.h.b16 %v58
    %v362 = vunpack.c.l.b16 %v59
    %v363 = vunpack.c.h.b16 %v59
    %v364 = vunpack.c.l.b16 %v60
    %v365 = vunpack.c.h.b16 %v60
    %v366 = vunpack.c.l.b16 %v61
    %v367 = vunpack.c.h.b16 %v61
    %v368 = vunpack.c.l.b16 %v62
    %v369 = vunpack.c.h.b16 %v62
    %v370 = vunpack.c.l.b16 %v63
    %v371 = vunpack.c.h.b16 %v63
    %v372 = vunpack.c.l.b16 %v64
    %v373 = vunpack.c.h.b16 %v64
    %v374 = vunpack.c.l.b16 %v65
    %v375 = vunpack.c.h.b16 %v65
    %v376 = vunpack.c.l.b16 %v66
    %v377 = vunpack.c.h.b16 %v66
    %v378 = vunpack.c.l.b16 %v67
    %v379 = vunpack.c.h.b16 %v67
    %v380 = vunpack.c.l.b16 %v68
    %v381 = vunpack.c.h.b16 %v68
    %v382 = vunpack.c.l.b16 %v69
    %v383 = vunpack.c.h.b16 %v69
    %v384 = vunpack.c.l.b16 %v70
    %v385 = vunpack.c.h.b16 %v70
    %v386 = vunpack.c.l.b16 %v71
    %v387 = vunpack.c.h.b16 %v71
    %v388 = vunpack.c.l.b16 %v72
    %v389 = vunpack.c.h.b16 %v72
    %v390 = vunpack.c.l.b16 %v73
    %v391 = vunpack.c.h.b16 %v73
    %v392 = vunpack.c.l.b16 %v74
    %v393 = vunpack.c.h.b16 %v74
    %v394 = vunpack.c.l.b16 %v75
    %v395 = vunpack.c.h.b16 %v75
    %v396 = vunpack.c.l.b16 %v76
    %v397 = vunpack.c.h.b16 %v76
    %v398 = vunpack.c.l.b16 %v77
    %v399 = vunpack.c.h.b16 %v77
    %v400 = vunpack.c.l.b16 %v78
    %v401 = vunpack.c.h.b16 %v78
    %v402 = vunpack.c.l.b16 %v79
    %v403 = vunpack.c.h.b16 %v79
    %v404 = vunpack.c.l.b16 %v80
    %v405 = vunpack.c.h.b16 %v80
    %v406 = vunpack.c.l.b16 %v81
    %v407 = vunpack.c.h.b16 %v81
    %v408 = vunpack.c.l.b16 %v82
    %v409 = vunpack.c.h.b16 %v82
    %v410 = vunpack.c.l.b16 %v83
    %v411 = vunpack.c.h.b16 %v83
    %v412 = vunpack.c.l.b16 %v84
    %v413 = vunpack.c.h.b16 %v84
    %v414 = vunpack.c.l.b16 %v85
    %v415 = vunpack.c.h.b16 %v85
    %v416 = vunpack.c.l.b16 %v86
    %v417 = vunpack.c.h.b16 %v86
    %v418 = vunpack.c.l.b16 %v87
    %v419 = vunpack.c.h.b16 %v87
    %v420 = vunpack.c.l.b16 %v88
    %v421 = vunpack.c.h.b16 %v88
    %v422 = vunpack.c.l.b16 %v89
    %v423 = vunpack.c.h.b16 %v89
    %v424 = vunpack.c.l.b16 %v90
    %v425 = vunpack.c.h.b16 %v90
    %v426 = vunpack.c.l.b16 %v91
    %v427 = vunpack.c.h.b16 %v91
    %v428 = vunpack.c.l.b16 %v92
    %v429 = vunpack.c.h.b16 %v92
    %v430 = vunpack.c.l.b16 %v93
    %v431 = vunpack.c.h.b16 %v93
    %v432 = vunpack.c.l.b16 %v94
    %v433 = vunpack.c.h.b16 %v94
    %v434 = vunpack.c.l.b16 %v95
    %v435 = vunpack.c.h.b16 %v95
    %v436 = vunpack.c.l.b16 %v96
    %v437 = vunpack.c.h.b16 %v96
    %v438 = vunpack.c.l.b16 %v97
    %v439 = vunpack.c.h.b16 %v97
    %v440 = vunpack.c.l.b16 %v98
    %v441 = vunpack.c.h.b16 %v98
    %v442 = vunpack.c.l.b16 %v99
    %v443 = vunpack.c.h.b16 %v99
    %v444 = vunpack.c.l.b16 %v100
    %v445 = vunpack.c.h.b16 %v100
    %v446 = vunpack.c.l.b16 %v101
    %v447 = vunpack.c.h.b16 %v101
    %v448 = vunpack.c.l.b16 %v102
    %v449 = vunpack.c.h.b16 %v102
    %v450 = vunpack.c.l.b16 %v103
    %v451 = vunpack.c.h.b16 %v103
    %v452 = vunpack.c.l.b16 %v104
    %v453 = vunpack.c.h.b16 %v104
    %v454 = vunpack.c.l.b16 %v105
    %v455 = vunpack.c.h.b16 %v105
    %v456 = vunpack.c.l.b16 %v106
    %v457 = vunpack.c.h.b16 %v106
    %v458 = vunpack.c.l.b16 %v107
    %v459 = vunpack.c.h.b16 %v107
    %v460 = vunpack.c.l.b16 %v108
    %v461 = vunpack.c.h.b16 %v108
    %v462 = vunpack.c.l.b16 %v109
    %v463 = vunpack.c.h.b16 %v109
    %v464 = vunpack.c.l.b16 %v110
    %v465 = vunpack.c.h.b16 %v110
    %v466 = vunpack.c.l.b16 %v111
    %v467 = vunpack.c.h.b16 %v111
    %v468 = vunpack.c.l.b16 %v112
    %v469 = vunpack.c.h.b16 %v112
    %v470 = vunpack.c.l.b16 %v113
    %v471 = vunpack.c.h.b16 %v113
    %v472 = vunpack.c.l.b16 %v114
    %v473 = vunpack.c.h.b16 %v114
    %v474 = vunpack.c.l.b16 %v115
    %v475 = vunpack.c.h.b16 %v115
    %v476 = vunpack.c.l.b16 %v116
    %v477 = vunpack.c.h.b16 %v116
    %v478 = vunpack.c.l.b16 %v117
    %v479 = vunpack.c.h.b16 %v117
    %v480 = vunpack.c.l.b16 %v118
    %v481 = vunpack.c.h.b16 %v118
    %v482 = vunpack.c.l.b16 %v119
    %v483 = vunpack.c.h.b16 %v119
    %v484 = vunpack.c.l.b16 %v120
    %v485 = vunpack.c.h.b16 %v120
    %v486 = vunpack.c.l.b16 %v121
    %v487 = vunpack.c.h.b16 %v121
    %v488 = vunpack.c.l.b16 %v122
    %v489 = vunpack.c.h.b16 %v122
    %v490 = vunpack.c.l.b16 %v123
    %v491 = vunpack.c.h.b16 %v123
    %v492 = vunpack.c.l.b16 %v124
    %v493 = vunpack.c.h.b16 %v124
    %v494 = vunpack.c.l.b16 %v125
    %v495 = vunpack.c.h.b16 %v125
    %v496 = vunpack.c.l.b16 %v126
    %v497 = vunpack.c.h.b16 %v126
    %v498 = vunpack.c.l.b16 %v127
    %v499 = vunpack.c.h.b16 %v127
    %v500 = vunpack.c.l.b16 %v128
    %v501 = vunpack.c.h.b16 %v128
    %v502 = vunpack.c.l.b16 %v129
    %v503 = vunpack.c.h.b16 %v129
    %v504 = vunpack.c.l.b16 %v130
    %v505 = vunpack.c.h.b16 %v130
    %v506 = vunpack.c.l.b16 %v131
    %v507 = vunpack.c.h.b16 %v131
    %v508 = vunpack.c.l.b16 %v132
    %v509 = vunpack.c.h.b16 %v132
    %v510 = vunpack.c.l.b16 %v133
    %v511 = vunpack.c.h.b16 %v133
    %v512 = vunpack.c.l.b16 %v134
    %v513 = vunpack.c.h.b16 %v134
    %v514 = vunpack.c.l.b16 %v135
    %v515 = vunpack.c.h.b16 %v135
    %v516 = vunpack.c.l.b16 %v136
    %v517 = vunpack.c.h.b16 %v136
    %v518 = vunpack.c.l.b16 %v137
    %v519 = vunpack.c.h.b16 %v137
    %v520 = vunpack.c.l.b16 %v138
    %v521 = vunpack.c.h.b16 %v138
    %v522 = vunpack.c.l.b16 %v139
    %v523 = vunpack.c.h.b16 %v139
    %v524 = vunpack.c.l.b16 %v140
    %v525 = vunpack.c.h.b16 %v140
    %v526 = vunpack.c.l.b16 %v141
    %v527 = vunpack.c.h.b16 %v141
    %v528 = vunpack.c.l.b16 %v142
    %v529 = vunpack.c.h.b16 %v142
    %v530 = vunpack.c.l.b16 %v143
    %v531 = vunpack.c.h.b16 %v143
    %v532 = vunpack.c.l.b16 %v144
    %v533 = vunpack.c.h.b16 %v144
    %v534 = vunpack.c.l.b16 %v145
    %v535 = vunpack.c.h.b16 %v145
    %v536 = vunpack.c.l.b16 %v146
    %v537 = vunpack.c.h.b16 %v146
    %v538 = vunpack.c.l.b16 %v147
    %v539 = vunpack.c.h.b16 %v147
    %v540 = vunpack.c.l.b16 %v148
    %v541 = vunpack.c.h.b16 %v148
    %v542 = vunpack.c.l.b16 %v149
    %v543 = vunpack.c.h.b16 %v149
    %v544 = vunpack.c.l.b16 %v150
    %v545 = vunpack.c.h.b16 %v150
    %v546 = vunpack.c.l.b16 %v151
    %v547 = vunpack.c.h.b16 %v151
    %v548 = vunpack.c.l.b16 %v152
    %v549 = vunpack.c.h.b16 %v152
    %v550 = vunpack.c.l.b16 %v153
    %v551 = vunpack.c.h.b16 %v153
    %v552 = vunpack.c.l.b16 %v154
    %v553 = vunpack.c.h.b16 %v154
    %v554 = vunpack.c.l.b16 %v155
    %v555 = vunpack.c.h.b16 %v155
    %v556 = vunpack.c.l.b16 %v156
    %v557 = vunpack.c.h.b16 %v156
    %v558 = vunpack.c.l.b16 %v157
    %v559 = vunpack.c.h.b16 %v157
    %v560 = vunpack.c.l.b16 %v158
    %v561 = vunpack.c.h.b16 %v158
    %v562 = vunpack.c.l.b16 %v159
    %v563 = vunpack.c.h.b16 %v159
    %v564 = vunpack.c.l.b16 %v160
    %v565 = vunpack.c.h.b16 %v160
    %v566 = vunpack.c.l.b16 %v161
    %v567 = vunpack.c.h.b16 %v161
    %v568 = vunpack.c.l.b16 %v162
    %v569 = vunpack.c.h.b16 %v162
    %v570 = vunpack.c.l.b16 %v163
    %v571 = vunpack.c.h.b16 %v163
    %v572 = vunpack.c.l.b16 %v164
    %v573 = vunpack.c.h.b16 %v164
    %v574 = vunpack.c.l.b16 %v165
    %v575 = vunpack.c.h.b16 %v165
    %v576 = vunpack.c.l.b16 %v166
    %v577 = vunpack.c.h.b16 %v166
    %v578 = vunpack.c.l.b16 %v167
    %v579 = vunpack.c.h.b16 %v167
    %v580 = vunpack.c.l.b16 %v168
    %v581 = vunpack.c.h.b16 %v168
    %v582 = vunpack.c.l.b16 %v169
    %v583 = vunpack.c.h.b16 %v169
    %v584 = vunpack.c.l.b16 %v170
    %v585 = vunpack.c.h.b16 %v170
    %v586 = vunpack.c.l.b16 %v171
    %v587 = vunpack.c.h.b16 %v171
    %v588 = vunpack.c.l.b16 %v172
    %v589 = vunpack.c.h.b16 %v172
    %v590 = vunpack.c.l.b16 %v173
    %v591 = vunpack.c.h.b16 %v173
    %v592 = vunpack.c.l.b16 %v174
    %v593 = vunpack.c.h.b16 %v174
    %v594 = vunpack.c.l.b16 %v175
    %v595 = vunpack.c.h.b16 %v175
    %v596 = vunpack.c.l.b16 %v176
    %v597 = vunpack.c.h.b16 %v176
    %v598 = vunpack.c.l.b16 %v177
    %v599 = vunpack.c.h.b16 %v177
    %v600 = vunpack.c.l.b16 %v178
    %v601 = vunpack.c.h.b16 %v178
    %v602 = vunpack.c.l.b16 %v179
    %v603 = vunpack.c.h.b16 %v179
    %v604 = vpack.c.b16 %v352, %v348
    %v605 = vpack.c.b16 %v353, %v349
    %v606 = vpack.c.b16 %v354, %v350
    %v607 = vpack.c.b16 %v355, %v351
    %v608 = vpack.c.b16 %v360, %v356
    %v609 = vpack.c.b16 %v361, %v357
    %v610 = vpack.c.b16 %v362, %v358
    %v611 = vpack.c.b16 %v363, %v359
    %v612 = vpack.c.b16 %v368, %v364
    %v613 = vpack.c.b16 %v369, %v365
    %v614 = vpack.c.b16 %v370, %v366
    %v615 = vpack.c.b16 %v371, %v367
    %v616 = vpack.c.b16 %v376, %v372
    %v617 = vpack.c.b16 %v377, %v373
    %v618 = vpack.c.b16 %v378, %v374
    %v619 = vpack.c.b16 %v379, %v375
    %v620 = vpack.c.b16 %v384, %v380
    %v621 = vpack.c.b16 %v385, %v381
    %v622 = vpack.c.b16 %v386, %v382
    %v623 = vpack.c.b16 %v387, %v383
    %v624 = vpack.c.b16 %v392, %v388
    %v625 = vpack.c.b16 %v393, %v389
    %v626 = vpack.c.b16 %v394, %v390
    %v627 = vpack.c.b16 %v395, %v391
    %v628 = vpack.c.b16 %v400, %v396
    %v629 = vpack.c.b16 %v401, %v397
    %v630 = vpack.c.b16 %v402, %v398
    %v631 = vpack.c.b16 %v403, %v399
    %v632 = vpack.c.b16 %v408, %v404
    %v633 = vpack.c.b16 %v409, %v405
    %v634 = vpack.c.b16 %v410, %v406
    %v635 = vpack.c.b16 %v411, %v407
    %v636 = vpack.c.b16 %v416, %v412
    %v637 = vpack.c.b16 %v417, %v413
    %v638 = vpack.c.b16 %v418, %v414
    %v639 = vpack.c.b16 %v419, %v415
    %v640 = vpack.c.b16 %v424, %v420
    %v641 = vpack.c.b16 %v425, %v421
    %v642 = vpack.c.b16 %v426, %v422
    %v643 = vpack.c.b16 %v427, %v423
    %v644 = vpack.c.b16 %v432, %v428
    %v645 = vpack.c.b16 %v433, %v429
    %v646 = vpack.c.b16 %v434, %v430
    %v647 = vpack.c.b16 %v435, %v431
    %v648 = vpack.c.b16 %v440, %v436
    %v649 = vpack.c.b16 %v441, %v437
    %v650 = vpack.c.b16 %v442, %v438
    %v651 = vpack.c.b16 %v443, %v439
    %v652 = vpack.c.b16 %v448, %v444
    %v653 = vpack.c.b16 %v449, %v445
    %v654 = vpack.c.b16 %v450, %v446
    %v655 = vpack.c.b16 %v451, %v447
    %v656 = vpack.c.b16 %v456, %v452
    %v657 = vpack.c.b16 %v457, %v453
    %v658 = vpack.c.b16 %v458, %v454
    %v659 = vpack.c.b16 %v459, %v455
    %v660 = vpack.c.b16 %v464, %v460
    %v661 = vpack.c.b16 %v465, %v461
    %v662 = vpack.c.b16 %v466, %v462
    %v663 = vpack.c.b16 %v467, %v463
    %v664 = vpack.c.b16 %v472, %v468
    %v665 = vpack.c.b16 %v473, %v469
    %v666 = vpack.c.b16 %v474, %v470
    %v667 = vpack.c.b16 %v475, %v471
    %v668 = vpack.c.b16 %v480, %v476
    %v669 = vpack.c.b16 %v481, %v477
    %v670 = vpack.c.b16 %v482, %v478
    %v671 = vpack.c.b16 %v483, %v479
    %v672 = vpack.c.b16 %v488, %v484
    %v673 = vpack.c.b16 %v489, %v485
    %v674 = vpack.c.b16 %v490, %v486
    %v675 = vpack.c.b16 %v491, %v487
    %v676 = vpack.c.b16 %v496, %v492
    %v677 = vpack.c.b16 %v497, %v493
    %v678 = vpack.c.b16 %v498, %v494
    %v679 = vpack.c.b16 %v499, %v495
    %v680 = vpack.c.b16 %v504, %v500
    %v681 = vpack.c.b16 %v505, %v501
    %v682 = vpack.c.b16 %v506, %v502
    %v683 = vpack.c.b16 %v507, %v503
    %v684 = vpack.c.b16 %v512, %v508
    %v685 = vpack.c.b16 %v513, %v509
    %v686 = vpack.c.b16 %v514, %v510
    %v687 = vpack.c.b16 %v515, %v511
    %v688 = vpack.c.b16 %v520, %v516
    %v689 = vpack.c.b16 %v521, %v517
    %v690 = vpack.c.b16 %v522, %v518
    %v691 = vpack.c.b16 %v523, %v519
    %v692 = vpack.c.b16 %v528, %v524
    %v693 = vpack.c.b16 %v529, %v525
    %v694 = vpack.c.b16 %v530, %v526
    %v695 = vpack.c.b16 %v531, %v527
    %v696 = vpack.c.b16 %v536, %v532
    %v697 = vpack.c.b16 %v537, %v533
    %v698 = vpack.c.b16 %v538, %v534
    %v699 = vpack.c.b16 %v539, %v535
    %v700 = vpack.c.b16 %v544, %v540
    %v701 = vpack.c.b16 %v545, %v541
    %v702 = vpack.c.b16 %v546, %v542
    %v703 = vpack.c.b16 %v547, %v543
    %v704 = vpack.c.b16 %v552, %v548
    %v705 = vpack.c.b16 %v553, %v549
    %v706 = vpack.c.b16 %v554, %v550
    %v707 = vpack.c.b16 %v555, %v551
    %v708 = vpack.c.b16 %v560, %v556
    %v709 = vpack.c.b16 %v561, %v557
    %v710 = vpack.c.b16 %v562, %v558
    %v711 = vpack.c.b16 %v563, %v559
    %v712 = vpack.c.b16 %v568, %v564
    %v713 = vpack.c.b16 %v569, %v565
    %v714 = vpack.c.b16 %v570, %v566
    %v715 = vpack.c.b16 %v571, %v567
    %v716 = vpack.c.b16 %v576, %v572
    %v717 = vpack.c.b16 %v577, %v573
    %v718 = vpack.c.b16 %v578, %v574
    %v719 = vpack.c.b16 %v579, %v575
    %v720 = vpack.c.b16 %v584, %v580
    %v721 = vpack.c.b16 %v585, %v581
    %v722 = vpack.c.b16 %v586, %v582
    %v723 = vpack.c.b16 %v587, %v583
    %v724 = vpack.c.b16 %v592, %v588
    %v725 = vpack.c.b16 %v593, %v589
    %v726 = vpack.c.b16 %v594, %v590
    %v727 = vpack.c.b16 %v595, %v591
    %v728 = vpack.c.b16 %v600, %v596
    %v729 = vpack.c.b16 %v601, %v597
    %v730 = vpack.c.b16 %v602, %v598
    %v731 = vpack.c.b16 %v603, %v599
    %860 = vmatprep.subr.bf16.mxu0 %v605
    %861 = vmatpush1.bf16.msra.mxu0 %v604
    %862 = vmatprep.subr.bf16.mxu0 %v609
    %863 = vmatpush1.bf16.msra.mxu0 %v608
    %864 = vmatprep.subr.bf16.mxu0 %v613
    %865 = vmatpush1.bf16.msra.mxu0 %v612
    %866 = vmatprep.subr.bf16.mxu0 %v617
    %867 = vmatpush1.bf16.msra.mxu0 %v616
    %868 = vmatprep.subr.bf16.mxu0 %v621
    %869 = vmatpush1.bf16.msra.mxu0 %v620
    %870 = vmatprep.subr.bf16.mxu0 %v625
    %871 = vmatpush1.bf16.msra.mxu0 %v624
    %872 = vmatprep.subr.bf16.mxu0 %v629
    %873 = vmatpush1.bf16.msra.mxu0 %v628
    %874 = vmatprep.subr.bf16.mxu0 %v633
    %875 = vmatpush1.bf16.msra.mxu0 %v632
    %876 = vmatprep.subr.bf16.mxu0 %v637
    %877 = vmatpush1.bf16.msra.mxu0 %v636
    %878 = vmatprep.subr.bf16.mxu0 %v641
    %879 = vmatpush1.bf16.msra.mxu0 %v640
    %880 = vmatprep.subr.bf16.mxu0 %v645
    %881 = vmatpush1.bf16.msra.mxu0 %v644
    %882 = vmatprep.subr.bf16.mxu0 %v649
    %883 = vmatpush1.bf16.msra.mxu0 %v648
    %884 = vmatprep.subr.bf16.mxu0 %v653
    %885 = vmatpush1.bf16.msra.mxu0 %v652
    %886 = vmatprep.subr.bf16.mxu0 %v657
    %887 = vmatpush1.bf16.msra.mxu0 %v656
    %888 = vmatprep.subr.bf16.mxu0 %v661
    %889 = vmatpush1.bf16.msra.mxu0 %v660
    %890 = vmatprep.subr.bf16.mxu0 %v665
    %891 = vmatpush1.bf16.msra.mxu0 %v664
    %892 = vmatprep.mubr.bf16.mxu0 %v205
    %893 = vmatmul.mubr.bf16.gmra.mrb[0].mxu0 %v204
    %v894 = vpop.f32.mrb[0].mxu0
    %v895 = vadd.f32 0.0, %v894
    %v896 = vpop.f32.mrb[0].mxu0
    %v897 = vadd.f32 0.0, %v896
    %v898 = vpop.f32.mrb[0].mxu0
    %v899 = vadd.f32 0.0, %v898
    %v900 = vpop.f32.mrb[0].mxu0
    %v901 = vadd.f32 0.0, %v900
    %902 = vmatprep.mubr.bf16.mxu0 %v209
    %903 = vmatmul.mubr.bf16.gmra.mrb[0].mxu0 %v208
    %v904 = vpop.f32.mrb[0].mxu0
    %v905 = vadd.f32 0.0, %v904
    %v906 = vpop.f32.mrb[0].mxu0
    %v907 = vadd.f32 0.0, %v906
    %v908 = vpop.f32.mrb[0].mxu0
    %v909 = vadd.f32 0.0, %v908
    %v910 = vpop.f32.mrb[0].mxu0
    %v911 = vadd.f32 0.0, %v910
    %912 = vdwg.mxu0
    %913 = vmatprep.subr.bf16.mxu0 %v669
    %914 = vmatpush1.bf16.msra.mxu0 %v668
    %915 = vmatprep.subr.bf16.mxu0 %v673
    %916 = vmatpush1.bf16.msra.mxu0 %v672
    %917 = vmatprep.subr.bf16.mxu0 %v677
    %918 = vmatpush1.bf16.msra.mxu0 %v676
    %919 = vmatprep.subr.bf16.mxu0 %v681
    %920 = vmatpush1.bf16.msra.mxu0 %v680
    %921 = vmatprep.subr.bf16.mxu0 %v685
    %922 = vmatpush1.bf16.msra.mxu0 %v684
    %923 = vmatprep.subr.bf16.mxu0 %v689
    %924 = vmatpush1.bf16.msra.mxu0 %v688
    %925 = vmatprep.subr.bf16.mxu0 %v693
    %926 = vmatpush1.bf16.msra.mxu0 %v692
    %927 = vmatprep.subr.bf16.mxu0 %v697
    %928 = vmatpush1.bf16.msra.mxu0 %v696
    %929 = vmatprep.subr.bf16.mxu0 %v701
    %930 = vmatpush1.bf16.msra.mxu0 %v700
    %931 = vmatprep.subr.bf16.mxu0 %v705
    %932 = vmatpush1.bf16.msra.mxu0 %v704
    %933 = vmatprep.subr.bf16.mxu0 %v709
    %934 = vmatpush1.bf16.msra.mxu0 %v708
    %935 = vmatprep.subr.bf16.mxu0 %v713
    %936 = vmatpush1.bf16.msra.mxu0 %v712
    %937 = vmatprep.subr.bf16.mxu0 %v717
    %938 = vmatpush1.bf16.msra.mxu0 %v716
    %939 = vmatprep.subr.bf16.mxu0 %v721
    %940 = vmatpush1.bf16.msra.mxu0 %v720
    %941 = vmatprep.subr.bf16.mxu0 %v725
    %942 = vmatpush1.bf16.msra.mxu0 %v724
    %943 = vmatprep.subr.bf16.mxu0 %v729
    %944 = vmatpush1.bf16.msra.mxu0 %v728
    %945 = vmatprep.mubr.bf16.mxu0 %v207
    %946 = vmatmul.mubr.bf16.gmra.mrb[0].mxu0 %v206
    %v947 = vpop.f32.mrb[0].mxu0
    %v948 = vadd.f32 %v895, %v947
    %v949 = vpop.f32.mrb[0].mxu0
    %v950 = vadd.f32 %v897, %v949
    %v951 = vpop.f32.mrb[0].mxu0
    %v952 = vadd.f32 %v899, %v951
    %v953 = vpop.f32.mrb[0].mxu0
    %v954 = vadd.f32 %v901, %v953
    %955 = vmatprep.mubr.bf16.mxu0 %v211
    %956 = vmatmul.mubr.bf16.gmra.mrb[0].mxu0 %v210
    %v957 = vpop.f32.mrb[0].mxu0
    %v958 = vadd.f32 %v905, %v957
    %v959 = vpop.f32.mrb[0].mxu0
    %v960 = vadd.f32 %v907, %v959
    %v961 = vpop.f32.mrb[0].mxu0
    %v962 = vadd.f32 %v909, %v961
    %v963 = vpop.f32.mrb[0].mxu0
    %v964 = vadd.f32 %v911, %v963
    %965 = vdwg.mxu0
    %966 = vmatprep.subr.bf16.mxu0 %v607
    %967 = vmatpush1.bf16.msra.mxu0 %v606
    %968 = vmatprep.subr.bf16.mxu0 %v611
    %969 = vmatpush1.bf16.msra.mxu0 %v610
    %970 = vmatprep.subr.bf16.mxu0 %v615
    %971 = vmatpush1.bf16.msra.mxu0 %v614
    %972 = vmatprep.subr.bf16.mxu0 %v619
    %973 = vmatpush1.bf16.msra.mxu0 %v618
    %974 = vmatprep.subr.bf16.mxu0 %v623
    %975 = vmatpush1.bf16.msra.mxu0 %v622
    %976 = vmatprep.subr.bf16.mxu0 %v627
    %977 = vmatpush1.bf16.msra.mxu0 %v626
    %978 = vmatprep.subr.bf16.mxu0 %v631
    %979 = vmatpush1.bf16.msra.mxu0 %v630
    %980 = vmatprep.subr.bf16.mxu0 %v635
    %981 = vmatpush1.bf16.msra.mxu0 %v634
    %982 = vmatprep.subr.bf16.mxu0 %v639
    %983 = vmatpush1.bf16.msra.mxu0 %v638
    %984 = vmatprep.subr.bf16.mxu0 %v643
    %985 = vmatpush1.bf16.msra.mxu0 %v642
    %986 = vmatprep.subr.bf16.mxu0 %v647
    %987 = vmatpush1.bf16.msra.mxu0 %v646
    %988 = vmatprep.subr.bf16.mxu0 %v651
    %989 = vmatpush1.bf16.msra.mxu0 %v650
    %990 = vmatprep.subr.bf16.mxu0 %v655
    %991 = vmatpush1.bf16.msra.mxu0 %v654
    %992 = vmatprep.subr.bf16.mxu0 %v659
    %993 = vmatpush1.bf16.msra.mxu0 %v658
    %994 = vmatprep.subr.bf16.mxu0 %v663
    %995 = vmatpush1.bf16.msra.mxu0 %v662
    %996 = vmatprep.subr.bf16.mxu0 %v667
    %997 = vmatpush1.bf16.msra.mxu0 %v666
    %998 = vmatprep.mubr.bf16.mxu0 %v205
    %999 = vmatmul.mubr.bf16.gmra.mrb[0].mxu0 %v204
    %v1000 = vpop.f32.mrb[0].mxu0
    %v1001 = vadd.f32 0.0, %v1000
    %v1002 = vpop.f32.mrb[0].mxu0
    %v1003 = vadd.f32 0.0, %v1002
    %v1004 = vpop.f32.mrb[0].mxu0
    %v1005 = vadd.f32 0.0, %v1004
    %v1006 = vpop.f32.mrb[0].mxu0
    %v1007 = vadd.f32 0.0, %v1006
    %1008 = vmatprep.mubr.bf16.mxu0 %v209
    %1009 = vmatmul.mubr.bf16.gmra.mrb[0].mxu0 %v208
    %v1010 = vpop.f32.mrb[0].mxu0
    %v1011 = vadd.f32 0.0, %v1010
    %v1012 = vpop.f32.mrb[0].mxu0
    %v1013 = vadd.f32 0.0, %v1012
    %v1014 = vpop.f32.mrb[0].mxu0
    %v1015 = vadd.f32 0.0, %v1014
    %v1016 = vpop.f32.mrb[0].mxu0
    %v1017 = vadd.f32 0.0, %v1016
    %1018 = vdwg.mxu0
    %1019 = vmatprep.subr.bf16.mxu0 %v671
    %1020 = vmatpush1.bf16.msra.mxu0 %v670
    %1021 = vmatprep.subr.bf16.mxu0 %v675
    %1022 = vmatpush1.bf16.msra.mxu0 %v674
    %1023 = vmatprep.subr.bf16.mxu0 %v679
    %1024 = vmatpush1.bf16.msra.mxu0 %v678
    %1025 = vmatprep.subr.bf16.mxu0 %v683
    %1026 = vmatpush1.bf16.msra.mxu0 %v682
    %1027 = vmatprep.subr.bf16.mxu0 %v687
    %1028 = vmatpush1.bf16.msra.mxu0 %v686
    %1029 = vmatprep.subr.bf16.mxu0 %v691
    %1030 = vmatpush1.bf16.msra.mxu0 %v690
    %1031 = vmatprep.subr.bf16.mxu0 %v695
    %1032 = vmatpush1.bf16.msra.mxu0 %v694
    %1033 = vmatprep.subr.bf16.mxu0 %v699
    %1034 = vmatpush1.bf16.msra.mxu0 %v698
    %1035 = vmatprep.subr.bf16.mxu0 %v703
    %1036 = vmatpush1.bf16.msra.mxu0 %v702
    %1037 = vmatprep.subr.bf16.mxu0 %v707
    %1038 = vmatpush1.bf16.msra.mxu0 %v706
    %1039 = vmatprep.subr.bf16.mxu0 %v711
    %1040 = vmatpush1.bf16.msra.mxu0 %v710
    %1041 = vmatprep.subr.bf16.mxu0 %v715
    %1042 = vmatpush1.bf16.msra.mxu0 %v714
    %1043 = vmatprep.subr.bf16.mxu0 %v719
    %1044 = vmatpush1.bf16.msra.mxu0 %v718
    %1045 = vmatprep.subr.bf16.mxu0 %v723
    %1046 = vmatpush1.bf16.msra.mxu0 %v722
    %1047 = vmatprep.subr.bf16.mxu0 %v727
    %1048 = vmatpush1.bf16.msra.mxu0 %v726
    %1049 = vmatprep.subr.bf16.mxu0 %v731
    %1050 = vmatpush1.bf16.msra.mxu0 %v730
    %1051 = vmatprep.mubr.bf16.mxu0 %v207
    %1052 = vmatmul.mubr.bf16.gmra.mrb[0].mxu0 %v206
    %v1053 = vpop.f32.mrb[0].mxu0
    %v1054 = vadd.f32 %v1001, %v1053
    %v1055 = vpop.f32.mrb[0].mxu0
    %v1056 = vadd.f32 %v1003, %v1055
    %v1057 = vpop.f32.mrb[0].mxu0
    %v1058 = vadd.f32 %v1005, %v1057
    %v1059 = vpop.f32.mrb[0].mxu0
    %v1060 = vadd.f32 %v1007, %v1059
    %1061 = vmatprep.mubr.bf16.mxu0 %v211
    %1062 = vmatmul.mubr.bf16.gmra.mrb[0].mxu0 %v210
    %v1063 = vpop.f32.mrb[0].mxu0
    %v1064 = vadd.f32 %v1011, %v1063
    %v1065 = vpop.f32.mrb[0].mxu0
    %v1066 = vadd.f32 %v1013, %v1065
    %v1067 = vpop.f32.mrb[0].mxu0
    %v1068 = vadd.f32 %v1015, %v1067
    %v1069 = vpop.f32.mrb[0].mxu0
    %v1070 = vadd.f32 %v1017, %v1069
    %1071 = vdwg.mxu0
    %v1072 = vpack.c.bf16 %v952, %v948
    %v1073 = vpack.c.bf16 %v954, %v950
    %v1074 = vpack.c.bf16 %v1058, %v1054
    %v1075 = vpack.c.bf16 %v1060, %v1056
    %v1076 = vpack.c.bf16 %v962, %v958
    %v1077 = vpack.c.bf16 %v964, %v960
    %v1078 = vpack.c.bf16 %v1068, %v1064
    %v1079 = vpack.c.bf16 %v1070, %v1066
    %v1088 = vunpack.c.l.b16 %v1072
    %v1089 = vunpack.c.l.b16 %v1073
    %v1090 = vunpack.c.l.b16 %v1074
    %v1091 = vunpack.c.l.b16 %v1075
    %v1092 = vunpack.c.h.b16 %v1072
    %v1093 = vunpack.c.h.b16 %v1073
    %v1094 = vunpack.c.h.b16 %v1074
    %v1095 = vunpack.c.h.b16 %v1075
    %v1096 = vunpack.c.l.b16 %v1076
    %v1097 = vunpack.c.l.b16 %v1077
    %v1098 = vunpack.c.l.b16 %v1078
    %v1099 = vunpack.c.l.b16 %v1079
    %v1100 = vunpack.c.h.b16 %v1076
    %v1101 = vunpack.c.h.b16 %v1077
    %v1102 = vunpack.c.h.b16 %v1078
    %v1103 = vunpack.c.h.b16 %v1079
    %v1104 = vpack.c.b16 %v1089, %v1088
    %v1105 = vpack.c.b16 %v1091, %v1090
    %v1106 = vpack.c.b16 %v1093, %v1092
    %v1107 = vpack.c.b16 %v1095, %v1094
    %v1108 = vpack.c.b16 %v1097, %v1096
    %v1109 = vpack.c.b16 %v1099, %v1098
    %v1110 = vpack.c.b16 %v1101, %v1100
    %v1111 = vpack.c.b16 %v1103, %v1102
    %1120 = vst [vmem:[%s3] sm:$0xff] %v1104
    %1121 = vst [vmem:[%s3 + $0x8] sm:$0xff] %v1105
    %1122 = vst [vmem:[%s3 + $0x10] sm:$0xff] %v1106
    %1123 = vst [vmem:[%s3 + $0x18] sm:$0xff] %v1107
    %1124 = vst [vmem:[%s3 + $0x20] sm:$0xff] %v1108
    %1125 = vst [vmem:[%s3 + $0x28] sm:$0xff] %v1109
    %1126 = vst [vmem:[%s3 + $0x30] sm:$0xff] %v1110
    %1127 = vst [vmem:[%s3 + $0x38] sm:$0xff] %v1111
    %v1128 = vld [vmem:[#allocation4] sm:$0xff]
    %v1129 = vld [vmem:[#allocation4 + $0x8] sm:$0xff]
    %v1130 = vld [vmem:[#allocation4 + $0x10] sm:$0xff]
    %v1131 = vld [vmem:[#allocation4 + $0x18] sm:$0xff]
    %v1132 = vld [vmem:[#allocation4 + $0x20] sm:$0xff]
    %v1133 = vld [vmem:[#allocation4 + $0x28] sm:$0xff]
    %v1134 = vld [vmem:[#allocation4 + $0x30] sm:$0xff]
    %v1135 = vld [vmem:[#allocation4 + $0x38] sm:$0xff]
    %v1136 = vld [vmem:[#allocation4 + $0x40] sm:$0xff]
    %v1137 = vld [vmem:[#allocation4 + $0x48] sm:$0xff]
    %v1138 = vld [vmem:[#allocation4 + $0x50] sm:$0xff]
    %v1139 = vld [vmem:[#allocation4 + $0x58] sm:$0xff]
    %v1140 = vld [vmem:[#allocation4 + $0x60] sm:$0xff]
    %v1141 = vld [vmem:[#allocation4 + $0x68] sm:$0xff]
    %v1142 = vld [vmem:[#allocation4 + $0x70] sm:$0xff]
    %v1143 = vld [vmem:[#allocation4 + $0x78] sm:$0xff]
    %v1144 = vld [vmem:[#allocation4 + $0x80] sm:$0xff]
    %v1145 = vld [vmem:[#allocation4 + $0x88] sm:$0xff]
    %v1146 = vld [vmem:[#allocation4 + $0x90] sm:$0xff]
    %v1147 = vld [vmem:[#allocation4 + $0x98] sm:$0xff]
    %v1148 = vld [vmem:[#allocation4 + $0xa0] sm:$0xff]
    %v1149 = vld [vmem:[#allocation4 + $0xa8] sm:$0xff]
    %v1150 = vld [vmem:[#allocation4 + $0xb0] sm:$0xff]
    %v1151 = vld [vmem:[#allocation4 + $0xb8] sm:$0xff]
    %v1152 = vld [vmem:[#allocation4 + $0xc0] sm:$0xff]
    %v1153 = vld [vmem:[#allocation4 + $0xc8] sm:$0xff]
    %v1154 = vld [vmem:[#allocation4 + $0xd0] sm:$0xff]
    %v1155 = vld [vmem:[#allocation4 + $0xd8] sm:$0xff]
    %v1156 = vld [vmem:[#allocation4 + $0xe0] sm:$0xff]
    %v1157 = vld [vmem:[#allocation4 + $0xe8] sm:$0xff]
    %v1158 = vld [vmem:[#allocation4 + $0xf0] sm:$0xff]
    %v1159 = vld [vmem:[#allocation4 + $0xf8] sm:$0xff]
    %v1160 = vld [vmem:[#allocation4 + $0x100] sm:$0xff]
    %v1161 = vld [vmem:[#allocation4 + $0x108] sm:$0xff]
    %v1162 = vld [vmem:[#allocation4 + $0x110] sm:$0xff]
    %v1163 = vld [vmem:[#allocation4 + $0x118] sm:$0xff]
    %v1164 = vld [vmem:[#allocation4 + $0x120] sm:$0xff]
    %v1165 = vld [vmem:[#allocation4 + $0x128] sm:$0xff]
    %v1166 = vld [vmem:[#allocation4 + $0x130] sm:$0xff]
    %v1167 = vld [vmem:[#allocation4 + $0x138] sm:$0xff]
    %v1168 = vld [vmem:[#allocation4 + $0x140] sm:$0xff]
    %v1169 = vld [vmem:[#allocation4 + $0x148] sm:$0xff]
    %v1170 = vld [vmem:[#allocation4 + $0x150] sm:$0xff]
    %v1171 = vld [vmem:[#allocation4 + $0x158] sm:$0xff]
    %v1172 = vld [vmem:[#allocation4 + $0x160] sm:$0xff]
    %v1173 = vld [vmem:[#allocation4 + $0x168] sm:$0xff]
    %v1174 = vld [vmem:[#allocation4 + $0x170] sm:$0xff]
    %v1175 = vld [vmem:[#allocation4 + $0x178] sm:$0xff]
    %v1176 = vld [vmem:[#allocation4 + $0x180] sm:$0xff]
    %v1177 = vld [vmem:[#allocation4 + $0x188] sm:$0xff]
    %v1178 = vld [vmem:[#allocation4 + $0x190] sm:$0xff]
    %v1179 = vld [vmem:[#allocation4 + $0x198] sm:$0xff]
    %v1180 = vld [vmem:[#allocation4 + $0x1a0] sm:$0xff]
    %v1181 = vld [vmem:[#allocation4 + $0x1a8] sm:$0xff]
    %v1182 = vld [vmem:[#allocation4 + $0x1b0] sm:$0xff]
    %v1183 = vld [vmem:[#allocation4 + $0x1b8] sm:$0xff]
    %v1184 = vld [vmem:[#allocation4 + $0x1c0] sm:$0xff]
    %v1185 = vld [vmem:[#allocation4 + $0x1c8] sm:$0xff]
    %v1186 = vld [vmem:[#allocation4 + $0x1d0] sm:$0xff]
    %v1187 = vld [vmem:[#allocation4 + $0x1d8] sm:$0xff]
    %v1188 = vld [vmem:[#allocation4 + $0x1e0] sm:$0xff]
    %v1189 = vld [vmem:[#allocation4 + $0x1e8] sm:$0xff]
    %v1190 = vld [vmem:[#allocation4 + $0x1f0] sm:$0xff]
    %v1191 = vld [vmem:[#allocation4 + $0x1f8] sm:$0xff]
    %v1192 = vld [vmem:[#allocation4 + $0x200] sm:$0xff]
    %v1193 = vld [vmem:[#allocation4 + $0x208] sm:$0xff]
    %v1194 = vld [vmem:[#allocation4 + $0x210] sm:$0xff]
    %v1195 = vld [vmem:[#allocation4 + $0x218] sm:$0xff]
    %v1196 = vld [vmem:[#allocation4 + $0x220] sm:$0xff]
    %v1197 = vld [vmem:[#allocation4 + $0x228] sm:$0xff]
    %v1198 = vld [vmem:[#allocation4 + $0x230] sm:$0xff]
    %v1199 = vld [vmem:[#allocation4 + $0x238] sm:$0xff]
    %v1200 = vld [vmem:[#allocation4 + $0x240] sm:$0xff]
    %v1201 = vld [vmem:[#allocation4 + $0x248] sm:$0xff]
    %v1202 = vld [vmem:[#allocation4 + $0x250] sm:$0xff]
    %v1203 = vld [vmem:[#allocation4 + $0x258] sm:$0xff]
    %v1204 = vld [vmem:[#allocation4 + $0x260] sm:$0xff]
    %v1205 = vld [vmem:[#allocation4 + $0x268] sm:$0xff]
    %v1206 = vld [vmem:[#allocation4 + $0x270] sm:$0xff]
    %v1207 = vld [vmem:[#allocation4 + $0x278] sm:$0xff]
    %v1208 = vld [vmem:[#allocation4 + $0x280] sm:$0xff]
    %v1209 = vld [vmem:[#allocation4 + $0x288] sm:$0xff]
    %v1210 = vld [vmem:[#allocation4 + $0x290] sm:$0xff]
    %v1211 = vld [vmem:[#allocation4 + $0x298] sm:$0xff]
    %v1212 = vld [vmem:[#allocation4 + $0x2a0] sm:$0xff]
    %v1213 = vld [vmem:[#allocation4 + $0x2a8] sm:$0xff]
    %v1214 = vld [vmem:[#allocation4 + $0x2b0] sm:$0xff]
    %v1215 = vld [vmem:[#allocation4 + $0x2b8] sm:$0xff]
    %v1216 = vld [vmem:[#allocation4 + $0x2c0] sm:$0xff]
    %v1217 = vld [vmem:[#allocation4 + $0x2c8] sm:$0xff]
    %v1218 = vld [vmem:[#allocation4 + $0x2d0] sm:$0xff]
    %v1219 = vld [vmem:[#allocation4 + $0x2d8] sm:$0xff]
    %v1220 = vld [vmem:[#allocation4 + $0x2e0] sm:$0xff]
    %v1221 = vld [vmem:[#allocation4 + $0x2e8] sm:$0xff]
    %v1222 = vld [vmem:[#allocation4 + $0x2f0] sm:$0xff]
    %v1223 = vld [vmem:[#allocation4 + $0x2f8] sm:$0xff]
    %v1224 = vld [vmem:[#allocation4 + $0x300] sm:$0xff]
    %v1225 = vld [vmem:[#allocation4 + $0x308] sm:$0xff]
    %v1226 = vld [vmem:[#allocation4 + $0x310] sm:$0xff]
    %v1227 = vld [vmem:[#allocation4 + $0x318] sm:$0xff]
    %v1228 = vld [vmem:[#allocation4 + $0x320] sm:$0xff]
    %v1229 = vld [vmem:[#allocation4 + $0x328] sm:$0xff]
    %v1230 = vld [vmem:[#allocation4 + $0x330] sm:$0xff]
    %v1231 = vld [vmem:[#allocation4 + $0x338] sm:$0xff]
    %v1232 = vld [vmem:[#allocation4 + $0x340] sm:$0xff]
    %v1233 = vld [vmem:[#allocation4 + $0x348] sm:$0xff]
    %v1234 = vld [vmem:[#allocation4 + $0x350] sm:$0xff]
    %v1235 = vld [vmem:[#allocation4 + $0x358] sm:$0xff]
    %v1236 = vld [vmem:[#allocation4 + $0x360] sm:$0xff]
    %v1237 = vld [vmem:[#allocation4 + $0x368] sm:$0xff]
    %v1238 = vld [vmem:[#allocation4 + $0x370] sm:$0xff]
    %v1239 = vld [vmem:[#allocation4 + $0x378] sm:$0xff]
    %v1240 = vld [vmem:[#allocation4 + $0x380] sm:$0xff]
    %v1241 = vld [vmem:[#allocation4 + $0x388] sm:$0xff]
    %v1242 = vld [vmem:[#allocation4 + $0x390] sm:$0xff]
    %v1243 = vld [vmem:[#allocation4 + $0x398] sm:$0xff]
    %v1244 = vld [vmem:[#allocation4 + $0x3a0] sm:$0xff]
    %v1245 = vld [vmem:[#allocation4 + $0x3a8] sm:$0xff]
    %v1246 = vld [vmem:[#allocation4 + $0x3b0] sm:$0xff]
    %v1247 = vld [vmem:[#allocation4 + $0x3b8] sm:$0xff]
    %v1248 = vld [vmem:[#allocation4 + $0x3c0] sm:$0xff]
    %v1249 = vld [vmem:[#allocation4 + $0x3c8] sm:$0xff]
    %v1250 = vld [vmem:[#allocation4 + $0x3d0] sm:$0xff]
    %v1251 = vld [vmem:[#allocation4 + $0x3d8] sm:$0xff]
    %v1252 = vld [vmem:[#allocation4 + $0x3e0] sm:$0xff]
    %v1253 = vld [vmem:[#allocation4 + $0x3e8] sm:$0xff]
    %v1254 = vld [vmem:[#allocation4 + $0x3f0] sm:$0xff]
    %v1255 = vld [vmem:[#allocation4 + $0x3f8] sm:$0xff]
    %v1256 = vld [vmem:[#allocation4 + $0x400] sm:$0xff]
    %v1257 = vld [vmem:[#allocation4 + $0x408] sm:$0xff]
    %v1258 = vld [vmem:[#allocation4 + $0x410] sm:$0xff]
    %v1259 = vld [vmem:[#allocation4 + $0x418] sm:$0xff]
    %v1260 = vld [vmem:[#allocation4 + $0x420] sm:$0xff]
    %v1261 = vld [vmem:[#allocation4 + $0x428] sm:$0xff]
    %v1262 = vld [vmem:[#allocation4 + $0x430] sm:$0xff]
    %v1263 = vld [vmem:[#allocation4 + $0x438] sm:$0xff]
    %v1264 = vld [vmem:[#allocation4 + $0x440] sm:$0xff]
    %v1265 = vld [vmem:[#allocation4 + $0x448] sm:$0xff]
    %v1266 = vld [vmem:[#allocation4 + $0x450] sm:$0xff]
    %v1267 = vld [vmem:[#allocation4 + $0x458] sm:$0xff]
    %v1268 = vld [vmem:[#allocation4 + $0x460] sm:$0xff]
    %v1269 = vld [vmem:[#allocation4 + $0x468] sm:$0xff]
    %v1270 = vld [vmem:[#allocation4 + $0x470] sm:$0xff]
    %v1271 = vld [vmem:[#allocation4 + $0x478] sm:$0xff]
    %v1272 = vld [vmem:[#allocation4 + $0x480] sm:$0xff]
    %v1273 = vld [vmem:[#allocation4 + $0x488] sm:$0xff]
    %v1274 = vld [vmem:[#allocation4 + $0x490] sm:$0xff]
    %v1275 = vld [vmem:[#allocation4 + $0x498] sm:$0xff]
    %v1276 = vld [vmem:[#allocation4 + $0x4a0] sm:$0xff]
    %v1277 = vld [vmem:[#allocation4 + $0x4a8] sm:$0xff]
    %v1278 = vld [vmem:[#allocation4 + $0x4b0] sm:$0xff]
    %v1279 = vld [vmem:[#allocation4 + $0x4b8] sm:$0xff]
    %v1280 = vld [vmem:[#allocation4 + $0x4c0] sm:$0xff]
    %v1281 = vld [vmem:[#allocation4 + $0x4c8] sm:$0xff]
    %v1282 = vld [vmem:[#allocation4 + $0x4d0] sm:$0xff]
    %v1283 = vld [vmem:[#allocation4 + $0x4d8] sm:$0xff]
    %v1284 = vld [vmem:[#allocation4 + $0x4e0] sm:$0xff]
    %v1285 = vld [vmem:[#allocation4 + $0x4e8] sm:$0xff]
    %v1286 = vld [vmem:[#allocation4 + $0x4f0] sm:$0xff]
    %v1287 = vld [vmem:[#allocation4 + $0x4f8] sm:$0xff]
    %v1288 = vld [vmem:[#allocation4 + $0x500] sm:$0xff]
    %v1289 = vld [vmem:[#allocation4 + $0x508] sm:$0xff]
    %v1290 = vld [vmem:[#allocation4 + $0x510] sm:$0xff]
    %v1291 = vld [vmem:[#allocation4 + $0x518] sm:$0xff]
    %v1292 = vld [vmem:[#allocation4 + $0x520] sm:$0xff]
    %v1293 = vld [vmem:[#allocation4 + $0x528] sm:$0xff]
    %v1294 = vld [vmem:[#allocation4 + $0x530] sm:$0xff]
    %v1295 = vld [vmem:[#allocation4 + $0x538] sm:$0xff]
    %v1296 = vld [vmem:[#allocation4 + $0x540] sm:$0xff]
    %v1297 = vld [vmem:[#allocation4 + $0x548] sm:$0xff]
    %v1298 = vld [vmem:[#allocation4 + $0x550] sm:$0xff]
    %v1299 = vld [vmem:[#allocation4 + $0x558] sm:$0xff]
    %v1300 = vld [vmem:[#allocation4 + $0x560] sm:$0xff]
    %v1301 = vld [vmem:[#allocation4 + $0x568] sm:$0xff]
    %v1302 = vld [vmem:[#allocation4 + $0x570] sm:$0xff]
    %v1303 = vld [vmem:[#allocation4 + $0x578] sm:$0xff]
    %v1304 = vld [vmem:[#allocation4 + $0x580] sm:$0xff]
    %v1305 = vld [vmem:[#allocation4 + $0x588] sm:$0xff]
    %v1306 = vld [vmem:[#allocation4 + $0x590] sm:$0xff]
    %v1307 = vld [vmem:[#allocation4 + $0x598] sm:$0xff]
    %v1308 = vld [vmem:[#allocation4 + $0x5a0] sm:$0xff]
    %v1309 = vld [vmem:[#allocation4 + $0x5a8] sm:$0xff]
    %v1310 = vld [vmem:[#allocation4 + $0x5b0] sm:$0xff]
    %v1311 = vld [vmem:[#allocation4 + $0x5b8] sm:$0xff]
    %v1312 = vld [vmem:[#allocation4 + $0x5c0] sm:$0xff]
    %v1313 = vld [vmem:[#allocation4 + $0x5c8] sm:$0xff]
    %v1314 = vld [vmem:[#allocation4 + $0x5d0] sm:$0xff]
    %v1315 = vld [vmem:[#allocation4 + $0x5d8] sm:$0xff]
    %v1316 = vld [vmem:[#allocation4 + $0x5e0] sm:$0xff]
    %v1317 = vld [vmem:[#allocation4 + $0x5e8] sm:$0xff]
    %v1318 = vld [vmem:[#allocation4 + $0x5f0] sm:$0xff]
    %v1319 = vld [vmem:[#allocation4 + $0x5f8] sm:$0xff]
    %v1320 = vld [vmem:[#allocation4 + $0x600] sm:$0xff]
    %v1321 = vld [vmem:[#allocation4 + $0x608] sm:$0xff]
    %v1322 = vld [vmem:[#allocation4 + $0x610] sm:$0xff]
    %v1323 = vld [vmem:[#allocation4 + $0x618] sm:$0xff]
    %v1324 = vld [vmem:[#allocation4 + $0x620] sm:$0xff]
    %v1325 = vld [vmem:[#allocation4 + $0x628] sm:$0xff]
    %v1326 = vld [vmem:[#allocation4 + $0x630] sm:$0xff]
    %v1327 = vld [vmem:[#allocation4 + $0x638] sm:$0xff]
    %v1328 = vld [vmem:[#allocation4 + $0x640] sm:$0xff]
    %v1329 = vld [vmem:[#allocation4 + $0x648] sm:$0xff]
    %v1330 = vld [vmem:[#allocation4 + $0x650] sm:$0xff]
    %v1331 = vld [vmem:[#allocation4 + $0x658] sm:$0xff]
    %v1332 = vld [vmem:[#allocation4 + $0x660] sm:$0xff]
    %v1333 = vld [vmem:[#allocation4 + $0x668] sm:$0xff]
    %v1334 = vld [vmem:[#allocation4 + $0x670] sm:$0xff]
    %v1335 = vld [vmem:[#allocation4 + $0x678] sm:$0xff]
    %v1336 = vld [vmem:[#allocation4 + $0x680] sm:$0xff]
    %v1337 = vld [vmem:[#allocation4 + $0x688] sm:$0xff]
    %v1338 = vld [vmem:[#allocation4 + $0x690] sm:$0xff]
    %v1339 = vld [vmem:[#allocation4 + $0x698] sm:$0xff]
    %v1340 = vld [vmem:[#allocation4 + $0x6a0] sm:$0xff]
    %v1341 = vld [vmem:[#allocation4 + $0x6a8] sm:$0xff]
    %v1342 = vld [vmem:[#allocation4 + $0x6b0] sm:$0xff]
    %v1343 = vld [vmem:[#allocation4 + $0x6b8] sm:$0xff]
    %v1344 = vld [vmem:[#allocation4 + $0x6c0] sm:$0xff]
    %v1345 = vld [vmem:[#allocation4 + $0x6c8] sm:$0xff]
    %v1346 = vld [vmem:[#allocation4 + $0x6d0] sm:$0xff]
    %v1347 = vld [vmem:[#allocation4 + $0x6d8] sm:$0xff]
    %v1348 = vld [vmem:[#allocation4 + $0x6e0] sm:$0xff]
    %v1349 = vld [vmem:[#allocation4 + $0x6e8] sm:$0xff]
    %v1350 = vld [vmem:[#allocation4 + $0x6f0] sm:$0xff]
    %v1351 = vld [vmem:[#allocation4 + $0x6f8] sm:$0xff]
    %v1352 = vld [vmem:[#allocation4 + $0x700] sm:$0xff]
    %v1353 = vld [vmem:[#allocation4 + $0x708] sm:$0xff]
    %v1354 = vld [vmem:[#allocation4 + $0x710] sm:$0xff]
    %v1355 = vld [vmem:[#allocation4 + $0x718] sm:$0xff]
    %v1356 = vld [vmem:[#allocation4 + $0x720] sm:$0xff]
    %v1357 = vld [vmem:[#allocation4 + $0x728] sm:$0xff]
    %v1358 = vld [vmem:[#allocation4 + $0x730] sm:$0xff]
    %v1359 = vld [vmem:[#allocation4 + $0x738] sm:$0xff]
    %v1360 = vld [vmem:[#allocation4 + $0x740] sm:$0xff]
    %v1361 = vld [vmem:[#allocation4 + $0x748] sm:$0xff]
    %v1362 = vld [vmem:[#allocation4 + $0x750] sm:$0xff]
    %v1363 = vld [vmem:[#allocation4 + $0x758] sm:$0xff]
    %v1364 = vld [vmem:[#allocation4 + $0x760] sm:$0xff]
    %v1365 = vld [vmem:[#allocation4 + $0x768] sm:$0xff]
    %v1366 = vld [vmem:[#allocation4 + $0x770] sm:$0xff]
    %v1367 = vld [vmem:[#allocation4 + $0x778] sm:$0xff]
    %v1368 = vld [vmem:[#allocation4 + $0x780] sm:$0xff]
    %v1369 = vld [vmem:[#allocation4 + $0x788] sm:$0xff]
    %v1370 = vld [vmem:[#allocation4 + $0x790] sm:$0xff]
    %v1371 = vld [vmem:[#allocation4 + $0x798] sm:$0xff]
    %v1372 = vld [vmem:[#allocation4 + $0x7a0] sm:$0xff]
    %v1373 = vld [vmem:[#allocation4 + $0x7a8] sm:$0xff]
    %v1374 = vld [vmem:[#allocation4 + $0x7b0] sm:$0xff]
    %v1375 = vld [vmem:[#allocation4 + $0x7b8] sm:$0xff]
    %v1376 = vld [vmem:[#allocation4 + $0x7c0] sm:$0xff]
    %v1377 = vld [vmem:[#allocation4 + $0x7c8] sm:$0xff]
    %v1378 = vld [vmem:[#allocation4 + $0x7d0] sm:$0xff]
    %v1379 = vld [vmem:[#allocation4 + $0x7d8] sm:$0xff]
    %v1380 = vld [vmem:[#allocation4 + $0x7e0] sm:$0xff]
    %v1381 = vld [vmem:[#allocation4 + $0x7e8] sm:$0xff]
    %v1382 = vld [vmem:[#allocation4 + $0x7f0] sm:$0xff]
    %v1383 = vld [vmem:[#allocation4 + $0x7f8] sm:$0xff]
    %v1640 = vunpack.c.l.b16 %v1128
    %v1641 = vunpack.c.h.b16 %v1128
    %v1642 = vunpack.c.l.b16 %v1129
    %v1643 = vunpack.c.h.b16 %v1129
    %v1644 = vunpack.c.l.b16 %v1130
    %v1645 = vunpack.c.h.b16 %v1130
    %v1646 = vunpack.c.l.b16 %v1131
    %v1647 = vunpack.c.h.b16 %v1131
    %v1648 = vunpack.c.l.b16 %v1132
    %v1649 = vunpack.c.h.b16 %v1132
    %v1650 = vunpack.c.l.b16 %v1133
    %v1651 = vunpack.c.h.b16 %v1133
    %v1652 = vunpack.c.l.b16 %v1134
    %v1653 = vunpack.c.h.b16 %v1134
    %v1654 = vunpack.c.l.b16 %v1135
    %v1655 = vunpack.c.h.b16 %v1135
    %v1656 = vunpack.c.l.b16 %v1136
    %v1657 = vunpack.c.h.b16 %v1136
    %v1658 = vunpack.c.l.b16 %v1137
    %v1659 = vunpack.c.h.b16 %v1137
    %v1660 = vunpack.c.l.b16 %v1138
    %v1661 = vunpack.c.h.b16 %v1138
    %v1662 = vunpack.c.l.b16 %v1139
    %v1663 = vunpack.c.h.b16 %v1139
    %v1664 = vunpack.c.l.b16 %v1140
    %v1665 = vunpack.c.h.b16 %v1140
    %v1666 = vunpack.c.l.b16 %v1141
    %v1667 = vunpack.c.h.b16 %v1141
    %v1668 = vunpack.c.l.b16 %v1142
    %v1669 = vunpack.c.h.b16 %v1142
    %v1670 = vunpack.c.l.b16 %v1143
    %v1671 = vunpack.c.h.b16 %v1143
    %v1672 = vunpack.c.l.b16 %v1144
    %v1673 = vunpack.c.h.b16 %v1144
    %v1674 = vunpack.c.l.b16 %v1145
    %v1675 = vunpack.c.h.b16 %v1145
    %v1676 = vunpack.c.l.b16 %v1146
    %v1677 = vunpack.c.h.b16 %v1146
    %v1678 = vunpack.c.l.b16 %v1147
    %v1679 = vunpack.c.h.b16 %v1147
    %v1680 = vunpack.c.l.b16 %v1148
    %v1681 = vunpack.c.h.b16 %v1148
    %v1682 = vunpack.c.l.b16 %v1149
    %v1683 = vunpack.c.h.b16 %v1149
    %v1684 = vunpack.c.l.b16 %v1150
    %v1685 = vunpack.c.h.b16 %v1150
    %v1686 = vunpack.c.l.b16 %v1151
    %v1687 = vunpack.c.h.b16 %v1151
    %v1688 = vunpack.c.l.b16 %v1152
    %v1689 = vunpack.c.h.b16 %v1152
    %v1690 = vunpack.c.l.b16 %v1153
    %v1691 = vunpack.c.h.b16 %v1153
    %v1692 = vunpack.c.l.b16 %v1154
    %v1693 = vunpack.c.h.b16 %v1154
    %v1694 = vunpack.c.l.b16 %v1155
    %v1695 = vunpack.c.h.b16 %v1155
    %v1696 = vunpack.c.l.b16 %v1156
    %v1697 = vunpack.c.h.b16 %v1156
    %v1698 = vunpack.c.l.b16 %v1157
    %v1699 = vunpack.c.h.b16 %v1157
    %v1700 = vunpack.c.l.b16 %v1158
    %v1701 = vunpack.c.h.b16 %v1158
    %v1702 = vunpack.c.l.b16 %v1159
    %v1703 = vunpack.c.h.b16 %v1159
    %v1704 = vunpack.c.l.b16 %v1160
    %v1705 = vunpack.c.h.b16 %v1160
    %v1706 = vunpack.c.l.b16 %v1161
    %v1707 = vunpack.c.h.b16 %v1161
    %v1708 = vunpack.c.l.b16 %v1162
    %v1709 = vunpack.c.h.b16 %v1162
    %v1710 = vunpack.c.l.b16 %v1163
    %v1711 = vunpack.c.h.b16 %v1163
    %v1712 = vunpack.c.l.b16 %v1164
    %v1713 = vunpack.c.h.b16 %v1164
    %v1714 = vunpack.c.l.b16 %v1165
    %v1715 = vunpack.c.h.b16 %v1165
    %v1716 = vunpack.c.l.b16 %v1166
    %v1717 = vunpack.c.h.b16 %v1166
    %v1718 = vunpack.c.l.b16 %v1167
    %v1719 = vunpack.c.h.b16 %v1167
    %v1720 = vunpack.c.l.b16 %v1168
    %v1721 = vunpack.c.h.b16 %v1168
    %v1722 = vunpack.c.l.b16 %v1169
    %v1723 = vunpack.c.h.b16 %v1169
    %v1724 = vunpack.c.l.b16 %v1170
    %v1725 = vunpack.c.h.b16 %v1170
    %v1726 = vunpack.c.l.b16 %v1171
    %v1727 = vunpack.c.h.b16 %v1171
    %v1728 = vunpack.c.l.b16 %v1172
    %v1729 = vunpack.c.h.b16 %v1172
    %v1730 = vunpack.c.l.b16 %v1173
    %v1731 = vunpack.c.h.b16 %v1173
    %v1732 = vunpack.c.l.b16 %v1174
    %v1733 = vunpack.c.h.b16 %v1174
    %v1734 = vunpack.c.l.b16 %v1175
    %v1735 = vunpack.c.h.b16 %v1175
    %v1736 = vunpack.c.l.b16 %v1176
    %v1737 = vunpack.c.h.b16 %v1176
    %v1738 = vunpack.c.l.b16 %v1177
    %v1739 = vunpack.c.h.b16 %v1177
    %v1740 = vunpack.c.l.b16 %v1178
    %v1741 = vunpack.c.h.b16 %v1178
    %v1742 = vunpack.c.l.b16 %v1179
    %v1743 = vunpack.c.h.b16 %v1179
    %v1744 = vunpack.c.l.b16 %v1180
    %v1745 = vunpack.c.h.b16 %v1180
    %v1746 = vunpack.c.l.b16 %v1181
    %v1747 = vunpack.c.h.b16 %v1181
    %v1748 = vunpack.c.l.b16 %v1182
    %v1749 = vunpack.c.h.b16 %v1182
    %v1750 = vunpack.c.l.b16 %v1183
    %v1751 = vunpack.c.h.b16 %v1183
    %v1752 = vunpack.c.l.b16 %v1184
    %v1753 = vunpack.c.h.b16 %v1184
    %v1754 = vunpack.c.l.b16 %v1185
    %v1755 = vunpack.c.h.b16 %v1185
    %v1756 = vunpack.c.l.b16 %v1186
    %v1757 = vunpack.c.h.b16 %v1186
    %v1758 = vunpack.c.l.b16 %v1187
    %v1759 = vunpack.c.h.b16 %v1187
    %v1760 = vunpack.c.l.b16 %v1188
    %v1761 = vunpack.c.h.b16 %v1188
    %v1762 = vunpack.c.l.b16 %v1189
    %v1763 = vunpack.c.h.b16 %v1189
    %v1764 = vunpack.c.l.b16 %v1190
    %v1765 = vunpack.c.h.b16 %v1190
    %v1766 = vunpack.c.l.b16 %v1191
    %v1767 = vunpack.c.h.b16 %v1191
    %v1768 = vunpack.c.l.b16 %v1192
    %v1769 = vunpack.c.h.b16 %v1192
    %v1770 = vunpack.c.l.b16 %v1193
    %v1771 = vunpack.c.h.b16 %v1193
    %v1772 = vunpack.c.l.b16 %v1194
    %v1773 = vunpack.c.h.b16 %v1194
    %v1774 = vunpack.c.l.b16 %v1195
    %v1775 = vunpack.c.h.b16 %v1195
    %v1776 = vunpack.c.l.b16 %v1196
    %v1777 = vunpack.c.h.b16 %v1196
    %v1778 = vunpack.c.l.b16 %v1197
    %v1779 = vunpack.c.h.b16 %v1197
    %v1780 = vunpack.c.l.b16 %v1198
    %v1781 = vunpack.c.h.b16 %v1198
    %v1782 = vunpack.c.l.b16 %v1199
    %v1783 = vunpack.c.h.b16 %v1199
    %v1784 = vunpack.c.l.b16 %v1200
    %v1785 = vunpack.c.h.b16 %v1200
    %v1786 = vunpack.c.l.b16 %v1201
    %v1787 = vunpack.c.h.b16 %v1201
    %v1788 = vunpack.c.l.b16 %v1202
    %v1789 = vunpack.c.h.b16 %v1202
    %v1790 = vunpack.c.l.b16 %v1203
    %v1791 = vunpack.c.h.b16 %v1203
    %v1792 = vunpack.c.l.b16 %v1204
    %v1793 = vunpack.c.h.b16 %v1204
    %v1794 = vunpack.c.l.b16 %v1205
    %v1795 = vunpack.c.h.b16 %v1205
    %v1796 = vunpack.c.l.b16 %v1206
    %v1797 = vunpack.c.h.b16 %v1206
    %v1798 = vunpack.c.l.b16 %v1207
    %v1799 = vunpack.c.h.b16 %v1207
    %v1800 = vunpack.c.l.b16 %v1208
    %v1801 = vunpack.c.h.b16 %v1208
    %v1802 = vunpack.c.l.b16 %v1209
    %v1803 = vunpack.c.h.b16 %v1209
    %v1804 = vunpack.c.l.b16 %v1210
    %v1805 = vunpack.c.h.b16 %v1210
    %v1806 = vunpack.c.l.b16 %v1211
    %v1807 = vunpack.c.h.b16 %v1211
    %v1808 = vunpack.c.l.b16 %v1212
    %v1809 = vunpack.c.h.b16 %v1212
    %v1810 = vunpack.c.l.b16 %v1213
    %v1811 = vunpack.c.h.b16 %v1213
    %v1812 = vunpack.c.l.b16 %v1214
    %v1813 = vunpack.c.h.b16 %v1214
    %v1814 = vunpack.c.l.b16 %v1215
    %v1815 = vunpack.c.h.b16 %v1215
    %v1816 = vunpack.c.l.b16 %v1216
    %v1817 = vunpack.c.h.b16 %v1216
    %v1818 = vunpack.c.l.b16 %v1217
    %v1819 = vunpack.c.h.b16 %v1217
    %v1820 = vunpack.c.l.b16 %v1218
    %v1821 = vunpack.c.h.b16 %v1218
    %v1822 = vunpack.c.l.b16 %v1219
    %v1823 = vunpack.c.h.b16 %v1219
    %v1824 = vunpack.c.l.b16 %v1220
    %v1825 = vunpack.c.h.b16 %v1220
    %v1826 = vunpack.c.l.b16 %v1221
    %v1827 = vunpack.c.h.b16 %v1221
    %v1828 = vunpack.c.l.b16 %v1222
    %v1829 = vunpack.c.h.b16 %v1222
    %v1830 = vunpack.c.l.b16 %v1223
    %v1831 = vunpack.c.h.b16 %v1223
    %v1832 = vunpack.c.l.b16 %v1224
    %v1833 = vunpack.c.h.b16 %v1224
    %v1834 = vunpack.c.l.b16 %v1225
    %v1835 = vunpack.c.h.b16 %v1225
    %v1836 = vunpack.c.l.b16 %v1226
    %v1837 = vunpack.c.h.b16 %v1226
    %v1838 = vunpack.c.l.b16 %v1227
    %v1839 = vunpack.c.h.b16 %v1227
    %v1840 = vunpack.c.l.b16 %v1228
    %v1841 = vunpack.c.h.b16 %v1228
    %v1842 = vunpack.c.l.b16 %v1229
    %v1843 = vunpack.c.h.b16 %v1229
    %v1844 = vunpack.c.l.b16 %v1230
    %v1845 = vunpack.c.h.b16 %v1230
    %v1846 = vunpack.c.l.b16 %v1231
    %v1847 = vunpack.c.h.b16 %v1231
    %v1848 = vunpack.c.l.b16 %v1232
    %v1849 = vunpack.c.h.b16 %v1232
    %v1850 = vunpack.c.l.b16 %v1233
    %v1851 = vunpack.c.h.b16 %v1233
    %v1852 = vunpack.c.l.b16 %v1234
    %v1853 = vunpack.c.h.b16 %v1234
    %v1854 = vunpack.c.l.b16 %v1235
    %v1855 = vunpack.c.h.b16 %v1235
    %v1856 = vunpack.c.l.b16 %v1236
    %v1857 = vunpack.c.h.b16 %v1236
    %v1858 = vunpack.c.l.b16 %v1237
    %v1859 = vunpack.c.h.b16 %v1237
    %v1860 = vunpack.c.l.b16 %v1238
    %v1861 = vunpack.c.h.b16 %v1238
    %v1862 = vunpack.c.l.b16 %v1239
    %v1863 = vunpack.c.h.b16 %v1239
    %v1864 = vunpack.c.l.b16 %v1240
    %v1865 = vunpack.c.h.b16 %v1240
    %v1866 = vunpack.c.l.b16 %v1241
    %v1867 = vunpack.c.h.b16 %v1241
    %v1868 = vunpack.c.l.b16 %v1242
    %v1869 = vunpack.c.h.b16 %v1242
    %v1870 = vunpack.c.l.b16 %v1243
    %v1871 = vunpack.c.h.b16 %v1243
    %v1872 = vunpack.c.l.b16 %v1244
    %v1873 = vunpack.c.h.b16 %v1244
    %v1874 = vunpack.c.l.b16 %v1245
    %v1875 = vunpack.c.h.b16 %v1245
    %v1876 = vunpack.c.l.b16 %v1246
    %v1877 = vunpack.c.h.b16 %v1246
    %v1878 = vunpack.c.l.b16 %v1247
    %v1879 = vunpack.c.h.b16 %v1247
    %v1880 = vunpack.c.l.b16 %v1248
    %v1881 = vunpack.c.h.b16 %v1248
    %v1882 = vunpack.c.l.b16 %v1249
    %v1883 = vunpack.c.h.b16 %v1249
    %v1884 = vunpack.c.l.b16 %v1250
    %v1885 = vunpack.c.h.b16 %v1250
    %v1886 = vunpack.c.l.b16 %v1251
    %v1887 = vunpack.c.h.b16 %v1251
    %v1888 = vunpack.c.l.b16 %v1252
    %v1889 = vunpack.c.h.b16 %v1252
    %v1890 = vunpack.c.l.b16 %v1253
    %v1891 = vunpack.c.h.b16 %v1253
    %v1892 = vunpack.c.l.b16 %v1254
    %v1893 = vunpack.c.h.b16 %v1254
    %v1894 = vunpack.c.l.b16 %v1255
    %v1895 = vunpack.c.h.b16 %v1255
    %v1896 = vunpack.c.l.b16 %v1256
    %v1897 = vunpack.c.h.b16 %v1256
    %v1898 = vunpack.c.l.b16 %v1257
    %v1899 = vunpack.c.h.b16 %v1257
    %v1900 = vunpack.c.l.b16 %v1258
    %v1901 = vunpack.c.h.b16 %v1258
    %v1902 = vunpack.c.l.b16 %v1259
    %v1903 = vunpack.c.h.b16 %v1259
    %v1904 = vunpack.c.l.b16 %v1260
    %v1905 = vunpack.c.h.b16 %v1260
    %v1906 = vunpack.c.l.b16 %v1261
    %v1907 = vunpack.c.h.b16 %v1261
    %v1908 = vunpack.c.l.b16 %v1262
    %v1909 = vunpack.c.h.b16 %v1262
    %v1910 = vunpack.c.l.b16 %v1263
    %v1911 = vunpack.c.h.b16 %v1263
    %v1912 = vunpack.c.l.b16 %v1264
    %v1913 = vunpack.c.h.b16 %v1264
    %v1914 = vunpack.c.l.b16 %v1265
    %v1915 = vunpack.c.h.b16 %v1265
    %v1916 = vunpack.c.l.b16 %v1266
    %v1917 = vunpack.c.h.b16 %v1266
    %v1918 = vunpack.c.l.b16 %v1267
    %v1919 = vunpack.c.h.b16 %v1267
    %v1920 = vunpack.c.l.b16 %v1268
    %v1921 = vunpack.c.h.b16 %v1268
    %v1922 = vunpack.c.l.b16 %v1269
    %v1923 = vunpack.c.h.b16 %v1269
    %v1924 = vunpack.c.l.b16 %v1270
    %v1925 = vunpack.c.h.b16 %v1270
    %v1926 = vunpack.c.l.b16 %v1271
    %v1927 = vunpack.c.h.b16 %v1271
    %v1928 = vunpack.c.l.b16 %v1272
    %v1929 = vunpack.c.h.b16 %v1272
    %v1930 = vunpack.c.l.b16 %v1273
    %v1931 = vunpack.c.h.b16 %v1273
    %v1932 = vunpack.c.l.b16 %v1274
    %v1933 = vunpack.c.h.b16 %v1274
    %v1934 = vunpack.c.l.b16 %v1275
    %v1935 = vunpack.c.h.b16 %v1275
    %v1936 = vunpack.c.l.b16 %v1276
    %v1937 = vunpack.c.h.b16 %v1276
    %v1938 = vunpack.c.l.b16 %v1277
    %v1939 = vunpack.c.h.b16 %v1277
    %v1940 = vunpack.c.l.b16 %v1278
    %v1941 = vunpack.c.h.b16 %v1278
    %v1942 = vunpack.c.l.b16 %v1279
    %v1943 = vunpack.c.h.b16 %v1279
    %v1944 = vunpack.c.l.b16 %v1280
    %v1945 = vunpack.c.h.b16 %v1280
    %v1946 = vunpack.c.l.b16 %v1281
    %v1947 = vunpack.c.h.b16 %v1281
    %v1948 = vunpack.c.l.b16 %v1282
    %v1949 = vunpack.c.h.b16 %v1282
    %v1950 = vunpack.c.l.b16 %v1283
    %v1951 = vunpack.c.h.b16 %v1283
    %v1952 = vunpack.c.l.b16 %v1284
    %v1953 = vunpack.c.h.b16 %v1284
    %v1954 = vunpack.c.l.b16 %v1285
    %v1955 = vunpack.c.h.b16 %v1285
    %v1956 = vunpack.c.l.b16 %v1286
    %v1957 = vunpack.c.h.b16 %v1286
    %v1958 = vunpack.c.l.b16 %v1287
    %v1959 = vunpack.c.h.b16 %v1287
    %v1960 = vunpack.c.l.b16 %v1288
    %v1961 = vunpack.c.h.b16 %v1288
    %v1962 = vunpack.c.l.b16 %v1289
    %v1963 = vunpack.c.h.b16 %v1289
    %v1964 = vunpack.c.l.b16 %v1290
    %v1965 = vunpack.c.h.b16 %v1290
    %v1966 = vunpack.c.l.b16 %v1291
    %v1967 = vunpack.c.h.b16 %v1291
    %v1968 = vunpack.c.l.b16 %v1292
    %v1969 = vunpack.c.h.b16 %v1292
    %v1970 = vunpack.c.l.b16 %v1293
    %v1971 = vunpack.c.h.b16 %v1293
    %v1972 = vunpack.c.l.b16 %v1294
    %v1973 = vunpack.c.h.b16 %v1294
    %v1974 = vunpack.c.l.b16 %v1295
    %v1975 = vunpack.c.h.b16 %v1295
    %v1976 = vunpack.c.l.b16 %v1296
    %v1977 = vunpack.c.h.b16 %v1296
    %v1978 = vunpack.c.l.b16 %v1297
    %v1979 = vunpack.c.h.b16 %v1297
    %v1980 = vunpack.c.l.b16 %v1298
    %v1981 = vunpack.c.h.b16 %v1298
    %v1982 = vunpack.c.l.b16 %v1299
    %v1983 = vunpack.c.h.b16 %v1299
    %v1984 = vunpack.c.l.b16 %v1300
    %v1985 = vunpack.c.h.b16 %v1300
    %v1986 = vunpack.c.l.b16 %v1301
    %v1987 = vunpack.c.h.b16 %v1301
    %v1988 = vunpack.c.l.b16 %v1302
    %v1989 = vunpack.c.h.b16 %v1302
    %v1990 = vunpack.c.l.b16 %v1303
    %v1991 = vunpack.c.h.b16 %v1303
    %v1992 = vunpack.c.l.b16 %v1304
    %v1993 = vunpack.c.h.b16 %v1304
    %v1994 = vunpack.c.l.b16 %v1305
    %v1995 = vunpack.c.h.b16 %v1305
    %v1996 = vunpack.c.l.b16 %v1306
    %v1997 = vunpack.c.h.b16 %v1306
    %v1998 = vunpack.c.l.b16 %v1307
    %v1999 = vunpack.c.h.b16 %v1307
    %v2000 = vunpack.c.l.b16 %v1308
    %v2001 = vunpack.c.h.b16 %v1308
    %v2002 = vunpack.c.l.b16 %v1309
    %v2003 = vunpack.c.h.b16 %v1309
    %v2004 = vunpack.c.l.b16 %v1310
    %v2005 = vunpack.c.h.b16 %v1310
    %v2006 = vunpack.c.l.b16 %v1311
    %v2007 = vunpack.c.h.b16 %v1311
    %v2008 = vunpack.c.l.b16 %v1312
    %v2009 = vunpack.c.h.b16 %v1312
    %v2010 = vunpack.c.l.b16 %v1313
    %v2011 = vunpack.c.h.b16 %v1313
    %v2012 = vunpack.c.l.b16 %v1314
    %v2013 = vunpack.c.h.b16 %v1314
    %v2014 = vunpack.c.l.b16 %v1315
    %v2015 = vunpack.c.h.b16 %v1315
    %v2016 = vunpack.c.l.b16 %v1316
    %v2017 = vunpack.c.h.b16 %v1316
    %v2018 = vunpack.c.l.b16 %v1317
    %v2019 = vunpack.c.h.b16 %v1317
    %v2020 = vunpack.c.l.b16 %v1318
    %v2021 = vunpack.c.h.b16 %v1318
    %v2022 = vunpack.c.l.b16 %v1319
    %v2023 = vunpack.c.h.b16 %v1319
    %v2024 = vunpack.c.l.b16 %v1320
    %v2025 = vunpack.c.h.b16 %v1320
    %v2026 = vunpack.c.l.b16 %v1321
    %v2027 = vunpack.c.h.b16 %v1321
    %v2028 = vunpack.c.l.b16 %v1322
    %v2029 = vunpack.c.h.b16 %v1322
    %v2030 = vunpack.c.l.b16 %v1323
    %v2031 = vunpack.c.h.b16 %v1323
    %v2032 = vunpack.c.l.b16 %v1324
    %v2033 = vunpack.c.h.b16 %v1324
    %v2034 = vunpack.c.l.b16 %v1325
    %v2035 = vunpack.c.h.b16 %v1325
    %v2036 = vunpack.c.l.b16 %v1326
    %v2037 = vunpack.c.h.b16 %v1326
    %v2038 = vunpack.c.l.b16 %v1327
    %v2039 = vunpack.c.h.b16 %v1327
    %v2040 = vunpack.c.l.b16 %v1328
    %v2041 = vunpack.c.h.b16 %v1328
    %v2042 = vunpack.c.l.b16 %v1329
    %v2043 = vunpack.c.h.b16 %v1329
    %v2044 = vunpack.c.l.b16 %v1330
    %v2045 = vunpack.c.h.b16 %v1330
    %v2046 = vunpack.c.l.b16 %v1331
    %v2047 = vunpack.c.h.b16 %v1331
    %v2048 = vunpack.c.l.b16 %v1332
    %v2049 = vunpack.c.h.b16 %v1332
    %v2050 = vunpack.c.l.b16 %v1333
    %v2051 = vunpack.c.h.b16 %v1333
    %v2052 = vunpack.c.l.b16 %v1334
    %v2053 = vunpack.c.h.b16 %v1334
    %v2054 = vunpack.c.l.b16 %v1335
    %v2055 = vunpack.c.h.b16 %v1335
    %v2056 = vunpack.c.l.b16 %v1336
    %v2057 = vunpack.c.h.b16 %v1336
    %v2058 = vunpack.c.l.b16 %v1337
    %v2059 = vunpack.c.h.b16 %v1337
    %v2060 = vunpack.c.l.b16 %v1338
    %v2061 = vunpack.c.h.b16 %v1338
    %v2062 = vunpack.c.l.b16 %v1339
    %v2063 = vunpack.c.h.b16 %v1339
    %v2064 = vunpack.c.l.b16 %v1340
    %v2065 = vunpack.c.h.b16 %v1340
    %v2066 = vunpack.c.l.b16 %v1341
    %v2067 = vunpack.c.h.b16 %v1341
    %v2068 = vunpack.c.l.b16 %v1342
    %v2069 = vunpack.c.h.b16 %v1342
    %v2070 = vunpack.c.l.b16 %v1343
    %v2071 = vunpack.c.h.b16 %v1343
    %v2072 = vunpack.c.l.b16 %v1344
    %v2073 = vunpack.c.h.b16 %v1344
    %v2074 = vunpack.c.l.b16 %v1345
    %v2075 = vunpack.c.h.b16 %v1345
    %v2076 = vunpack.c.l.b16 %v1346
    %v2077 = vunpack.c.h.b16 %v1346
    %v2078 = vunpack.c.l.b16 %v1347
    %v2079 = vunpack.c.h.b16 %v1347
    %v2080 = vunpack.c.l.b16 %v1348
    %v2081 = vunpack.c.h.b16 %v1348
    %v2082 = vunpack.c.l.b16 %v1349
    %v2083 = vunpack.c.h.b16 %v1349
    %v2084 = vunpack.c.l.b16 %v1350
    %v2085 = vunpack.c.h.b16 %v1350
    %v2086 = vunpack.c.l.b16 %v1351
    %v2087 = vunpack.c.h.b16 %v1351
    %v2088 = vunpack.c.l.b16 %v1352
    %v2089 = vunpack.c.h.b16 %v1352
    %v2090 = vunpack.c.l.b16 %v1353
    %v2091 = vunpack.c.h.b16 %v1353
    %v2092 = vunpack.c.l.b16 %v1354
    %v2093 = vunpack.c.h.b16 %v1354
    %v2094 = vunpack.c.l.b16 %v1355
    %v2095 = vunpack.c.h.b16 %v1355
    %v2096 = vunpack.c.l.b16 %v1356
    %v2097 = vunpack.c.h.b16 %v1356
    %v2098 = vunpack.c.l.b16 %v1357
    %v2099 = vunpack.c.h.b16 %v1357
    %v2100 = vunpack.c.l.b16 %v1358
    %v2101 = vunpack.c.h.b16 %v1358
    %v2102 = vunpack.c.l.b16 %v1359
    %v2103 = vunpack.c.h.b16 %v1359
    %v2104 = vunpack.c.l.b16 %v1360
    %v2105 = vunpack.c.h.b16 %v1360
    %v2106 = vunpack.c.l.b16 %v1361
    %v2107 = vunpack.c.h.b16 %v1361
    %v2108 = vunpack.c.l.b16 %v1362
    %v2109 = vunpack.c.h.b16 %v1362
    %v2110 = vunpack.c.l.b16 %v1363
    %v2111 = vunpack.c.h.b16 %v1363
    %v2112 = vunpack.c.l.b16 %v1364
    %v2113 = vunpack.c.h.b16 %v1364
    %v2114 = vunpack.c.l.b16 %v1365
    %v2115 = vunpack.c.h.b16 %v1365
    %v2116 = vunpack.c.l.b16 %v1366
    %v2117 = vunpack.c.h.b16 %v1366
    %v2118 = vunpack.c.l.b16 %v1367
    %v2119 = vunpack.c.h.b16 %v1367
    %v2120 = vunpack.c.l.b16 %v1368
    %v2121 = vunpack.c.h.b16 %v1368
    %v2122 = vunpack.c.l.b16 %v1369
    %v2123 = vunpack.c.h.b16 %v1369
    %v2124 = vunpack.c.l.b16 %v1370
    %v2125 = vunpack.c.h.b16 %v1370
    %v2126 = vunpack.c.l.b16 %v1371
    %v2127 = vunpack.c.h.b16 %v1371
    %v2128 = vunpack.c.l.b16 %v1372
    %v2129 = vunpack.c.h.b16 %v1372
    %v2130 = vunpack.c.l.b16 %v1373
    %v2131 = vunpack.c.h.b16 %v1373
    %v2132 = vunpack.c.l.b16 %v1374
    %v2133 = vunpack.c.h.b16 %v1374
    %v2134 = vunpack.c.l.b16 %v1375
    %v2135 = vunpack.c.h.b16 %v1375
    %v2136 = vunpack.c.l.b16 %v1376
    %v2137 = vunpack.c.h.b16 %v1376
    %v2138 = vunpack.c.l.b16 %v1377
    %v2139 = vunpack.c.h.b16 %v1377
    %v2140 = vunpack.c.l.b16 %v1378
    %v2141 = vunpack.c.h.b16 %v1378
    %v2142 = vunpack.c.l.b16 %v1379
    %v2143 = vunpack.c.h.b16 %v1379
    %v2144 = vunpack.c.l.b16 %v1380
    %v2145 = vunpack.c.h.b16 %v1380
    %v2146 = vunpack.c.l.b16 %v1381
    %v2147 = vunpack.c.h.b16 %v1381
    %v2148 = vunpack.c.l.b16 %v1382
    %v2149 = vunpack.c.h.b16 %v1382
    %v2150 = vunpack.c.l.b16 %v1383
    %v2151 = vunpack.c.h.b16 %v1383
    %v2152 = vpack.c.b16 %v1648, %v1640
    %v2153 = vpack.c.b16 %v1649, %v1641
    %v2154 = vpack.c.b16 %v1650, %v1642
    %v2155 = vpack.c.b16 %v1651, %v1643
    %v2156 = vpack.c.b16 %v1652, %v1644
    %v2157 = vpack.c.b16 %v1653, %v1645
    %v2158 = vpack.c.b16 %v1654, %v1646
    %v2159 = vpack.c.b16 %v1655, %v1647
    %v2160 = vpack.c.b16 %v1664, %v1656
    %v2161 = vpack.c.b16 %v1665, %v1657
    %v2162 = vpack.c.b16 %v1666, %v1658
    %v2163 = vpack.c.b16 %v1667, %v1659
    %v2164 = vpack.c.b16 %v1668, %v1660
    %v2165 = vpack.c.b16 %v1669, %v1661
    %v2166 = vpack.c.b16 %v1670, %v1662
    %v2167 = vpack.c.b16 %v1671, %v1663
    %v2168 = vpack.c.b16 %v1680, %v1672
    %v2169 = vpack.c.b16 %v1681, %v1673
    %v2170 = vpack.c.b16 %v1682, %v1674
    %v2171 = vpack.c.b16 %v1683, %v1675
    %v2172 = vpack.c.b16 %v1684, %v1676
    %v2173 = vpack.c.b16 %v1685, %v1677
    %v2174 = vpack.c.b16 %v1686, %v1678
    %v2175 = vpack.c.b16 %v1687, %v1679
    %v2176 = vpack.c.b16 %v1696, %v1688
    %v2177 = vpack.c.b16 %v1697, %v1689
    %v2178 = vpack.c.b16 %v1698, %v1690
    %v2179 = vpack.c.b16 %v1699, %v1691
    %v2180 = vpack.c.b16 %v1700, %v1692
    %v2181 = vpack.c.b16 %v1701, %v1693
    %v2182 = vpack.c.b16 %v1702, %v1694
    %v2183 = vpack.c.b16 %v1703, %v1695
    %v2184 = vpack.c.b16 %v1712, %v1704
    %v2185 = vpack.c.b16 %v1713, %v1705
    %v2186 = vpack.c.b16 %v1714, %v1706
    %v2187 = vpack.c.b16 %v1715, %v1707
    %v2188 = vpack.c.b16 %v1716, %v1708
    %v2189 = vpack.c.b16 %v1717, %v1709
    %v2190 = vpack.c.b16 %v1718, %v1710
    %v2191 = vpack.c.b16 %v1719, %v1711
    %v2192 = vpack.c.b16 %v1728, %v1720
    %v2193 = vpack.c.b16 %v1729, %v1721
    %v2194 = vpack.c.b16 %v1730, %v1722
    %v2195 = vpack.c.b16 %v1731, %v1723
    %v2196 = vpack.c.b16 %v1732, %v1724
    %v2197 = vpack.c.b16 %v1733, %v1725
    %v2198 = vpack.c.b16 %v1734, %v1726
    %v2199 = vpack.c.b16 %v1735, %v1727
    %v2200 = vpack.c.b16 %v1744, %v1736
    %v2201 = vpack.c.b16 %v1745, %v1737
    %v2202 = vpack.c.b16 %v1746, %v1738
    %v2203 = vpack.c.b16 %v1747, %v1739
    %v2204 = vpack.c.b16 %v1748, %v1740
    %v2205 = vpack.c.b16 %v1749, %v1741
    %v2206 = vpack.c.b16 %v1750, %v1742
    %v2207 = vpack.c.b16 %v1751, %v1743
    %v2208 = vpack.c.b16 %v1760, %v1752
    %v2209 = vpack.c.b16 %v1761, %v1753
    %v2210 = vpack.c.b16 %v1762, %v1754
    %v2211 = vpack.c.b16 %v1763, %v1755
    %v2212 = vpack.c.b16 %v1764, %v1756
    %v2213 = vpack.c.b16 %v1765, %v1757
    %v2214 = vpack.c.b16 %v1766, %v1758
    %v2215 = vpack.c.b16 %v1767, %v1759
    %v2216 = vpack.c.b16 %v1776, %v1768
    %v2217 = vpack.c.b16 %v1777, %v1769
    %v2218 = vpack.c.b16 %v1778, %v1770
    %v2219 = vpack.c.b16 %v1779, %v1771
    %v2220 = vpack.c.b16 %v1780, %v1772
    %v2221 = vpack.c.b16 %v1781, %v1773
    %v2222 = vpack.c.b16 %v1782, %v1774
    %v2223 = vpack.c.b16 %v1783, %v1775
    %v2224 = vpack.c.b16 %v1792, %v1784
    %v2225 = vpack.c.b16 %v1793, %v1785
    %v2226 = vpack.c.b16 %v1794, %v1786
    %v2227 = vpack.c.b16 %v1795, %v1787
    %v2228 = vpack.c.b16 %v1796, %v1788
    %v2229 = vpack.c.b16 %v1797, %v1789
    %v2230 = vpack.c.b16 %v1798, %v1790
    %v2231 = vpack.c.b16 %v1799, %v1791
    %v2232 = vpack.c.b16 %v1808, %v1800
    %v2233 = vpack.c.b16 %v1809, %v1801
    %v2234 = vpack.c.b16 %v1810, %v1802
    %v2235 = vpack.c.b16 %v1811, %v1803
    %v2236 = vpack.c.b16 %v1812, %v1804
    %v2237 = vpack.c.b16 %v1813, %v1805
    %v2238 = vpack.c.b16 %v1814, %v1806
    %v2239 = vpack.c.b16 %v1815, %v1807
    %v2240 = vpack.c.b16 %v1824, %v1816
    %v2241 = vpack.c.b16 %v1825, %v1817
    %v2242 = vpack.c.b16 %v1826, %v1818
    %v2243 = vpack.c.b16 %v1827, %v1819
    %v2244 = vpack.c.b16 %v1828, %v1820
    %v2245 = vpack.c.b16 %v1829, %v1821
    %v2246 = vpack.c.b16 %v1830, %v1822
    %v2247 = vpack.c.b16 %v1831, %v1823
    %v2248 = vpack.c.b16 %v1840, %v1832
    %v2249 = vpack.c.b16 %v1841, %v1833
    %v2250 = vpack.c.b16 %v1842, %v1834
    %v2251 = vpack.c.b16 %v1843, %v1835
    %v2252 = vpack.c.b16 %v1844, %v1836
    %v2253 = vpack.c.b16 %v1845, %v1837
    %v2254 = vpack.c.b16 %v1846, %v1838
    %v2255 = vpack.c.b16 %v1847, %v1839
    %v2256 = vpack.c.b16 %v1856, %v1848
    %v2257 = vpack.c.b16 %v1857, %v1849
    %v2258 = vpack.c.b16 %v1858, %v1850
    %v2259 = vpack.c.b16 %v1859, %v1851
    %v2260 = vpack.c.b16 %v1860, %v1852
    %v2261 = vpack.c.b16 %v1861, %v1853
    %v2262 = vpack.c.b16 %v1862, %v1854
    %v2263 = vpack.c.b16 %v1863, %v1855
    %v2264 = vpack.c.b16 %v1872, %v1864
    %v2265 = vpack.c.b16 %v1873, %v1865
    %v2266 = vpack.c.b16 %v1874, %v1866
    %v2267 = vpack.c.b16 %v1875, %v1867
    %v2268 = vpack.c.b16 %v1876, %v1868
    %v2269 = vpack.c.b16 %v1877, %v1869
    %v2270 = vpack.c.b16 %v1878, %v1870
    %v2271 = vpack.c.b16 %v1879, %v1871
    %v2272 = vpack.c.b16 %v1888, %v1880
    %v2273 = vpack.c.b16 %v1889, %v1881
    %v2274 = vpack.c.b16 %v1890, %v1882
    %v2275 = vpack.c.b16 %v1891, %v1883
    %v2276 = vpack.c.b16 %v1892, %v1884
    %v2277 = vpack.c.b16 %v1893, %v1885
    %v2278 = vpack.c.b16 %v1894, %v1886
    %v2279 = vpack.c.b16 %v1895, %v1887
    %v2280 = vpack.c.b16 %v1904, %v1896
    %v2281 = vpack.c.b16 %v1905, %v1897
    %v2282 = vpack.c.b16 %v1906, %v1898
    %v2283 = vpack.c.b16 %v1907, %v1899
    %v2284 = vpack.c.b16 %v1908, %v1900
    %v2285 = vpack.c.b16 %v1909, %v1901
    %v2286 = vpack.c.b16 %v1910, %v1902
    %v2287 = vpack.c.b16 %v1911, %v1903
    %v2288 = vpack.c.b16 %v1920, %v1912
    %v2289 = vpack.c.b16 %v1921, %v1913
    %v2290 = vpack.c.b16 %v1922, %v1914
    %v2291 = vpack.c.b16 %v1923, %v1915
    %v2292 = vpack.c.b16 %v1924, %v1916
    %v2293 = vpack.c.b16 %v1925, %v1917
    %v2294 = vpack.c.b16 %v1926, %v1918
    %v2295 = vpack.c.b16 %v1927, %v1919
    %v2296 = vpack.c.b16 %v1936, %v1928
    %v2297 = vpack.c.b16 %v1937, %v1929
    %v2298 = vpack.c.b16 %v1938, %v1930
    %v2299 = vpack.c.b16 %v1939, %v1931
    %v2300 = vpack.c.b16 %v1940, %v1932
    %v2301 = vpack.c.b16 %v1941, %v1933
    %v2302 = vpack.c.b16 %v1942, %v1934
    %v2303 = vpack.c.b16 %v1943, %v1935
    %v2304 = vpack.c.b16 %v1952, %v1944
    %v2305 = vpack.c.b16 %v1953, %v1945
    %v2306 = vpack.c.b16 %v1954, %v1946
    %v2307 = vpack.c.b16 %v1955, %v1947
    %v2308 = vpack.c.b16 %v1956, %v1948
    %v2309 = vpack.c.b16 %v1957, %v1949
    %v2310 = vpack.c.b16 %v1958, %v1950
    %v2311 = vpack.c.b16 %v1959, %v1951
    %v2312 = vpack.c.b16 %v1968, %v1960
    %v2313 = vpack.c.b16 %v1969, %v1961
    %v2314 = vpack.c.b16 %v1970, %v1962
    %v2315 = vpack.c.b16 %v1971, %v1963
    %v2316 = vpack.c.b16 %v1972, %v1964
    %v2317 = vpack.c.b16 %v1973, %v1965
    %v2318 = vpack.c.b16 %v1974, %v1966
    %v2319 = vpack.c.b16 %v1975, %v1967
    %v2320 = vpack.c.b16 %v1984, %v1976
    %v2321 = vpack.c.b16 %v1985, %v1977
    %v2322 = vpack.c.b16 %v1986, %v1978
    %v2323 = vpack.c.b16 %v1987, %v1979
    %v2324 = vpack.c.b16 %v1988, %v1980
    %v2325 = vpack.c.b16 %v1989, %v1981
    %v2326 = vpack.c.b16 %v1990, %v1982
    %v2327 = vpack.c.b16 %v1991, %v1983
    %v2328 = vpack.c.b16 %v2000, %v1992
    %v2329 = vpack.c.b16 %v2001, %v1993
    %v2330 = vpack.c.b16 %v2002, %v1994
    %v2331 = vpack.c.b16 %v2003, %v1995
    %v2332 = vpack.c.b16 %v2004, %v1996
    %v2333 = vpack.c.b16 %v2005, %v1997
    %v2334 = vpack.c.b16 %v2006, %v1998
    %v2335 = vpack.c.b16 %v2007, %v1999
    %v2336 = vpack.c.b16 %v2016, %v2008
    %v2337 = vpack.c.b16 %v2017, %v2009
    %v2338 = vpack.c.b16 %v2018, %v2010
    %v2339 = vpack.c.b16 %v2019, %v2011
    %v2340 = vpack.c.b16 %v2020, %v2012
    %v2341 = vpack.c.b16 %v2021, %v2013
    %v2342 = vpack.c.b16 %v2022, %v2014
    %v2343 = vpack.c.b16 %v2023, %v2015
    %v2344 = vpack.c.b16 %v2032, %v2024
    %v2345 = vpack.c.b16 %v2033, %v2025
    %v2346 = vpack.c.b16 %v2034, %v2026
    %v2347 = vpack.c.b16 %v2035, %v2027
    %v2348 = vpack.c.b16 %v2036, %v2028
    %v2349 = vpack.c.b16 %v2037, %v2029
    %v2350 = vpack.c.b16 %v2038, %v2030
    %v2351 = vpack.c.b16 %v2039, %v2031
    %v2352 = vpack.c.b16 %v2048, %v2040
    %v2353 = vpack.c.b16 %v2049, %v2041
    %v2354 = vpack.c.b16 %v2050, %v2042
    %v2355 = vpack.c.b16 %v2051, %v2043
    %v2356 = vpack.c.b16 %v2052, %v2044
    %v2357 = vpack.c.b16 %v2053, %v2045
    %v2358 = vpack.c.b16 %v2054, %v2046
    %v2359 = vpack.c.b16 %v2055, %v2047
    %v2360 = vpack.c.b16 %v2064, %v2056
    %v2361 = vpack.c.b16 %v2065, %v2057
    %v2362 = vpack.c.b16 %v2066, %v2058
    %v2363 = vpack.c.b16 %v2067, %v2059
    %v2364 = vpack.c.b16 %v2068, %v2060
    %v2365 = vpack.c.b16 %v2069, %v2061
    %v2366 = vpack.c.b16 %v2070, %v2062
    %v2367 = vpack.c.b16 %v2071, %v2063
    %v2368 = vpack.c.b16 %v2080, %v2072
    %v2369 = vpack.c.b16 %v2081, %v2073
    %v2370 = vpack.c.b16 %v2082, %v2074
    %v2371 = vpack.c.b16 %v2083, %v2075
    %v2372 = vpack.c.b16 %v2084, %v2076
    %v2373 = vpack.c.b16 %v2085, %v2077
    %v2374 = vpack.c.b16 %v2086, %v2078
    %v2375 = vpack.c.b16 %v2087, %v2079
    %v2376 = vpack.c.b16 %v2096, %v2088
    %v2377 = vpack.c.b16 %v2097, %v2089
    %v2378 = vpack.c.b16 %v2098, %v2090
    %v2379 = vpack.c.b16 %v2099, %v2091
    %v2380 = vpack.c.b16 %v2100, %v2092
    %v2381 = vpack.c.b16 %v2101, %v2093
    %v2382 = vpack.c.b16 %v2102, %v2094
    %v2383 = vpack.c.b16 %v2103, %v2095
    %v2384 = vpack.c.b16 %v2112, %v2104
    %v2385 = vpack.c.b16 %v2113, %v2105
    %v2386 = vpack.c.b16 %v2114, %v2106
    %v2387 = vpack.c.b16 %v2115, %v2107
    %v2388 = vpack.c.b16 %v2116, %v2108
    %v2389 = vpack.c.b16 %v2117, %v2109
    %v2390 = vpack.c.b16 %v2118, %v2110
    %v2391 = vpack.c.b16 %v2119, %v2111
    %v2392 = vpack.c.b16 %v2128, %v2120
    %v2393 = vpack.c.b16 %v2129, %v2121
    %v2394 = vpack.c.b16 %v2130, %v2122
    %v2395 = vpack.c.b16 %v2131, %v2123
    %v2396 = vpack.c.b16 %v2132, %v2124
    %v2397 = vpack.c.b16 %v2133, %v2125
    %v2398 = vpack.c.b16 %v2134, %v2126
    %v2399 = vpack.c.b16 %v2135, %v2127
    %v2400 = vpack.c.b16 %v2144, %v2136
    %v2401 = vpack.c.b16 %v2145, %v2137
    %v2402 = vpack.c.b16 %v2146, %v2138
    %v2403 = vpack.c.b16 %v2147, %v2139
    %v2404 = vpack.c.b16 %v2148, %v2140
    %v2405 = vpack.c.b16 %v2149, %v2141
    %v2406 = vpack.c.b16 %v2150, %v2142
    %v2407 = vpack.c.b16 %v2151, %v2143
    %2664 = vmatprep.subr.bf16.mxu0 %v2153
    %2665 = vmatpush1.bf16.msra.mxu0 %v2152
    %2666 = vmatprep.subr.bf16.mxu0 %v2161
    %2667 = vmatpush1.bf16.msra.mxu0 %v2160
    %2668 = vmatprep.subr.bf16.mxu0 %v2169
    %2669 = vmatpush1.bf16.msra.mxu0 %v2168
    %2670 = vmatprep.subr.bf16.mxu0 %v2177
    %2671 = vmatpush1.bf16.msra.mxu0 %v2176
    %2672 = vmatprep.subr.bf16.mxu0 %v2185
    %2673 = vmatpush1.bf16.msra.mxu0 %v2184
    %2674 = vmatprep.subr.bf16.mxu0 %v2193
    %2675 = vmatpush1.bf16.msra.mxu0 %v2192
    %2676 = vmatprep.subr.bf16.mxu0 %v2201
    %2677 = vmatpush1.bf16.msra.mxu0 %v2200
    %2678 = vmatprep.subr.bf16.mxu0 %v2209
    %2679 = vmatpush1.bf16.msra.mxu0 %v2208
    %2680 = vmatprep.subr.bf16.mxu0 %v2217
    %2681 = vmatpush1.bf16.msra.mxu0 %v2216
    %2682 = vmatprep.subr.bf16.mxu0 %v2225
    %2683 = vmatpush1.bf16.msra.mxu0 %v2224
    %2684 = vmatprep.subr.bf16.mxu0 %v2233
    %2685 = vmatpush1.bf16.msra.mxu0 %v2232
    %2686 = vmatprep.subr.bf16.mxu0 %v2241
    %2687 = vmatpush1.bf16.msra.mxu0 %v2240
    %2688 = vmatprep.subr.bf16.mxu0 %v2249
    %2689 = vmatpush1.bf16.msra.mxu0 %v2248
    %2690 = vmatprep.subr.bf16.mxu0 %v2257
    %2691 = vmatpush1.bf16.msra.mxu0 %v2256
    %2692 = vmatprep.subr.bf16.mxu0 %v2265
    %2693 = vmatpush1.bf16.msra.mxu0 %v2264
    %2694 = vmatprep.subr.bf16.mxu0 %v2273
    %2695 = vmatpush1.bf16.msra.mxu0 %v2272
    %2696 = vmatprep.mubr.bf16.mxu0 %v205
    %2697 = vmatmul.mubr.bf16.gmra.mrb[0].mxu0 %v204
    %v2698 = vpop.f32.mrb[0].mxu0
    %v2699 = vadd.f32 0.0, %v2698
    %v2700 = vpop.f32.mrb[0].mxu0
    %v2701 = vadd.f32 0.0, %v2700
    %v2702 = vpop.f32.mrb[0].mxu0
    %v2703 = vadd.f32 0.0, %v2702
    %v2704 = vpop.f32.mrb[0].mxu0
    %v2705 = vadd.f32 0.0, %v2704
    %2706 = vmatprep.mubr.bf16.mxu0 %v209
    %2707 = vmatmul.mubr.bf16.gmra.mrb[0].mxu0 %v208
    %v2708 = vpop.f32.mrb[0].mxu0
    %v2709 = vadd.f32 0.0, %v2708
    %v2710 = vpop.f32.mrb[0].mxu0
    %v2711 = vadd.f32 0.0, %v2710
    %v2712 = vpop.f32.mrb[0].mxu0
    %v2713 = vadd.f32 0.0, %v2712
    %v2714 = vpop.f32.mrb[0].mxu0
    %v2715 = vadd.f32 0.0, %v2714
    %2716 = vdwg.mxu0
    %2717 = vmatprep.subr.bf16.mxu0 %v2281
    %2718 = vmatpush1.bf16.msra.mxu0 %v2280
    %2719 = vmatprep.subr.bf16.mxu0 %v2289
    %2720 = vmatpush1.bf16.msra.mxu0 %v2288
    %2721 = vmatprep.subr.bf16.mxu0 %v2297
    %2722 = vmatpush1.bf16.msra.mxu0 %v2296
    %2723 = vmatprep.subr.bf16.mxu0 %v2305
    %2724 = vmatpush1.bf16.msra.mxu0 %v2304
    %2725 = vmatprep.subr.bf16.mxu0 %v2313
    %2726 = vmatpush1.bf16.msra.mxu0 %v2312
    %2727 = vmatprep.subr.bf16.mxu0 %v2321
    %2728 = vmatpush1.bf16.msra.mxu0 %v2320
    %2729 = vmatprep.subr.bf16.mxu0 %v2329
    %2730 = vmatpush1.bf16.msra.mxu0 %v2328
    %2731 = vmatprep.subr.bf16.mxu0 %v2337
    %2732 = vmatpush1.bf16.msra.mxu0 %v2336
    %2733 = vmatprep.subr.bf16.mxu0 %v2345
    %2734 = vmatpush1.bf16.msra.mxu0 %v2344
    %2735 = vmatprep.subr.bf16.mxu0 %v2353
    %2736 = vmatpush1.bf16.msra.mxu0 %v2352
    %2737 = vmatprep.subr.bf16.mxu0 %v2361
    %2738 = vmatpush1.bf16.msra.mxu0 %v2360
    %2739 = vmatprep.subr.bf16.mxu0 %v2369
    %2740 = vmatpush1.bf16.msra.mxu0 %v2368
    %2741 = vmatprep.subr.bf16.mxu0 %v2377
    %2742 = vmatpush1.bf16.msra.mxu0 %v2376
    %2743 = vmatprep.subr.bf16.mxu0 %v2385
    %2744 = vmatpush1.bf16.msra.mxu0 %v2384
    %2745 = vmatprep.subr.bf16.mxu0 %v2393
    %2746 = vmatpush1.bf16.msra.mxu0 %v2392
    %2747 = vmatprep.subr.bf16.mxu0 %v2401
    %2748 = vmatpush1.bf16.msra.mxu0 %v2400
    %2749 = vmatprep.mubr.bf16.mxu0 %v207
    %2750 = vmatmul.mubr.bf16.gmra.mrb[0].mxu0 %v206
    %v2751 = vpop.f32.mrb[0].mxu0
    %v2752 = vadd.f32 %v2699, %v2751
    %v2753 = vpop.f32.mrb[0].mxu0
    %v2754 = vadd.f32 %v2701, %v2753
    %v2755 = vpop.f32.mrb[0].mxu0
    %v2756 = vadd.f32 %v2703, %v2755
    %v2757 = vpop.f32.mrb[0].mxu0
    %v2758 = vadd.f32 %v2705, %v2757
    %2759 = vmatprep.mubr.bf16.mxu0 %v211
    %2760 = vmatmul.mubr.bf16.gmra.mrb[0].mxu0 %v210
    %v2761 = vpop.f32.mrb[0].mxu0
    %v2762 = vadd.f32 %v2709, %v2761
    %v2763 = vpop.f32.mrb[0].mxu0
    %v2764 = vadd.f32 %v2711, %v2763
    %v2765 = vpop.f32.mrb[0].mxu0
    %v2766 = vadd.f32 %v2713, %v2765
    %v2767 = vpop.f32.mrb[0].mxu0
    %v2768 = vadd.f32 %v2715, %v2767
    %2769 = vdwg.mxu0
    %2770 = vmatprep.subr.bf16.mxu0 %v2155
    %2771 = vmatpush1.bf16.msra.mxu0 %v2154
    %2772 = vmatprep.subr.bf16.mxu0 %v2163
    %2773 = vmatpush1.bf16.msra.mxu0 %v2162
    %2774 = vmatprep.subr.bf16.mxu0 %v2171
    %2775 = vmatpush1.bf16.msra.mxu0 %v2170
    %2776 = vmatprep.subr.bf16.mxu0 %v2179
    %2777 = vmatpush1.bf16.msra.mxu0 %v2178
    %2778 = vmatprep.subr.bf16.mxu0 %v2187
    %2779 = vmatpush1.bf16.msra.mxu0 %v2186
    %2780 = vmatprep.subr.bf16.mxu0 %v2195
    %2781 = vmatpush1.bf16.msra.mxu0 %v2194
    %2782 = vmatprep.subr.bf16.mxu0 %v2203
    %2783 = vmatpush1.bf16.msra.mxu0 %v2202
    %2784 = vmatprep.subr.bf16.mxu0 %v2211
    %2785 = vmatpush1.bf16.msra.mxu0 %v2210
    %2786 = vmatprep.subr.bf16.mxu0 %v2219
    %2787 = vmatpush1.bf16.msra.mxu0 %v2218
    %2788 = vmatprep.subr.bf16.mxu0 %v2227
    %2789 = vmatpush1.bf16.msra.mxu0 %v2226
    %2790 = vmatprep.subr.bf16.mxu0 %v2235
    %2791 = vmatpush1.bf16.msra.mxu0 %v2234
    %2792 = vmatprep.subr.bf16.mxu0 %v2243
    %2793 = vmatpush1.bf16.msra.mxu0 %v2242
    %2794 = vmatprep.subr.bf16.mxu0 %v2251
    %2795 = vmatpush1.bf16.msra.mxu0 %v2250
    %2796 = vmatprep.subr.bf16.mxu0 %v2259
    %2797 = vmatpush1.bf16.msra.mxu0 %v2258
    %2798 = vmatprep.subr.bf16.mxu0 %v2267
    %2799 = vmatpush1.bf16.msra.mxu0 %v2266
    %2800 = vmatprep.subr.bf16.mxu0 %v2275
    %2801 = vmatpush1.bf16.msra.mxu0 %v2274
    %2802 = vmatprep.mubr.bf16.mxu0 %v205
    %2803 = vmatmul.mubr.bf16.gmra.mrb[0].mxu0 %v204
    %v2804 = vpop.f32.mrb[0].mxu0
    %v2805 = vadd.f32 0.0, %v2804
    %v2806 = vpop.f32.mrb[0].mxu0
    %v2807 = vadd.f32 0.0, %v2806
    %v2808 = vpop.f32.mrb[0].mxu0
    %v2809 = vadd.f32 0.0, %v2808
    %v2810 = vpop.f32.mrb[0].mxu0
    %v2811 = vadd.f32 0.0, %v2810
    %2812 = vmatprep.mubr.bf16.mxu0 %v209
    %2813 = vmatmul.mubr.bf16.gmra.mrb[0].mxu0 %v208
    %v2814 = vpop.f32.mrb[0].mxu0
    %v2815 = vadd.f32 0.0, %v2814
    %v2816 = vpop.f32.mrb[0].mxu0
    %v2817 = vadd.f32 0.0, %v2816
    %v2818 = vpop.f32.mrb[0].mxu0
    %v2819 = vadd.f32 0.0, %v2818
    %v2820 = vpop.f32.mrb[0].mxu0
    %v2821 = vadd.f32 0.0, %v2820
    %2822 = vdwg.mxu0
    %2823 = vmatprep.subr.bf16.mxu0 %v2283
    %2824 = vmatpush1.bf16.msra.mxu0 %v2282
    %2825 = vmatprep.subr.bf16.mxu0 %v2291
    %2826 = vmatpush1.bf16.msra.mxu0 %v2290
    %2827 = vmatprep.subr.bf16.mxu0 %v2299
    %2828 = vmatpush1.bf16.msra.mxu0 %v2298
    %2829 = vmatprep.subr.bf16.mxu0 %v2307
    %2830 = vmatpush1.bf16.msra.mxu0 %v2306
    %2831 = vmatprep.subr.bf16.mxu0 %v2315
    %2832 = vmatpush1.bf16.msra.mxu0 %v2314
    %2833 = vmatprep.subr.bf16.mxu0 %v2323
    %2834 = vmatpush1.bf16.msra.mxu0 %v2322
    %2835 = vmatprep.subr.bf16.mxu0 %v2331
    %2836 = vmatpush1.bf16.msra.mxu0 %v2330
    %2837 = vmatprep.subr.bf16.mxu0 %v2339
    %2838 = vmatpush1.bf16.msra.mxu0 %v2338
    %2839 = vmatprep.subr.bf16.mxu0 %v2347
    %2840 = vmatpush1.bf16.msra.mxu0 %v2346
    %2841 = vmatprep.subr.bf16.mxu0 %v2355
    %2842 = vmatpush1.bf16.msra.mxu0 %v2354
    %2843 = vmatprep.subr.bf16.mxu0 %v2363
    %2844 = vmatpush1.bf16.msra.mxu0 %v2362
    %2845 = vmatprep.subr.bf16.mxu0 %v2371
    %2846 = vmatpush1.bf16.msra.mxu0 %v2370
    %2847 = vmatprep.subr.bf16.mxu0 %v2379
    %2848 = vmatpush1.bf16.msra.mxu0 %v2378
    %2849 = vmatprep.subr.bf16.mxu0 %v2387
    %2850 = vmatpush1.bf16.msra.mxu0 %v2386
    %2851 = vmatprep.subr.bf16.mxu0 %v2395
    %2852 = vmatpush1.bf16.msra.mxu0 %v2394
    %2853 = vmatprep.subr.bf16.mxu0 %v2403
    %2854 = vmatpush1.bf16.msra.mxu0 %v2402
    %2855 = vmatprep.mubr.bf16.mxu0 %v207
    %2856 = vmatmul.mubr.bf16.gmra.mrb[0].mxu0 %v206
    %v2857 = vpop.f32.mrb[0].mxu0
    %v2858 = vadd.f32 %v2805, %v2857
    %v2859 = vpop.f32.mrb[0].mxu0
    %v2860 = vadd.f32 %v2807, %v2859
    %v2861 = vpop.f32.mrb[0].mxu0
    %v2862 = vadd.f32 %v2809, %v2861
    %v2863 = vpop.f32.mrb[0].mxu0
    %v2864 = vadd.f32 %v2811, %v2863
    %2865 = vmatprep.mubr.bf16.mxu0 %v211
    %2866 = vmatmul.mubr.bf16.gmra.mrb[0].mxu0 %v210
    %v2867 = vpop.f32.mrb[0].mxu0
    %v2868 = vadd.f32 %v2815, %v2867
    %v2869 = vpop.f32.mrb[0].mxu0
    %v2870 = vadd.f32 %v2817, %v2869
    %v2871 = vpop.f32.mrb[0].mxu0
    %v2872 = vadd.f32 %v2819, %v2871
    %v2873 = vpop.f32.mrb[0].mxu0
    %v2874 = vadd.f32 %v2821, %v2873
    %2875 = vdwg.mxu0
    %2876 = vmatprep.subr.bf16.mxu0 %v2157
    %2877 = vmatpush1.bf16.msra.mxu0 %v2156
    %2878 = vmatprep.subr.bf16.mxu0 %v2165
    %2879 = vmatpush1.bf16.msra.mxu0 %v2164
    %2880 = vmatprep.subr.bf16.mxu0 %v2173
    %2881 = vmatpush1.bf16.msra.mxu0 %v2172
    %2882 = vmatprep.subr.bf16.mxu0 %v2181
    %2883 = vmatpush1.bf16.msra.mxu0 %v2180
    %2884 = vmatprep.subr.bf16.mxu0 %v2189
    %2885 = vmatpush1.bf16.msra.mxu0 %v2188
    %2886 = vmatprep.subr.bf16.mxu0 %v2197
    %2887 = vmatpush1.bf16.msra.mxu0 %v2196
    %2888 = vmatprep.subr.bf16.mxu0 %v2205
    %2889 = vmatpush1.bf16.msra.mxu0 %v2204
    %2890 = vmatprep.subr.bf16.mxu0 %v2213
    %2891 = vmatpush1.bf16.msra.mxu0 %v2212
    %2892 = vmatprep.subr.bf16.mxu0 %v2221
    %2893 = vmatpush1.bf16.msra.mxu0 %v2220
    %2894 = vmatprep.subr.bf16.mxu0 %v2229
    %2895 = vmatpush1.bf16.msra.mxu0 %v2228
    %2896 = vmatprep.subr.bf16.mxu0 %v2237
    %2897 = vmatpush1.bf16.msra.mxu0 %v2236
    %2898 = vmatprep.subr.bf16.mxu0 %v2245
    %2899 = vmatpush1.bf16.msra.mxu0 %v2244
    %2900 = vmatprep.subr.bf16.mxu0 %v2253
    %2901 = vmatpush1.bf16.msra.mxu0 %v2252
    %2902 = vmatprep.subr.bf16.mxu0 %v2261
    %2903 = vmatpush1.bf16.msra.mxu0 %v2260
    %2904 = vmatprep.subr.bf16.mxu0 %v2269
    %2905 = vmatpush1.bf16.msra.mxu0 %v2268
    %2906 = vmatprep.subr.bf16.mxu0 %v2277
    %2907 = vmatpush1.bf16.msra.mxu0 %v2276
    %2908 = vmatprep.mubr.bf16.mxu0 %v205
    %2909 = vmatmul.mubr.bf16.gmra.mrb[0].mxu0 %v204
    %v2910 = vpop.f32.mrb[0].mxu0
    %v2911 = vadd.f32 0.0, %v2910
    %v2912 = vpop.f32.mrb[0].mxu0
    %v2913 = vadd.f32 0.0, %v2912
    %v2914 = vpop.f32.mrb[0].mxu0
    %v2915 = vadd.f32 0.0, %v2914
    %v2916 = vpop.f32.mrb[0].mxu0
    %v2917 = vadd.f32 0.0, %v2916
    %2918 = vmatprep.mubr.bf16.mxu0 %v209
    %2919 = vmatmul.mubr.bf16.gmra.mrb[0].mxu0 %v208
    %v2920 = vpop.f32.mrb[0].mxu0
    %v2921 = vadd.f32 0.0, %v2920
    %v2922 = vpop.f32.mrb[0].mxu0
    %v2923 = vadd.f32 0.0, %v2922
    %v2924 = vpop.f32.mrb[0].mxu0
    %v2925 = vadd.f32 0.0, %v2924
    %v2926 = vpop.f32.mrb[0].mxu0
    %v2927 = vadd.f32 0.0, %v2926
    %2928 = vdwg.mxu0
    %2929 = vmatprep.subr.bf16.mxu0 %v2285
    %2930 = vmatpush1.bf16.msra.mxu0 %v2284
    %2931 = vmatprep.subr.bf16.mxu0 %v2293
    %2932 = vmatpush1.bf16.msra.mxu0 %v2292
    %2933 = vmatprep.subr.bf16.mxu0 %v2301
    %2934 = vmatpush1.bf16.msra.mxu0 %v2300
    %2935 = vmatprep.subr.bf16.mxu0 %v2309
    %2936 = vmatpush1.bf16.msra.mxu0 %v2308
    %2937 = vmatprep.subr.bf16.mxu0 %v2317
    %2938 = vmatpush1.bf16.msra.mxu0 %v2316
    %2939 = vmatprep.subr.bf16.mxu0 %v2325
    %2940 = vmatpush1.bf16.msra.mxu0 %v2324
    %2941 = vmatprep.subr.bf16.mxu0 %v2333
    %2942 = vmatpush1.bf16.msra.mxu0 %v2332
    %2943 = vmatprep.subr.bf16.mxu0 %v2341
    %2944 = vmatpush1.bf16.msra.mxu0 %v2340
    %2945 = vmatprep.subr.bf16.mxu0 %v2349
    %2946 = vmatpush1.bf16.msra.mxu0 %v2348
    %2947 = vmatprep.subr.bf16.mxu0 %v2357
    %2948 = vmatpush1.bf16.msra.mxu0 %v2356
    %2949 = vmatprep.subr.bf16.mxu0 %v2365
    %2950 = vmatpush1.bf16.msra.mxu0 %v2364
    %2951 = vmatprep.subr.bf16.mxu0 %v2373
    %2952 = vmatpush1.bf16.msra.mxu0 %v2372
    %2953 = vmatprep.subr.bf16.mxu0 %v2381
    %2954 = vmatpush1.bf16.msra.mxu0 %v2380
    %2955 = vmatprep.subr.bf16.mxu0 %v2389
    %2956 = vmatpush1.bf16.msra.mxu0 %v2388
    %2957 = vmatprep.subr.bf16.mxu0 %v2397
    %2958 = vmatpush1.bf16.msra.mxu0 %v2396
    %2959 = vmatprep.subr.bf16.mxu0 %v2405
    %2960 = vmatpush1.bf16.msra.mxu0 %v2404
    %2961 = vmatprep.mubr.bf16.mxu0 %v207
    %2962 = vmatmul.mubr.bf16.gmra.mrb[0].mxu0 %v206
    %v2963 = vpop.f32.mrb[0].mxu0
    %v2964 = vadd.f32 %v2911, %v2963
    %v2965 = vpop.f32.mrb[0].mxu0
    %v2966 = vadd.f32 %v2913, %v2965
    %v2967 = vpop.f32.mrb[0].mxu0
    %v2968 = vadd.f32 %v2915, %v2967
    %v2969 = vpop.f32.mrb[0].mxu0
    %v2970 = vadd.f32 %v2917, %v2969
    %2971 = vmatprep.mubr.bf16.mxu0 %v211
    %2972 = vmatmul.mubr.bf16.gmra.mrb[0].mxu0 %v210
    %v2973 = vpop.f32.mrb[0].mxu0
    %v2974 = vadd.f32 %v2921, %v2973
    %v2975 = vpop.f32.mrb[0].mxu0
    %v2976 = vadd.f32 %v2923, %v2975
    %v2977 = vpop.f32.mrb[0].mxu0
    %v2978 = vadd.f32 %v2925, %v2977
    %v2979 = vpop.f32.mrb[0].mxu0
    %v2980 = vadd.f32 %v2927, %v2979
    %2981 = vdwg.mxu0
    %2982 = vmatprep.subr.bf16.mxu0 %v2159
    %2983 = vmatpush1.bf16.msra.mxu0 %v2158
    %2984 = vmatprep.subr.bf16.mxu0 %v2167
    %2985 = vmatpush1.bf16.msra.mxu0 %v2166
    %2986 = vmatprep.subr.bf16.mxu0 %v2175
    %2987 = vmatpush1.bf16.msra.mxu0 %v2174
    %2988 = vmatprep.subr.bf16.mxu0 %v2183
    %2989 = vmatpush1.bf16.msra.mxu0 %v2182
    %2990 = vmatprep.subr.bf16.mxu0 %v2191
    %2991 = vmatpush1.bf16.msra.mxu0 %v2190
    %2992 = vmatprep.subr.bf16.mxu0 %v2199
    %2993 = vmatpush1.bf16.msra.mxu0 %v2198
    %2994 = vmatprep.subr.bf16.mxu0 %v2207
    %2995 = vmatpush1.bf16.msra.mxu0 %v2206
    %2996 = vmatprep.subr.bf16.mxu0 %v2215
    %2997 = vmatpush1.bf16.msra.mxu0 %v2214
    %2998 = vmatprep.subr.bf16.mxu0 %v2223
    %2999 = vmatpush1.bf16.msra.mxu0 %v2222
    %3000 = vmatprep.subr.bf16.mxu0 %v2231
    %3001 = vmatpush1.bf16.msra.mxu0 %v2230
    %3002 = vmatprep.subr.bf16.mxu0 %v2239
    %3003 = vmatpush1.bf16.msra.mxu0 %v2238
    %3004 = vmatprep.subr.bf16.mxu0 %v2247
    %3005 = vmatpush1.bf16.msra.mxu0 %v2246
    %3006 = vmatprep.subr.bf16.mxu0 %v2255
    %3007 = vmatpush1.bf16.msra.mxu0 %v2254
    %3008 = vmatprep.subr.bf16.mxu0 %v2263
    %3009 = vmatpush1.bf16.msra.mxu0 %v2262
    %3010 = vmatprep.subr.bf16.mxu0 %v2271
    %3011 = vmatpush1.bf16.msra.mxu0 %v2270
    %3012 = vmatprep.subr.bf16.mxu0 %v2279
    %3013 = vmatpush1.bf16.msra.mxu0 %v2278
    %3014 = vmatprep.mubr.bf16.mxu0 %v205
    %3015 = vmatmul.mubr.bf16.gmra.mrb[0].mxu0 %v204
    %v3016 = vpop.f32.mrb[0].mxu0
    %v3017 = vadd.f32 0.0, %v3016
    %v3018 = vpop.f32.mrb[0].mxu0
    %v3019 = vadd.f32 0.0, %v3018
    %v3020 = vpop.f32.mrb[0].mxu0
    %v3021 = vadd.f32 0.0, %v3020
    %v3022 = vpop.f32.mrb[0].mxu0
    %v3023 = vadd.f32 0.0, %v3022
    %3024 = vmatprep.mubr.bf16.mxu0 %v209
    %3025 = vmatmul.mubr.bf16.gmra.mrb[0].mxu0 %v208
    %v3026 = vpop.f32.mrb[0].mxu0
    %v3027 = vadd.f32 0.0, %v3026
    %v3028 = vpop.f32.mrb[0].mxu0
    %v3029 = vadd.f32 0.0, %v3028
    %v3030 = vpop.f32.mrb[0].mxu0
    %v3031 = vadd.f32 0.0, %v3030
    %v3032 = vpop.f32.mrb[0].mxu0
    %v3033 = vadd.f32 0.0, %v3032
    %3034 = vdwg.mxu0
    %3035 = vmatprep.subr.bf16.mxu0 %v2287
    %3036 = vmatpush1.bf16.msra.mxu0 %v2286
    %3037 = vmatprep.subr.bf16.mxu0 %v2295
    %3038 = vmatpush1.bf16.msra.mxu0 %v2294
    %3039 = vmatprep.subr.bf16.mxu0 %v2303
    %3040 = vmatpush1.bf16.msra.mxu0 %v2302
    %3041 = vmatprep.subr.bf16.mxu0 %v2311
    %3042 = vmatpush1.bf16.msra.mxu0 %v2310
    %3043 = vmatprep.subr.bf16.mxu0 %v2319
    %3044 = vmatpush1.bf16.msra.mxu0 %v2318
    %3045 = vmatprep.subr.bf16.mxu0 %v2327
    %3046 = vmatpush1.bf16.msra.mxu0 %v2326
    %3047 = vmatprep.subr.bf16.mxu0 %v2335
    %3048 = vmatpush1.bf16.msra.mxu0 %v2334
    %3049 = vmatprep.subr.bf16.mxu0 %v2343
    %3050 = vmatpush1.bf16.msra.mxu0 %v2342
    %3051 = vmatprep.subr.bf16.mxu0 %v2351
    %3052 = vmatpush1.bf16.msra.mxu0 %v2350
    %3053 = vmatprep.subr.bf16.mxu0 %v2359
    %3054 = vmatpush1.bf16.msra.mxu0 %v2358
    %3055 = vmatprep.subr.bf16.mxu0 %v2367
    %3056 = vmatpush1.bf16.msra.mxu0 %v2366
    %3057 = vmatprep.subr.bf16.mxu0 %v2375
    %3058 = vmatpush1.bf16.msra.mxu0 %v2374
    %3059 = vmatprep.subr.bf16.mxu0 %v2383
    %3060 = vmatpush1.bf16.msra.mxu0 %v2382
    %3061 = vmatprep.subr.bf16.mxu0 %v2391
    %3062 = vmatpush1.bf16.msra.mxu0 %v2390
    %3063 = vmatprep.subr.bf16.mxu0 %v2399
    %3064 = vmatpush1.bf16.msra.mxu0 %v2398
    %3065 = vmatprep.subr.bf16.mxu0 %v2407
    %3066 = vmatpush1.bf16.msra.mxu0 %v2406
    %3067 = vmatprep.mubr.bf16.mxu0 %v207
    %3068 = vmatmul.mubr.bf16.gmra.mrb[0].mxu0 %v206
    %v3069 = vpop.f32.mrb[0].mxu0
    %v3070 = vadd.f32 %v3017, %v3069
    %v3071 = vpop.f32.mrb[0].mxu0
    %v3072 = vadd.f32 %v3019, %v3071
    %v3073 = vpop.f32.mrb[0].mxu0
    %v3074 = vadd.f32 %v3021, %v3073
    %v3075 = vpop.f32.mrb[0].mxu0
    %v3076 = vadd.f32 %v3023, %v3075
    %3077 = vmatprep.mubr.bf16.mxu0 %v211
    %3078 = vmatmul.mubr.bf16.gmra.mrb[0].mxu0 %v210
    %v3079 = vpop.f32.mrb[0].mxu0
    %v3080 = vadd.f32 %v3027, %v3079
    %v3081 = vpop.f32.mrb[0].mxu0
    %v3082 = vadd.f32 %v3029, %v3081
    %v3083 = vpop.f32.mrb[0].mxu0
    %v3084 = vadd.f32 %v3031, %v3083
    %v3085 = vpop.f32.mrb[0].mxu0
    %v3086 = vadd.f32 %v3033, %v3085
    %3087 = vdwg.mxu0
    %v3088 = vpack.c.bf16 %v2756, %v2752
    %v3089 = vpack.c.bf16 %v2758, %v2754
    %v3090 = vpack.c.bf16 %v2862, %v2858
    %v3091 = vpack.c.bf16 %v2864, %v2860
    %v3092 = vpack.c.bf16 %v2968, %v2964
    %v3093 = vpack.c.bf16 %v2970, %v2966
    %v3094 = vpack.c.bf16 %v3074, %v3070
    %v3095 = vpack.c.bf16 %v3076, %v3072
    %v3096 = vpack.c.bf16 %v2766, %v2762
    %v3097 = vpack.c.bf16 %v2768, %v2764
    %v3098 = vpack.c.bf16 %v2872, %v2868
    %v3099 = vpack.c.bf16 %v2874, %v2870
    %v3100 = vpack.c.bf16 %v2978, %v2974
    %v3101 = vpack.c.bf16 %v2980, %v2976
    %v3102 = vpack.c.bf16 %v3084, %v3080
    %v3103 = vpack.c.bf16 %v3086, %v3082
    %v3120 = vunpack.c.l.b16 %v3088
    %v3121 = vunpack.c.l.b16 %v3089
    %v3122 = vunpack.c.l.b16 %v3090
    %v3123 = vunpack.c.l.b16 %v3091
    %v3124 = vunpack.c.l.b16 %v3092
    %v3125 = vunpack.c.l.b16 %v3093
    %v3126 = vunpack.c.l.b16 %v3094
    %v3127 = vunpack.c.l.b16 %v3095
    %v3128 = vunpack.c.h.b16 %v3088
    %v3129 = vunpack.c.h.b16 %v3089
    %v3130 = vunpack.c.h.b16 %v3090
    %v3131 = vunpack.c.h.b16 %v3091
    %v3132 = vunpack.c.h.b16 %v3092
    %v3133 = vunpack.c.h.b16 %v3093
    %v3134 = vunpack.c.h.b16 %v3094
    %v3135 = vunpack.c.h.b16 %v3095
    %v3136 = vunpack.c.l.b16 %v3096
    %v3137 = vunpack.c.l.b16 %v3097
    %v3138 = vunpack.c.l.b16 %v3098
    %v3139 = vunpack.c.l.b16 %v3099
    %v3140 = vunpack.c.l.b16 %v3100
    %v3141 = vunpack.c.l.b16 %v3101
    %v3142 = vunpack.c.l.b16 %v3102
    %v3143 = vunpack.c.l.b16 %v3103
    %v3144 = vunpack.c.h.b16 %v3096
    %v3145 = vunpack.c.h.b16 %v3097
    %v3146 = vunpack.c.h.b16 %v3098
    %v3147 = vunpack.c.h.b16 %v3099
    %v3148 = vunpack.c.h.b16 %v3100
    %v3149 = vunpack.c.h.b16 %v3101
    %v3150 = vunpack.c.h.b16 %v3102
    %v3151 = vunpack.c.h.b16 %v3103
    %v3152 = vpack.c.b16 %v3121, %v3120
    %v3153 = vpack.c.b16 %v3123, %v3122
    %v3154 = vpack.c.b16 %v3125, %v3124
    %v3155 = vpack.c.b16 %v3127, %v3126
    %v3156 = vpack.c.b16 %v3129, %v3128
    %v3157 = vpack.c.b16 %v3131, %v3130
    %v3158 = vpack.c.b16 %v3133, %v3132
    %v3159 = vpack.c.b16 %v3135, %v3134
    %v3160 = vpack.c.b16 %v3137, %v3136
    %v3161 = vpack.c.b16 %v3139, %v3138
    %v3162 = vpack.c.b16 %v3141, %v3140
    %v3163 = vpack.c.b16 %v3143, %v3142
    %v3164 = vpack.c.b16 %v3145, %v3144
    %v3165 = vpack.c.b16 %v3147, %v3146
    %v3166 = vpack.c.b16 %v3149, %v3148
    %v3167 = vpack.c.b16 %v3151, %v3150
    %3184 = vst [vmem:[%s4] sm:$0xff] %v3152
    %3185 = vst [vmem:[%s4 + $0x8] sm:$0xff] %v3153
    %3186 = vst [vmem:[%s4 + $0x10] sm:$0xff] %v3154
    %3187 = vst [vmem:[%s4 + $0x18] sm:$0xff] %v3155
    %3188 = vst [vmem:[%s4 + $0x20] sm:$0xff] %v3156
    %3189 = vst [vmem:[%s4 + $0x28] sm:$0xff] %v3157
    %3190 = vst [vmem:[%s4 + $0x30] sm:$0xff] %v3158
    %3191 = vst [vmem:[%s4 + $0x38] sm:$0xff] %v3159
    %3192 = vst [vmem:[%s4 + $0x40] sm:$0xff] %v3160
    %3193 = vst [vmem:[%s4 + $0x48] sm:$0xff] %v3161
    %3194 = vst [vmem:[%s4 + $0x50] sm:$0xff] %v3162
    %3195 = vst [vmem:[%s4 + $0x58] sm:$0xff] %v3163
    %3196 = vst [vmem:[%s4 + $0x60] sm:$0xff] %v3164
    %3197 = vst [vmem:[%s4 + $0x68] sm:$0xff] %v3165
    %3198 = vst [vmem:[%s4 + $0x70] sm:$0xff] %v3166
    %3199 = vst [vmem:[%s4 + $0x78] sm:$0xff] %v3167
    // Predicated region
    $region22: #{multi_head_attention.2} parent=1 // pred_check
      _
    $region23: #{multi_head_attention.2} parent=1 // pred_check_branch
      %3201 = sbr.rel (0) target = $region25
    $region24: #{multi_head_attention.2} parent=1 // pred_region
      _
    $region25: #{multi_head_attention.2} parent=1 // pred_fallthru
      _
    // Predicated region
    $region26: #{multi_head_attention.2} parent=1 // pred_check
      _
    $region27: #{multi_head_attention.2} parent=1 // pred_check_branch
      %3203 = sbr.rel (0) target = $region29
    $region28: #{multi_head_attention.2} parent=1 // pred_region
      _
    $region29: #{multi_head_attention.2} parent=1 // pred_fallthru
      _
    // Predicated region
    $region30: #{multi_head_attention.2} parent=1 // pred_check
      _
    $region31: #{multi_head_attention.2} parent=1 // pred_check_branch
      %3205 = sbr.rel (0) target = $region33
    $region32: #{multi_head_attention.2} parent=1 // pred_region
      _
    $region33: #{multi_head_attention.2} parent=1 // pred_fallthru
      _
    // Predicated region
    $region34: #{multi_head_attention.2} parent=1 // pred_check
      _
    $region35: #{multi_head_attention.2} parent=1 // pred_check_branch
      %3207 = sbr.rel (0) target = $region37
    $region36: #{multi_head_attention.2} parent=1 // pred_region
      _
    $region37: #{multi_head_attention.2} parent=1 // pred_fallthru
      _
    %3208 = vsyncpa [#allocation3], 1
    %3209 = vsyncpa [#allocation5], 1

</llo_original>
